<compile_context>
chip_gen: v6e
topology: v6e:2x2x1
jax: 0.10.0
libtpu: 0.0.40
codegen_flags: <defaults>
</compile_context>

<pallas_src>
import functools

import jax
import jax.numpy as jnp
from jax import lax
from jax.experimental import pallas as pl
from jax.experimental.pallas import tpu as pltpu

N_EMBD = 64
BLOCK_SIZE = 32
N_HEADS = 4
HEAD_SIZE = N_EMBD // N_HEADS
LN_EPS = 1e-5


def _layer_norm(x, gamma, beta):
    mu = jnp.mean(x, axis=-1, keepdims=True)
    var = jnp.mean((x - mu) ** 2, axis=-1, keepdims=True)
    return (x - mu) * lax.rsqrt(var + LN_EPS) * gamma + beta


def block_kernel(x_ref, wqkv_ref, wprojh_ref, w1_ref, w2_ref, lnp_ref, b1_ref,
                 o_ref, *, batch, seq_len, n_heads):
    x = x_ref[...]                                   # (B*T, C) f32
    BT, C = x.shape
    B, T, H = batch, seq_len, n_heads
    hs = C // H

    lnp = lnp_ref[...]                               # (6, C) packed f32 vectors
    g1, be1 = lnp[0:1, :], lnp[1:2, :]
    g2, be2 = lnp[2:3, :], lnp[3:4, :]
    bproj, b2 = lnp[4:5, :], lnp[5:6, :]

    # ---- LayerNorm 1 + fused QKV projection (bf16 weights, f32 accumulation).
    # The reference's C**-0.5 score scale (n_embd, NOT head_size — intentional,
    # do not "fix") is already folded into the Q columns of wqkv at pack time.
    ln1 = _layer_norm(x, g1, be1).astype(jnp.bfloat16)
    qkv = jnp.dot(ln1, wqkv_ref[...],
                  preferred_element_type=jnp.float32)          # (BT, 3C) f32

    # ---- Per-(batch, head) attention blocks: (G, T, hs) with g = b*H + h.
    # Built from static row/lane slices + a leading-dim stack only (no
    # sublane-splitting reshapes).
    def gather_blocks(base):
        return jnp.stack(
            [qkv[b * T:(b + 1) * T, base + h * hs: base + (h + 1) * hs]
             for b in range(B) for h in range(H)], axis=0)

    q = gather_blocks(0)                             # (G, T, hs) f32
    k = gather_blocks(C)
    v = gather_blocks(2 * C)

    # Scores only within each (batch, head) block: (G, T, T) instead of the
    # dense (G*T, G*T) matrix -> ~8x less softmax / mask work.
    scores = jnp.einsum("gqd,gkd->gqk", q, k,
                        preferred_element_type=jnp.float32)    # (G, T, T)

    # (T, T) causal tile, broadcast over G.  Large finite negative bias keeps
    # exp() NaN-safe even for a hypothetical fully-masked row.
    row = lax.broadcasted_iota(jnp.int32, (T, T), 0)
    col = lax.broadcasted_iota(jnp.int32, (T, T), 1)
    causal = (row >= col)[None, :, :]
    scores = jnp.where(causal, scores, -1e30)

    m = jnp.max(scores, axis=-1, keepdims=True)                # (G, T, 1)
    p = jnp.exp(scores - m)
    l = jnp.sum(p, axis=-1, keepdims=True)

    # PV matmul in f32 (p is small now; avoids bf16 round-trips on the vector
    # path and keeps numerator/denominator consistent).  1/l is folded into
    # the small (G, T, hs) output, not the probability matrix.
    attn = jnp.einsum("gqk,gkd->gqd", p, v,
                      preferred_element_type=jnp.float32)      # (G, T, hs)
    attn = attn * pl.reciprocal(l, approx=True)   # inference-grade accuracy

    # ---- Output projection without re-concatenating heads along lanes:
    # sa[b*T:(b+1)*T] = bproj + sum_h attn[(b,h)] @ wproj[h*hs:(h+1)*hs, :]
    wp = wprojh_ref[...]                             # (H, hs, C) f32
    sa_rows = []
    for b in range(B):
        acc = bproj                                  # (1, C), broadcasts below
        for h in range(H):
            acc = acc + jnp.dot(attn[b * H + h], wp[h],
                                preferred_element_type=jnp.float32)  # (T, C)
        sa_rows.append(acc)
    sa = jnp.concatenate(sa_rows, axis=0)            # (BT, C)

    x1 = x + sa

    # ---- LayerNorm 2 + feed-forward (Linear -> ReLU -> Linear).
    ln2 = _layer_norm(x1, g2, be2).astype(jnp.bfloat16)
    h1 = jnp.dot(ln2, w1_ref[...],
                 preferred_element_type=jnp.float32) + b1_ref[...]
    h1 = jnp.maximum(h1, 0.0)
    ffn = jnp.dot(h1.astype(jnp.bfloat16), w2_ref[...],
                  preferred_element_type=jnp.float32) + b2

    o_ref[...] = x1 + ffn


def pack_params(params):
    """One-time weight packing (NOT on the per-forward path)."""
    C, H, hs = N_EMBD, N_HEADS, HEAD_SIZE
    scale = C ** (-0.5)   # reference uses n_embd**-0.5, not head_size**-0.5
    # Fused QKV weight (C, 3C), bf16 for the MXU; score scale baked into Q.
    wqkv = jnp.concatenate(
        [params["wq"] * scale, params["wk"], params["wv"]],
        axis=1).astype(jnp.bfloat16)
    # Per-head output-projection blocks (H, hs, C); kept f32 so the lane-sparse
    # per-head attention outputs need no bf16 cast.
    wprojh = params["wproj"].reshape(H, hs, C)
    w1 = params["w1"].astype(jnp.bfloat16)
    w2 = params["w2"].astype(jnp.bfloat16)
    # All tiny (1, C) vectors packed into a single VMEM block.
    lnp = jnp.concatenate(
        [params["g1"], params["be1"], params["g2"], params["be2"],
         params["bproj"], params["b2"]], axis=0)               # (6, C)
    b1 = params["b1"]                                          # (1, 4C)
    return dict(wqkv=wqkv, wprojh=wprojh, w1=w1, w2=w2, lnp=lnp, b1=b1)


def gpt2_block(x, packed):
    B, T, C = x.shape
    # Flatten batch*seq (free, contiguous view): one lane-contiguous slab.
    x2 = x.reshape(B * T, C)

    args = (x2, packed["wqkv"], packed["wprojh"], packed["w1"], packed["w2"],
            packed["lnp"], packed["b1"])

    def full_spec(shape):
        n = len(shape)
        return pl.BlockSpec(shape, lambda i, _n=n: (0,) * _n)

    kernel = functools.partial(block_kernel, batch=B, seq_len=T,
                               n_heads=N_HEADS)

    out = pl.pallas_call(
        kernel,
        out_shape=jax.ShapeDtypeStruct((B * T, C), jnp.float32),
        grid_spec=pltpu.PrefetchScalarGridSpec(
            num_scalar_prefetch=0,
            grid=(1,),                     # fully fused, fully VMEM-resident
            in_specs=[full_spec(a.shape) for a in args],
            out_specs=full_spec((B * T, C)),
        ),
        compiler_params=pltpu.CompilerParams(
            dimension_semantics=("arbitrary",)),
    )(*args)
    return out.reshape(B, T, C)


def init_params(key):
    C, Hd = N_EMBD, 4 * N_EMBD
    ks = jax.random.split(key, 8)
    scale = 0.02
    p = {
        # attention weights stored as (in, out); per-head columns concatenated
        # head-major to match torch.cat([head(x) ...], dim=-1)
        "wq": jax.random.normal(ks[0], (C, C), jnp.float32) * scale,
        "wk": jax.random.normal(ks[1], (C, C), jnp.float32) * scale,
        "wv": jax.random.normal(ks[2], (C, C), jnp.float32) * scale,
        "wproj": jax.random.normal(ks[3], (C, C), jnp.float32) * scale,
        "bproj": jax.random.normal(ks[4], (1, C), jnp.float32) * scale,
        "w1": jax.random.normal(ks[5], (C, Hd), jnp.float32) * scale,
        "b1": jax.random.normal(ks[6], (1, Hd), jnp.float32) * scale,
        "w2": jax.random.normal(ks[7], (Hd, C), jnp.float32) * scale,
        "b2": jnp.zeros((1, C), jnp.float32),
        "g1": jnp.ones((1, C), jnp.float32),
        "be1": jnp.zeros((1, C), jnp.float32),
        "g2": jnp.ones((1, C), jnp.float32),
        "be2": jnp.zeros((1, C), jnp.float32),
    }
    return p


def ref_block(x, p):
    """Pure-JAX f32 reference mirroring the PyTorch forward (eval mode)."""
    B, T, C = x.shape

    def ln(z, g, b):
        mu = jnp.mean(z, axis=-1, keepdims=True)
        var = jnp.mean((z - mu) ** 2, axis=-1, keepdims=True)
        return (z - mu) / jnp.sqrt(var + LN_EPS) * g + b

    l1 = ln(x, p["g1"], p["be1"])
    q = l1 @ p["wq"]
    k = l1 @ p["wk"]
    v = l1 @ p["wv"]
    causal = jnp.tril(jnp.ones((T, T), bool))
    outs = []
    for h in range(N_HEADS):
        sl = slice(h * HEAD_SIZE, (h + 1) * HEAD_SIZE)
        wei = jnp.einsum("btd,bsd->bts", q[..., sl], k[..., sl]) * C ** (-0.5)
        wei = jnp.where(causal, wei, -jnp.inf)
        wei = jax.nn.softmax(wei, axis=-1)
        outs.append(jnp.einsum("bts,bsd->btd", wei, v[..., sl]))
    attn = jnp.concatenate(outs, axis=-1)
    x = x + (attn @ p["wproj"] + p["bproj"])
    l2 = ln(x, p["g2"], p["be2"])
    ffn = jnp.maximum(l2 @ p["w1"] + p["b1"], 0.0) @ p["w2"] + p["b2"]
    return x + ffn


if __name__ == "__main__":
    key = jax.random.PRNGKey(0)
    k_param, k_x = jax.random.split(key)
    params = init_params(k_param)
    packed = pack_params(params)          # one-time packing, off the hot path

    B, T, C = 2, BLOCK_SIZE, N_EMBD       # (2, 32, 64)
    x = jax.random.normal(k_x, (B, T, C), jnp.float32)

    out = jax.block_until_ready(gpt2_block(x, packed))

    expected = ref_block(x, params)
    assert out.shape == (B, T, C)
    # Tolerance covers bf16 QKV/FFN weights + approx reciprocal in softmax
    # (attention core itself runs in f32).
    assert jnp.allclose(out, expected, atol=1e-2, rtol=1e-2), (
        float(jnp.max(jnp.abs(out - expected))))

    print("KERNEL_OK")
</pallas_src>

<mosaic_0001>
module attributes {stable_mosaic.version = 11 : i64} {
  func.func @block_kernel(%arg0: i32, %arg1: memref<64x64xf32, #tpu.memory_space<vmem>>, %arg2: memref<64x192xbf16, #tpu.memory_space<vmem>>, %arg3: memref<4x16x64xf32, #tpu.memory_space<vmem>>, %arg4: memref<64x256xbf16, #tpu.memory_space<vmem>>, %arg5: memref<256x64xbf16, #tpu.memory_space<vmem>>, %arg6: memref<6x64xf32, #tpu.memory_space<vmem>>, %arg7: memref<1x256xf32, #tpu.memory_space<vmem>>, %arg8: memref<64x64xf32, #tpu.memory_space<vmem>>) attributes {dimension_semantics = [#tpu.dimension_semantics<arbitrary>], iteration_bounds = array<i64: 1>, scalar_prefetch = 0 : i64, scratch_operands = 0 : i64, tpu.core_type = #tpu.core_type<tc>, window_params = [{pipeline_mode = #tpu.pipeline_mode<synchronous>, transform_indices = @transform_0, window_bounds = array<i64: 64, 64>}, {pipeline_mode = #tpu.pipeline_mode<synchronous>, transform_indices = @transform_1, window_bounds = array<i64: 64, 192>}, {pipeline_mode = #tpu.pipeline_mode<synchronous>, transform_indices = @transform_2, window_bounds = array<i64: 4, 16, 64>}, {pipeline_mode = #tpu.pipeline_mode<synchronous>, transform_indices = @transform_3, window_bounds = array<i64: 64, 256>}, {pipeline_mode = #tpu.pipeline_mode<synchronous>, transform_indices = @transform_4, window_bounds = array<i64: 256, 64>}, {pipeline_mode = #tpu.pipeline_mode<synchronous>, transform_indices = @transform_5, window_bounds = array<i64: 6, 64>}, {pipeline_mode = #tpu.pipeline_mode<synchronous>, transform_indices = @transform_6, window_bounds = array<i64: 1, 256>}, {pipeline_mode = #tpu.pipeline_mode<synchronous>, transform_indices = @transform_7, window_bounds = array<i64: 64, 64>}]} {
    %c0 = arith.constant 0 : index
    %c0_0 = arith.constant 0 : index
    %0 = vector.load %arg1[%c0, %c0_0] : memref<64x64xf32, #tpu.memory_space<vmem>>, vector<64x64xf32>
    %c0_1 = arith.constant 0 : index
    %c0_2 = arith.constant 0 : index
    %1 = vector.load %arg6[%c0_1, %c0_2] : memref<6x64xf32, #tpu.memory_space<vmem>>, vector<6x64xf32>
    %2 = vector.extract_strided_slice %1 {offsets = [0, 0], sizes = [1, 64], strides = [1, 1]} : vector<6x64xf32> to vector<1x64xf32>
    %3 = vector.extract_strided_slice %1 {offsets = [1, 0], sizes = [1, 64], strides = [1, 1]} : vector<6x64xf32> to vector<1x64xf32>
    %4 = vector.extract_strided_slice %1 {offsets = [2, 0], sizes = [1, 64], strides = [1, 1]} : vector<6x64xf32> to vector<1x64xf32>
    %5 = vector.extract_strided_slice %1 {offsets = [3, 0], sizes = [1, 64], strides = [1, 1]} : vector<6x64xf32> to vector<1x64xf32>
    %6 = vector.extract_strided_slice %1 {offsets = [4, 0], sizes = [1, 64], strides = [1, 1]} : vector<6x64xf32> to vector<1x64xf32>
    %7 = vector.extract_strided_slice %1 {offsets = [5, 0], sizes = [1, 64], strides = [1, 1]} : vector<6x64xf32> to vector<1x64xf32>
    %cst = arith.constant dense<0.000000e+00> : vector<64xf32>
    %8 = vector.multi_reduction <add>, %0, %cst [1] : vector<64x64xf32> to vector<64xf32>
    %9 = vector.shape_cast %8 : vector<64xf32> to vector<64x1xf32>
    %cst_3 = arith.constant 6.400000e+01 : f32
    %10 = vector.broadcast %cst_3 : f32 to vector<64x1xf32>
    %11 = arith.divf %9, %10 : vector<64x1xf32>
    %12 = vector.broadcast %11 : vector<64x1xf32> to vector<64x64xf32>
    %13 = arith.subf %0, %12 : vector<64x64xf32>
    %14 = arith.mulf %13, %13 : vector<64x64xf32>
    %cst_4 = arith.constant dense<0.000000e+00> : vector<64xf32>
    %15 = vector.multi_reduction <add>, %14, %cst_4 [1] : vector<64x64xf32> to vector<64xf32>
    %16 = vector.shape_cast %15 : vector<64xf32> to vector<64x1xf32>
    %cst_5 = arith.constant 6.400000e+01 : f32
    %17 = vector.broadcast %cst_5 : f32 to vector<64x1xf32>
    %18 = arith.divf %16, %17 : vector<64x1xf32>
    %19 = vector.broadcast %11 : vector<64x1xf32> to vector<64x64xf32>
    %20 = arith.subf %0, %19 : vector<64x64xf32>
    %cst_6 = arith.constant 9.99999974E-6 : f32
    %21 = vector.broadcast %cst_6 : f32 to vector<64x1xf32>
    %22 = arith.addf %18, %21 : vector<64x1xf32>
    %23 = math.rsqrt %22 : vector<64x1xf32>
    %24 = vector.broadcast %23 : vector<64x1xf32> to vector<64x64xf32>
    %25 = arith.mulf %20, %24 : vector<64x64xf32>
    %26 = vector.broadcast %2 : vector<1x64xf32> to vector<64x64xf32>
    %27 = arith.mulf %25, %26 : vector<64x64xf32>
    %28 = vector.broadcast %3 : vector<1x64xf32> to vector<64x64xf32>
    %29 = arith.addf %27, %28 : vector<64x64xf32>
    %30 = arith.truncf %29 : vector<64x64xf32> to vector<64x64xbf16>
    %c0_7 = arith.constant 0 : index
    %c0_8 = arith.constant 0 : index
    %31 = vector.load %arg2[%c0_7, %c0_8] : memref<64x192xbf16, #tpu.memory_space<vmem>>, vector<64x192xbf16>
    %cst_9 = arith.constant dense<0.000000e+00> : vector<64x192xf32>
    %32 = tpu.matmul %30, %31, %cst_9 {dimension_numbers = #tpu.dot_dimension_numbers<[1], [0], [0], [1], [0, 0, 1, 1], [], []>} : vector<64x64xbf16>, vector<64x192xbf16>, vector<64x192xf32> -> vector<64x192xf32>
    %33 = vector.extract_strided_slice %32 {offsets = [0, 0], sizes = [32, 16], strides = [1, 1]} : vector<64x192xf32> to vector<32x16xf32>
    %34 = vector.extract_strided_slice %32 {offsets = [0, 16], sizes = [32, 16], strides = [1, 1]} : vector<64x192xf32> to vector<32x16xf32>
    %35 = vector.extract_strided_slice %32 {offsets = [0, 32], sizes = [32, 16], strides = [1, 1]} : vector<64x192xf32> to vector<32x16xf32>
    %36 = vector.extract_strided_slice %32 {offsets = [0, 48], sizes = [32, 16], strides = [1, 1]} : vector<64x192xf32> to vector<32x16xf32>
    %37 = vector.extract_strided_slice %32 {offsets = [32, 0], sizes = [32, 16], strides = [1, 1]} : vector<64x192xf32> to vector<32x16xf32>
    %38 = vector.extract_strided_slice %32 {offsets = [32, 16], sizes = [32, 16], strides = [1, 1]} : vector<64x192xf32> to vector<32x16xf32>
    %39 = vector.extract_strided_slice %32 {offsets = [32, 32], sizes = [32, 16], strides = [1, 1]} : vector<64x192xf32> to vector<32x16xf32>
    %40 = vector.extract_strided_slice %32 {offsets = [32, 48], sizes = [32, 16], strides = [1, 1]} : vector<64x192xf32> to vector<32x16xf32>
    %41 = vector.shape_cast %33 : vector<32x16xf32> to vector<1x32x16xf32>
    %42 = vector.shape_cast %34 : vector<32x16xf32> to vector<1x32x16xf32>
    %43 = vector.shape_cast %35 : vector<32x16xf32> to vector<1x32x16xf32>
    %44 = vector.shape_cast %36 : vector<32x16xf32> to vector<1x32x16xf32>
    %45 = vector.shape_cast %37 : vector<32x16xf32> to vector<1x32x16xf32>
    %46 = vector.shape_cast %38 : vector<32x16xf32> to vector<1x32x16xf32>
    %47 = vector.shape_cast %39 : vector<32x16xf32> to vector<1x32x16xf32>
    %48 = vector.shape_cast %40 : vector<32x16xf32> to vector<1x32x16xf32>
    %49 = tpu.concatenate %41, %42, %43, %44, %45, %46, %47, %48 in 0 : vector<1x32x16xf32>, vector<1x32x16xf32>, vector<1x32x16xf32>, vector<1x32x16xf32>, vector<1x32x16xf32>, vector<1x32x16xf32>, vector<1x32x16xf32>, vector<1x32x16xf32> -> vector<8x32x16xf32>
    %50 = vector.extract_strided_slice %32 {offsets = [0, 64], sizes = [32, 16], strides = [1, 1]} : vector<64x192xf32> to vector<32x16xf32>
    %51 = vector.extract_strided_slice %32 {offsets = [0, 80], sizes = [32, 16], strides = [1, 1]} : vector<64x192xf32> to vector<32x16xf32>
    %52 = vector.extract_strided_slice %32 {offsets = [0, 96], sizes = [32, 16], strides = [1, 1]} : vector<64x192xf32> to vector<32x16xf32>
    %53 = vector.extract_strided_slice %32 {offsets = [0, 112], sizes = [32, 16], strides = [1, 1]} : vector<64x192xf32> to vector<32x16xf32>
    %54 = vector.extract_strided_slice %32 {offsets = [32, 64], sizes = [32, 16], strides = [1, 1]} : vector<64x192xf32> to vector<32x16xf32>
    %55 = vector.extract_strided_slice %32 {offsets = [32, 80], sizes = [32, 16], strides = [1, 1]} : vector<64x192xf32> to vector<32x16xf32>
    %56 = vector.extract_strided_slice %32 {offsets = [32, 96], sizes = [32, 16], strides = [1, 1]} : vector<64x192xf32> to vector<32x16xf32>
    %57 = vector.extract_strided_slice %32 {offsets = [32, 112], sizes = [32, 16], strides = [1, 1]} : vector<64x192xf32> to vector<32x16xf32>
    %58 = vector.shape_cast %50 : vector<32x16xf32> to vector<1x32x16xf32>
    %59 = vector.shape_cast %51 : vector<32x16xf32> to vector<1x32x16xf32>
    %60 = vector.shape_cast %52 : vector<32x16xf32> to vector<1x32x16xf32>
    %61 = vector.shape_cast %53 : vector<32x16xf32> to vector<1x32x16xf32>
    %62 = vector.shape_cast %54 : vector<32x16xf32> to vector<1x32x16xf32>
    %63 = vector.shape_cast %55 : vector<32x16xf32> to vector<1x32x16xf32>
    %64 = vector.shape_cast %56 : vector<32x16xf32> to vector<1x32x16xf32>
    %65 = vector.shape_cast %57 : vector<32x16xf32> to vector<1x32x16xf32>
    %66 = tpu.concatenate %58, %59, %60, %61, %62, %63, %64, %65 in 0 : vector<1x32x16xf32>, vector<1x32x16xf32>, vector<1x32x16xf32>, vector<1x32x16xf32>, vector<1x32x16xf32>, vector<1x32x16xf32>, vector<1x32x16xf32>, vector<1x32x16xf32> -> vector<8x32x16xf32>
    %67 = vector.extract_strided_slice %32 {offsets = [0, 128], sizes = [32, 16], strides = [1, 1]} : vector<64x192xf32> to vector<32x16xf32>
    %68 = vector.extract_strided_slice %32 {offsets = [0, 144], sizes = [32, 16], strides = [1, 1]} : vector<64x192xf32> to vector<32x16xf32>
    %69 = vector.extract_strided_slice %32 {offsets = [0, 160], sizes = [32, 16], strides = [1, 1]} : vector<64x192xf32> to vector<32x16xf32>
    %70 = vector.extract_strided_slice %32 {offsets = [0, 176], sizes = [32, 16], strides = [1, 1]} : vector<64x192xf32> to vector<32x16xf32>
    %71 = vector.extract_strided_slice %32 {offsets = [32, 128], sizes = [32, 16], strides = [1, 1]} : vector<64x192xf32> to vector<32x16xf32>
    %72 = vector.extract_strided_slice %32 {offsets = [32, 144], sizes = [32, 16], strides = [1, 1]} : vector<64x192xf32> to vector<32x16xf32>
    %73 = vector.extract_strided_slice %32 {offsets = [32, 160], sizes = [32, 16], strides = [1, 1]} : vector<64x192xf32> to vector<32x16xf32>
    %74 = vector.extract_strided_slice %32 {offsets = [32, 176], sizes = [32, 16], strides = [1, 1]} : vector<64x192xf32> to vector<32x16xf32>
    %75 = vector.shape_cast %67 : vector<32x16xf32> to vector<1x32x16xf32>
    %76 = vector.shape_cast %68 : vector<32x16xf32> to vector<1x32x16xf32>
    %77 = vector.shape_cast %69 : vector<32x16xf32> to vector<1x32x16xf32>
    %78 = vector.shape_cast %70 : vector<32x16xf32> to vector<1x32x16xf32>
    %79 = vector.shape_cast %71 : vector<32x16xf32> to vector<1x32x16xf32>
    %80 = vector.shape_cast %72 : vector<32x16xf32> to vector<1x32x16xf32>
    %81 = vector.shape_cast %73 : vector<32x16xf32> to vector<1x32x16xf32>
    %82 = vector.shape_cast %74 : vector<32x16xf32> to vector<1x32x16xf32>
    %83 = tpu.concatenate %75, %76, %77, %78, %79, %80, %81, %82 in 0 : vector<1x32x16xf32>, vector<1x32x16xf32>, vector<1x32x16xf32>, vector<1x32x16xf32>, vector<1x32x16xf32>, vector<1x32x16xf32>, vector<1x32x16xf32>, vector<1x32x16xf32> -> vector<8x32x16xf32>
    "tpu.trace_start"() <{level = 10 : i32, message = "gqd,gkd->gqk"}> : () -> ()
    %cst_10 = arith.constant dense<0.000000e+00> : vector<8x32x32xf32>
    %84 = tpu.matmul %49, %66, %cst_10 {dimension_numbers = #tpu.dot_dimension_numbers<[2], [2], [1], [1], [0, 0, 0, 1, 1, 1], [0], [0]>} : vector<8x32x16xf32>, vector<8x32x16xf32>, vector<8x32x32xf32> -> vector<8x32x32xf32>
    "tpu.trace_stop"() : () -> ()
    %85 = tpu.iota {dimensions = array<i32: 0>} : vector<32x32xi32>
    %86 = tpu.iota {dimensions = array<i32: 1>} : vector<32x32xi32>
    %87 = arith.cmpi sge, %85, %86 : vector<32x32xi32>
    %88 = vector.shape_cast %87 : vector<32x32xi1> to vector<1x32x32xi1>
    %cst_11 = arith.constant -1.000000e+30 : f32
    %89 = vector.shape_cast %88 : vector<1x32x32xi1> to vector<1x32x32xi1>
    %90 = vector.broadcast %89 : vector<1x32x32xi1> to vector<8x32x32xi1>
    %91 = vector.broadcast %cst_11 : f32 to vector<8x32x32xf32>
    %92 = arith.select %90, %84, %91 : vector<8x32x32xi1>, vector<8x32x32xf32>
    %cst_12 = arith.constant dense<0xFF800000> : vector<8x32xf32>
    %93 = vector.multi_reduction <maximumf>, %92, %cst_12 [2] : vector<8x32x32xf32> to vector<8x32xf32>
    %94 = vector.shape_cast %93 : vector<8x32xf32> to vector<8x32x1xf32>
    %95 = vector.broadcast %94 : vector<8x32x1xf32> to vector<8x32x32xf32>
    %96 = arith.subf %92, %95 : vector<8x32x32xf32>
    %97 = math.exp %96 : vector<8x32x32xf32>
    %cst_13 = arith.constant dense<0.000000e+00> : vector<8x32xf32>
    %98 = vector.multi_reduction <add>, %97, %cst_13 [2] : vector<8x32x32xf32> to vector<8x32xf32>
    %99 = vector.shape_cast %98 : vector<8x32xf32> to vector<8x32x1xf32>
    "tpu.trace_start"() <{level = 10 : i32, message = "gqk,gkd->gqd"}> : () -> ()
    %cst_14 = arith.constant dense<0.000000e+00> : vector<8x32x16xf32>
    %100 = tpu.matmul %97, %83, %cst_14 {dimension_numbers = #tpu.dot_dimension_numbers<[2], [1], [1], [2], [0, 0, 0, 1, 1, 2], [0], [0]>} : vector<8x32x32xf32>, vector<8x32x16xf32>, vector<8x32x16xf32> -> vector<8x32x16xf32>
    "tpu.trace_stop"() : () -> ()
    %101 = tpu.reciprocal %99 {approx = true} : vector<8x32x1xf32> -> vector<8x32x1xf32>
    %102 = vector.broadcast %101 : vector<8x32x1xf32> to vector<8x32x16xf32>
    %103 = arith.mulf %100, %102 : vector<8x32x16xf32>
    %c0_15 = arith.constant 0 : index
    %c0_16 = arith.constant 0 : index
    %c0_17 = arith.constant 0 : index
    %104 = vector.load %arg3[%c0_15, %c0_16, %c0_17] : memref<4x16x64xf32, #tpu.memory_space<vmem>>, vector<4x16x64xf32>
    %105 = vector.extract_strided_slice %103 {offsets = [0, 0, 0], sizes = [1, 32, 16], strides = [1, 1, 1]} : vector<8x32x16xf32> to vector<1x32x16xf32>
    %106 = vector.shape_cast %105 : vector<1x32x16xf32> to vector<32x16xf32>
    %107 = vector.extract_strided_slice %104 {offsets = [0, 0, 0], sizes = [1, 16, 64], strides = [1, 1, 1]} : vector<4x16x64xf32> to vector<1x16x64xf32>
    %108 = vector.shape_cast %107 : vector<1x16x64xf32> to vector<16x64xf32>
    %cst_18 = arith.constant dense<0.000000e+00> : vector<32x64xf32>
    %109 = tpu.matmul %106, %108, %cst_18 {dimension_numbers = #tpu.dot_dimension_numbers<[1], [0], [0], [1], [0, 0, 1, 1], [], []>} : vector<32x16xf32>, vector<16x64xf32>, vector<32x64xf32> -> vector<32x64xf32>
    %110 = vector.broadcast %6 : vector<1x64xf32> to vector<32x64xf32>
    %111 = arith.addf %110, %109 : vector<32x64xf32>
    %112 = vector.extract_strided_slice %103 {offsets = [1, 0, 0], sizes = [1, 32, 16], strides = [1, 1, 1]} : vector<8x32x16xf32> to vector<1x32x16xf32>
    %113 = vector.shape_cast %112 : vector<1x32x16xf32> to vector<32x16xf32>
    %114 = vector.extract_strided_slice %104 {offsets = [1, 0, 0], sizes = [1, 16, 64], strides = [1, 1, 1]} : vector<4x16x64xf32> to vector<1x16x64xf32>
    %115 = vector.shape_cast %114 : vector<1x16x64xf32> to vector<16x64xf32>
    %cst_19 = arith.constant dense<0.000000e+00> : vector<32x64xf32>
    %116 = tpu.matmul %113, %115, %cst_19 {dimension_numbers = #tpu.dot_dimension_numbers<[1], [0], [0], [1], [0, 0, 1, 1], [], []>} : vector<32x16xf32>, vector<16x64xf32>, vector<32x64xf32> -> vector<32x64xf32>
    %117 = arith.addf %111, %116 : vector<32x64xf32>
    %118 = vector.extract_strided_slice %103 {offsets = [2, 0, 0], sizes = [1, 32, 16], strides = [1, 1, 1]} : vector<8x32x16xf32> to vector<1x32x16xf32>
    %119 = vector.shape_cast %118 : vector<1x32x16xf32> to vector<32x16xf32>
    %120 = vector.extract_strided_slice %104 {offsets = [2, 0, 0], sizes = [1, 16, 64], strides = [1, 1, 1]} : vector<4x16x64xf32> to vector<1x16x64xf32>
    %121 = vector.shape_cast %120 : vector<1x16x64xf32> to vector<16x64xf32>
    %cst_20 = arith.constant dense<0.000000e+00> : vector<32x64xf32>
    %122 = tpu.matmul %119, %121, %cst_20 {dimension_numbers = #tpu.dot_dimension_numbers<[1], [0], [0], [1], [0, 0, 1, 1], [], []>} : vector<32x16xf32>, vector<16x64xf32>, vector<32x64xf32> -> vector<32x64xf32>
    %123 = arith.addf %117, %122 : vector<32x64xf32>
    %124 = vector.extract_strided_slice %103 {offsets = [3, 0, 0], sizes = [1, 32, 16], strides = [1, 1, 1]} : vector<8x32x16xf32> to vector<1x32x16xf32>
    %125 = vector.shape_cast %124 : vector<1x32x16xf32> to vector<32x16xf32>
    %126 = vector.extract_strided_slice %104 {offsets = [3, 0, 0], sizes = [1, 16, 64], strides = [1, 1, 1]} : vector<4x16x64xf32> to vector<1x16x64xf32>
    %127 = vector.shape_cast %126 : vector<1x16x64xf32> to vector<16x64xf32>
    %cst_21 = arith.constant dense<0.000000e+00> : vector<32x64xf32>
    %128 = tpu.matmul %125, %127, %cst_21 {dimension_numbers = #tpu.dot_dimension_numbers<[1], [0], [0], [1], [0, 0, 1, 1], [], []>} : vector<32x16xf32>, vector<16x64xf32>, vector<32x64xf32> -> vector<32x64xf32>
    %129 = arith.addf %123, %128 : vector<32x64xf32>
    %130 = vector.extract_strided_slice %103 {offsets = [4, 0, 0], sizes = [1, 32, 16], strides = [1, 1, 1]} : vector<8x32x16xf32> to vector<1x32x16xf32>
    %131 = vector.shape_cast %130 : vector<1x32x16xf32> to vector<32x16xf32>
    %132 = vector.extract_strided_slice %104 {offsets = [0, 0, 0], sizes = [1, 16, 64], strides = [1, 1, 1]} : vector<4x16x64xf32> to vector<1x16x64xf32>
    %133 = vector.shape_cast %132 : vector<1x16x64xf32> to vector<16x64xf32>
    %cst_22 = arith.constant dense<0.000000e+00> : vector<32x64xf32>
    %134 = tpu.matmul %131, %133, %cst_22 {dimension_numbers = #tpu.dot_dimension_numbers<[1], [0], [0], [1], [0, 0, 1, 1], [], []>} : vector<32x16xf32>, vector<16x64xf32>, vector<32x64xf32> -> vector<32x64xf32>
    %135 = vector.broadcast %6 : vector<1x64xf32> to vector<32x64xf32>
    %136 = arith.addf %135, %134 : vector<32x64xf32>
    %137 = vector.extract_strided_slice %103 {offsets = [5, 0, 0], sizes = [1, 32, 16], strides = [1, 1, 1]} : vector<8x32x16xf32> to vector<1x32x16xf32>
    %138 = vector.shape_cast %137 : vector<1x32x16xf32> to vector<32x16xf32>
    %139 = vector.extract_strided_slice %104 {offsets = [1, 0, 0], sizes = [1, 16, 64], strides = [1, 1, 1]} : vector<4x16x64xf32> to vector<1x16x64xf32>
    %140 = vector.shape_cast %139 : vector<1x16x64xf32> to vector<16x64xf32>
    %cst_23 = arith.constant dense<0.000000e+00> : vector<32x64xf32>
    %141 = tpu.matmul %138, %140, %cst_23 {dimension_numbers = #tpu.dot_dimension_numbers<[1], [0], [0], [1], [0, 0, 1, 1], [], []>} : vector<32x16xf32>, vector<16x64xf32>, vector<32x64xf32> -> vector<32x64xf32>
    %142 = arith.addf %136, %141 : vector<32x64xf32>
    %143 = vector.extract_strided_slice %103 {offsets = [6, 0, 0], sizes = [1, 32, 16], strides = [1, 1, 1]} : vector<8x32x16xf32> to vector<1x32x16xf32>
    %144 = vector.shape_cast %143 : vector<1x32x16xf32> to vector<32x16xf32>
    %145 = vector.extract_strided_slice %104 {offsets = [2, 0, 0], sizes = [1, 16, 64], strides = [1, 1, 1]} : vector<4x16x64xf32> to vector<1x16x64xf32>
    %146 = vector.shape_cast %145 : vector<1x16x64xf32> to vector<16x64xf32>
    %cst_24 = arith.constant dense<0.000000e+00> : vector<32x64xf32>
    %147 = tpu.matmul %144, %146, %cst_24 {dimension_numbers = #tpu.dot_dimension_numbers<[1], [0], [0], [1], [0, 0, 1, 1], [], []>} : vector<32x16xf32>, vector<16x64xf32>, vector<32x64xf32> -> vector<32x64xf32>
    %148 = arith.addf %142, %147 : vector<32x64xf32>
    %149 = vector.extract_strided_slice %103 {offsets = [7, 0, 0], sizes = [1, 32, 16], strides = [1, 1, 1]} : vector<8x32x16xf32> to vector<1x32x16xf32>
    %150 = vector.shape_cast %149 : vector<1x32x16xf32> to vector<32x16xf32>
    %151 = vector.extract_strided_slice %104 {offsets = [3, 0, 0], sizes = [1, 16, 64], strides = [1, 1, 1]} : vector<4x16x64xf32> to vector<1x16x64xf32>
    %152 = vector.shape_cast %151 : vector<1x16x64xf32> to vector<16x64xf32>
    %cst_25 = arith.constant dense<0.000000e+00> : vector<32x64xf32>
    %153 = tpu.matmul %150, %152, %cst_25 {dimension_numbers = #tpu.dot_dimension_numbers<[1], [0], [0], [1], [0, 0, 1, 1], [], []>} : vector<32x16xf32>, vector<16x64xf32>, vector<32x64xf32> -> vector<32x64xf32>
    %154 = arith.addf %148, %153 : vector<32x64xf32>
    %155 = tpu.concatenate %129, %154 in 0 : vector<32x64xf32>, vector<32x64xf32> -> vector<64x64xf32>
    %156 = arith.addf %0, %155 : vector<64x64xf32>
    %cst_26 = arith.constant dense<0.000000e+00> : vector<64xf32>
    %157 = vector.multi_reduction <add>, %156, %cst_26 [1] : vector<64x64xf32> to vector<64xf32>
    %158 = vector.shape_cast %157 : vector<64xf32> to vector<64x1xf32>
    %cst_27 = arith.constant 6.400000e+01 : f32
    %159 = vector.broadcast %cst_27 : f32 to vector<64x1xf32>
    %160 = arith.divf %158, %159 : vector<64x1xf32>
    %161 = vector.broadcast %160 : vector<64x1xf32> to vector<64x64xf32>
    %162 = arith.subf %156, %161 : vector<64x64xf32>
    %163 = arith.mulf %162, %162 : vector<64x64xf32>
    %cst_28 = arith.constant dense<0.000000e+00> : vector<64xf32>
    %164 = vector.multi_reduction <add>, %163, %cst_28 [1] : vector<64x64xf32> to vector<64xf32>
    %165 = vector.shape_cast %164 : vector<64xf32> to vector<64x1xf32>
    %cst_29 = arith.constant 6.400000e+01 : f32
    %166 = vector.broadcast %cst_29 : f32 to vector<64x1xf32>
    %167 = arith.divf %165, %166 : vector<64x1xf32>
    %168 = vector.broadcast %160 : vector<64x1xf32> to vector<64x64xf32>
    %169 = arith.subf %156, %168 : vector<64x64xf32>
    %cst_30 = arith.constant 9.99999974E-6 : f32
    %170 = vector.broadcast %cst_30 : f32 to vector<64x1xf32>
    %171 = arith.addf %167, %170 : vector<64x1xf32>
    %172 = math.rsqrt %171 : vector<64x1xf32>
    %173 = vector.broadcast %172 : vector<64x1xf32> to vector<64x64xf32>
    %174 = arith.mulf %169, %173 : vector<64x64xf32>
    %175 = vector.broadcast %4 : vector<1x64xf32> to vector<64x64xf32>
    %176 = arith.mulf %174, %175 : vector<64x64xf32>
    %177 = vector.broadcast %5 : vector<1x64xf32> to vector<64x64xf32>
    %178 = arith.addf %176, %177 : vector<64x64xf32>
    %179 = arith.truncf %178 : vector<64x64xf32> to vector<64x64xbf16>
    %c0_31 = arith.constant 0 : index
    %c0_32 = arith.constant 0 : index
    %180 = vector.load %arg4[%c0_31, %c0_32] : memref<64x256xbf16, #tpu.memory_space<vmem>>, vector<64x256xbf16>
    %cst_33 = arith.constant dense<0.000000e+00> : vector<64x256xf32>
    %181 = tpu.matmul %179, %180, %cst_33 {dimension_numbers = #tpu.dot_dimension_numbers<[1], [0], [0], [1], [0, 0, 1, 1], [], []>} : vector<64x64xbf16>, vector<64x256xbf16>, vector<64x256xf32> -> vector<64x256xf32>
    %c0_34 = arith.constant 0 : index
    %c0_35 = arith.constant 0 : index
    %182 = vector.load %arg7[%c0_34, %c0_35] : memref<1x256xf32, #tpu.memory_space<vmem>>, vector<1x256xf32>
    %183 = vector.broadcast %182 : vector<1x256xf32> to vector<64x256xf32>
    %184 = arith.addf %181, %183 : vector<64x256xf32>
    %cst_36 = arith.constant 0.000000e+00 : f32
    %185 = vector.broadcast %cst_36 : f32 to vector<64x256xf32>
    %186 = arith.maximumf %184, %185 : vector<64x256xf32>
    %187 = arith.truncf %186 : vector<64x256xf32> to vector<64x256xbf16>
    %c0_37 = arith.constant 0 : index
    %c0_38 = arith.constant 0 : index
    %188 = vector.load %arg5[%c0_37, %c0_38] : memref<256x64xbf16, #tpu.memory_space<vmem>>, vector<256x64xbf16>
    %cst_39 = arith.constant dense<0.000000e+00> : vector<64x64xf32>
    %189 = tpu.matmul %187, %188, %cst_39 {dimension_numbers = #tpu.dot_dimension_numbers<[1], [0], [0], [1], [0, 0, 1, 1], [], []>} : vector<64x256xbf16>, vector<256x64xbf16>, vector<64x64xf32> -> vector<64x64xf32>
    %190 = vector.broadcast %7 : vector<1x64xf32> to vector<64x64xf32>
    %191 = arith.addf %189, %190 : vector<64x64xf32>
    %192 = arith.addf %156, %191 : vector<64x64xf32>
    %c0_40 = arith.constant 0 : index
    %c0_41 = arith.constant 0 : index
    %193 = vector.load %arg8[%c0_40, %c0_41] : memref<64x64xf32, #tpu.memory_space<vmem>>, vector<64x64xf32>
    tpu.vector_store %arg8[%c0_40, %c0_41], %192 {strides = array<i32>} : memref<64x64xf32, #tpu.memory_space<vmem>>, vector<64x64xf32>,
    return
  }
  func.func @transform_0(%arg0: i32) -> (i32, i32) {
    %c0_i32 = arith.constant 0 : i32
    %c0_i32_0 = arith.constant 0 : i32
    %c0_i32_1 = arith.constant 0 : i32
    return %c0_i32, %c0_i32_0 : i32, i32
  }
  func.func @transform_1(%arg0: i32) -> (i32, i32) {
    %c0_i32 = arith.constant 0 : i32
    %c0_i32_0 = arith.constant 0 : i32
    %c0_i32_1 = arith.constant 0 : i32
    return %c0_i32, %c0_i32_0 : i32, i32
  }
  func.func @transform_2(%arg0: i32) -> (i32, i32, i32) {
    %c0_i32 = arith.constant 0 : i32
    %c0_i32_0 = arith.constant 0 : i32
    %c0_i32_1 = arith.constant 0 : i32
    %c0_i32_2 = arith.constant 0 : i32
    return %c0_i32, %c0_i32_0, %c0_i32_1 : i32, i32, i32
  }
  func.func @transform_3(%arg0: i32) -> (i32, i32) {
    %c0_i32 = arith.constant 0 : i32
    %c0_i32_0 = arith.constant 0 : i32
    %c0_i32_1 = arith.constant 0 : i32
    return %c0_i32, %c0_i32_0 : i32, i32
  }
  func.func @transform_4(%arg0: i32) -> (i32, i32) {
    %c0_i32 = arith.constant 0 : i32
    %c0_i32_0 = arith.constant 0 : i32
    %c0_i32_1 = arith.constant 0 : i32
    return %c0_i32, %c0_i32_0 : i32, i32
  }
  func.func @transform_5(%arg0: i32) -> (i32, i32) {
    %c0_i32 = arith.constant 0 : i32
    %c0_i32_0 = arith.constant 0 : i32
    %c0_i32_1 = arith.constant 0 : i32
    return %c0_i32, %c0_i32_0 : i32, i32
  }
  func.func @transform_6(%arg0: i32) -> (i32, i32) {
    %c0_i32 = arith.constant 0 : i32
    %c0_i32_0 = arith.constant 0 : i32
    %c0_i32_1 = arith.constant 0 : i32
    return %c0_i32, %c0_i32_0 : i32, i32
  }
  func.func @transform_7(%arg0: i32) -> (i32, i32) {
    %c0_i32 = arith.constant 0 : i32
    %c0_i32_0 = arith.constant 0 : i32
    %c0_i32_1 = arith.constant 0 : i32
    return %c0_i32, %c0_i32_0 : i32, i32
  }
}

</mosaic_0001>

<llo_original>
// kernel: tpu_custom_call.1
$region0: #{tpu_custom_call.1}
  #allocation0 [shape = 'u32[]', space=smem, size = 0x4, offset = 0x4, fixed_abs, tag = 'smem constant byte address 0x4 - core index']
  #allocation1 [shape = 'u32[144,128]{1,0:T(1,128)}', space=vmem, size = 0x12000, scoped, tag = 'internal scratch']
  %s0 = inlined_call_operand.vmem [shape: f32[64,64], index: 0, kind: input, shape index: {}]
  %s1 = inlined_call_operand.vmem [shape: bf16[64,192], index: 1, kind: input, shape index: {}]
  %s2 = inlined_call_operand.vmem [shape: f32[4,16,64], index: 2, kind: input, shape index: {}]
  %s3 = inlined_call_operand.hbm [shape: bf16[64,256], index: 3, kind: input, shape index: {}]
  %s4 = inlined_call_operand.vmem [shape: bf16[256,64], index: 4, kind: input, shape index: {}]
  %s5 = inlined_call_operand.hbm [shape: f32[6,64], index: 5, kind: input, shape index: {}]
  %s6 = inlined_call_operand.vmem [shape: f32[1,256], index: 6, kind: input, shape index: {}]
  %s7 = inlined_call_operand.hbm [shape: f32[64,64], index: 7, kind: output, shape index: {}]
  %s8 = sld [smem:[#allocation0]]
  $region46: #{tpu_custom_call.1} parent=0
    _
  %s10 = ssub.s32 1, %s8
  %s11 = scalar_select 0, %s10, %s8
  $region1: #{tpu_custom_call.1} parent=0
    #allocation2 [shape = 'u8[32768]{0}', space=vmem, size = 0x8000, scoped, tag = 'input window, operand 3, single buffered']
    #allocation3 [shape = 's32[1]{0}', space=sflag, size = 0x4, scoped, tag = 'scoped memory for tpu_custom_call.1']
    #allocation4 [shape = 's32[1]{0}', space=sflag, size = 0x4, scoped, tag = 'scoped memory for tpu_custom_call.1']
    #allocation5 [shape = 'u8[4096]{0}', space=vmem, size = 0x1000, scoped, tag = 'input window, operand 5, single buffered']
    #allocation6 [shape = 's32[1]{0}', space=sflag, size = 0x4, scoped, tag = 'scoped memory for tpu_custom_call.1']
    #allocation7 [shape = 'u8[32768]{0}', space=vmem, size = 0x8000, scoped, tag = 'output window, operand 0, single buffered']
    %12 = vsyncpa [#allocation3], 0
    %13 = vsyncpa [#allocation6], 0
    %14 = vsyncpa [#allocation4], 0
    // Predicated region
    $region2: #{tpu_custom_call.1} parent=1 // pred_check
      _
    $region3: #{tpu_custom_call.1} parent=1 // pred_check_branch
      %16 = sbr.rel (0) target = $region5
    $region4: #{tpu_custom_call.1} parent=1 // pred_region
      _
    $region5: #{tpu_custom_call.1} parent=1 // pred_fallthru
      _
    // Predicated region
    $region6: #{tpu_custom_call.1} parent=1 // pred_check
      _
    $region7: #{tpu_custom_call.1} parent=1 // pred_check_branch
      %18 = sbr.rel (0) target = $region9
    $region8: #{tpu_custom_call.1} parent=1 // pred_region
      _
    $region9: #{tpu_custom_call.1} parent=1 // pred_fallthru
      _
    // Predicated region
    $region10: #{tpu_custom_call.1} parent=1 // pred_check
      _
    $region11: #{tpu_custom_call.1} parent=1 // pred_check_branch
      %20 = sbr.rel (0) target = $region13
    $region12: #{tpu_custom_call.1} parent=1 // pred_region
      _
    $region13: #{tpu_custom_call.1} parent=1 // pred_fallthru
      _
    // Predicated region
    $region14: #{tpu_custom_call.1} parent=1 // pred_check
      _
    $region15: #{tpu_custom_call.1} parent=1 // pred_check_branch
      %22 = sbr.rel (0) target = $region17
    $region16: #{tpu_custom_call.1} parent=1 // pred_region
      %s24 = ssub.s32 1024, 1024
      %25 = vsyncadd [#allocation3], %s24
      %s26 = sshll.u32 [#allocation2], 4
      %s27 = int_to_ptr.vmem [resolvable:$true] %s26
      %32 = dma.hbm_to_vmem [thread:$0]  %s3, 1024, %s27, [#allocation3], 128, 128, 8
    $region17: #{tpu_custom_call.1} parent=1 // pred_fallthru
      _
    // Predicated region
    $region18: #{tpu_custom_call.1} parent=1 // pred_check
      _
    $region19: #{tpu_custom_call.1} parent=1 // pred_check_branch
      %34 = sbr.rel (0) target = $region21
    $region20: #{tpu_custom_call.1} parent=1 // pred_region
      _
    $region21: #{tpu_custom_call.1} parent=1 // pred_fallthru
      _
    // Predicated region
    $region22: #{tpu_custom_call.1} parent=1 // pred_check
      _
    $region23: #{tpu_custom_call.1} parent=1 // pred_check_branch
      %36 = sbr.rel (0) target = $region25
    $region24: #{tpu_custom_call.1} parent=1 // pred_region
      %s38 = ssub.s32 128, 128
      %39 = vsyncadd [#allocation6], %s38
      %s41 = sshll.u32 [#allocation5], 4
      %s42 = int_to_ptr.vmem [resolvable:$true] %s41
      %44 = dma.hbm_to_vmem [thread:$0]  %s5, 128, %s42, [#allocation6]
    $region25: #{tpu_custom_call.1} parent=1 // pred_fallthru
      _
    // Predicated region
    $region26: #{tpu_custom_call.1} parent=1 // pred_check
      _
    $region27: #{tpu_custom_call.1} parent=1 // pred_check_branch
      %46 = sbr.rel (0) target = $region29
    $region28: #{tpu_custom_call.1} parent=1 // pred_region
      _
    $region29: #{tpu_custom_call.1} parent=1 // pred_fallthru
      _
    // Predicated region
    $region30: #{tpu_custom_call.1} parent=1 // pred_check
      _
    $region31: #{tpu_custom_call.1} parent=1 // pred_check_branch
      %48 = sbr.rel (0) target = $region33
    $region32: #{tpu_custom_call.1} parent=1 // pred_region
      %49 = dma.done [#allocation3], 1024
    $region33: #{tpu_custom_call.1} parent=1 // pred_fallthru
      _
    // Predicated region
    $region34: #{tpu_custom_call.1} parent=1 // pred_check
      _
    $region35: #{tpu_custom_call.1} parent=1 // pred_check_branch
      %51 = sbr.rel (0) target = $region37
    $region36: #{tpu_custom_call.1} parent=1 // pred_region
      %52 = dma.done [#allocation6], 128
    $region37: #{tpu_custom_call.1} parent=1 // pred_fallthru
      _
    %v54 = vld [vmem:[%s0] sm:$0xff]
    %v55 = vld [vmem:[%s0 + $0x8] sm:$0xff]
    %v56 = vld [vmem:[%s0 + $0x10] sm:$0xff]
    %v57 = vld [vmem:[%s0 + $0x18] sm:$0xff]
    %v58 = vld [vmem:[%s0 + $0x20] sm:$0xff]
    %v59 = vld [vmem:[%s0 + $0x28] sm:$0xff]
    %v60 = vld [vmem:[%s0 + $0x30] sm:$0xff]
    %v61 = vld [vmem:[%s0 + $0x38] sm:$0xff]
    %v62 = vld [vmem:[#allocation5] sm:$0x3f]
    %vm63 = vcmask 523264
    %v64 = vsel %vm63, %v54, 0.0
    %65 = vadd.xlane.f32.xlu0 %v64
    %v66 = vpop.xlane.xlu0 %65
    %v67 = vsel %vm63, %v55, 0.0
    %68 = vadd.xlane.f32.xlu0 %v67
    %v69 = vpop.xlane.xlu0 %68
    %v70 = vsel %vm63, %v56, 0.0
    %71 = vadd.xlane.f32.xlu0 %v70
    %v72 = vpop.xlane.xlu0 %71
    %v73 = vsel %vm63, %v57, 0.0
    %74 = vadd.xlane.f32.xlu0 %v73
    %v75 = vpop.xlane.xlu0 %74
    %v76 = vsel %vm63, %v58, 0.0
    %77 = vadd.xlane.f32.xlu0 %v76
    %v78 = vpop.xlane.xlu0 %77
    %v79 = vsel %vm63, %v59, 0.0
    %80 = vadd.xlane.f32.xlu0 %v79
    %v81 = vpop.xlane.xlu0 %80
    %v82 = vsel %vm63, %v60, 0.0
    %83 = vadd.xlane.f32.xlu0 %v82
    %v84 = vpop.xlane.xlu0 %83
    %v85 = vsel %vm63, %v61, 0.0
    %86 = vadd.xlane.f32.xlu0 %v85
    %v87 = vpop.xlane.xlu0 %86
    %v88 = vrcp.pop 64.0
    %v89 = vmul.f32 %v66, %v88
    %v90 = vmul.f32 %v69, %v88
    %v91 = vmul.f32 %v72, %v88
    %v92 = vmul.f32 %v75, %v88
    %v93 = vmul.f32 %v78, %v88
    %v94 = vmul.f32 %v81, %v88
    %v95 = vmul.f32 %v84, %v88
    %v96 = vmul.f32 %v87, %v88
    %v97 = vsub.f32 %v54, %v89
    %v98 = vsub.f32 %v55, %v90
    %v99 = vsub.f32 %v56, %v91
    %v100 = vsub.f32 %v57, %v92
    %v101 = vsub.f32 %v58, %v93
    %v102 = vsub.f32 %v59, %v94
    %v103 = vsub.f32 %v60, %v95
    %v104 = vsub.f32 %v61, %v96
    %v105 = vmul.f32 %v97, %v97
    %v106 = vmul.f32 %v98, %v98
    %v107 = vmul.f32 %v99, %v99
    %v108 = vmul.f32 %v100, %v100
    %v109 = vmul.f32 %v101, %v101
    %v110 = vmul.f32 %v102, %v102
    %v111 = vmul.f32 %v103, %v103
    %v112 = vmul.f32 %v104, %v104
    %v113 = vsel %vm63, %v105, 0.0
    %114 = vadd.xlane.f32.xlu0 %v113
    %v115 = vpop.xlane.xlu0 %114
    %v116 = vsel %vm63, %v106, 0.0
    %117 = vadd.xlane.f32.xlu0 %v116
    %v118 = vpop.xlane.xlu0 %117
    %v119 = vsel %vm63, %v107, 0.0
    %120 = vadd.xlane.f32.xlu0 %v119
    %v121 = vpop.xlane.xlu0 %120
    %v122 = vsel %vm63, %v108, 0.0
    %123 = vadd.xlane.f32.xlu0 %v122
    %v124 = vpop.xlane.xlu0 %123
    %v125 = vsel %vm63, %v109, 0.0
    %126 = vadd.xlane.f32.xlu0 %v125
    %v127 = vpop.xlane.xlu0 %126
    %v128 = vsel %vm63, %v110, 0.0
    %129 = vadd.xlane.f32.xlu0 %v128
    %v130 = vpop.xlane.xlu0 %129
    %v131 = vsel %vm63, %v111, 0.0
    %132 = vadd.xlane.f32.xlu0 %v131
    %v133 = vpop.xlane.xlu0 %132
    %v134 = vsel %vm63, %v112, 0.0
    %135 = vadd.xlane.f32.xlu0 %v134
    %v136 = vpop.xlane.xlu0 %135
    %v137 = vmul.f32 %v115, %v88
    %v138 = vmul.f32 %v118, %v88
    %v139 = vmul.f32 %v121, %v88
    %v140 = vmul.f32 %v124, %v88
    %v141 = vmul.f32 %v127, %v88
    %v142 = vmul.f32 %v130, %v88
    %v143 = vmul.f32 %v133, %v88
    %v144 = vmul.f32 %v136, %v88
    %v145 = vadd.f32 %v137, 1e-05
    %v146 = vadd.f32 %v138, 1e-05
    %v147 = vadd.f32 %v139, 1e-05
    %v148 = vadd.f32 %v140, 1e-05
    %v149 = vadd.f32 %v141, 1e-05
    %v150 = vadd.f32 %v142, 1e-05
    %v151 = vadd.f32 %v143, 1e-05
    %v152 = vadd.f32 %v144, 1e-05
    %v153 = vrsqrt.pop %v145
    %v154 = vrsqrt.pop %v146
    %v155 = vrsqrt.pop %v147
    %v156 = vrsqrt.pop %v148
    %v157 = vrsqrt.pop %v149
    %v158 = vrsqrt.pop %v150
    %v159 = vrsqrt.pop %v151
    %v160 = vrsqrt.pop %v152
    %v161 = vmul.f32 %v97, %v153
    %v162 = vmul.f32 %v98, %v154
    %v163 = vmul.f32 %v99, %v155
    %v164 = vmul.f32 %v100, %v156
    %v165 = vmul.f32 %v101, %v157
    %v166 = vmul.f32 %v102, %v158
    %v167 = vmul.f32 %v103, %v159
    %v168 = vmul.f32 %v104, %v160
    %v169 = vlaneseq
    %v170 = vshrl.u32 %v169, 7
    %v171 = vsub.s32 0, %v170
    %v172 = vrot.slane %v62, %v171
    %v173 = vmul.f32 %v161, %v172
    %v174 = vmul.f32 %v162, %v172
    %v175 = vmul.f32 %v163, %v172
    %v176 = vmul.f32 %v164, %v172
    %v177 = vmul.f32 %v165, %v172
    %v178 = vmul.f32 %v166, %v172
    %v179 = vmul.f32 %v167, %v172
    %v180 = vmul.f32 %v168, %v172
    %v181 = vlaneseq
    %v182 = vshrl.u32 %v181, 7
    %v183 = vsub.s32 1, %v182
    %v184 = vrot.slane %v62, %v183
    %v185 = vadd.f32 %v173, %v184
    %v186 = vadd.f32 %v174, %v184
    %v187 = vadd.f32 %v175, %v184
    %v188 = vadd.f32 %v176, %v184
    %v189 = vadd.f32 %v177, %v184
    %v190 = vadd.f32 %v178, %v184
    %v191 = vadd.f32 %v179, %v184
    %v192 = vadd.f32 %v180, %v184
    %v193 = vpack.c.bf16 %v186, %v185
    %v194 = vpack.c.bf16 %v188, %v187
    %v195 = vpack.c.bf16 %v190, %v189
    %v196 = vpack.c.bf16 %v192, %v191
    %v197 = vld [vmem:[%s1] sm:$0xff]
    %v198 = vld [vmem:[%s1 + $0x8] sm:$0xff]
    %v199 = vld [vmem:[%s1 + $0x10] sm:$0xff]
    %v200 = vld [vmem:[%s1 + $0x18] sm:$0xff]
    %v201 = vld [vmem:[%s1 + $0x20] sm:$0xff]
    %v202 = vld [vmem:[%s1 + $0x28] sm:$0xff]
    %v203 = vld [vmem:[%s1 + $0x30] sm:$0xff]
    %v204 = vld [vmem:[%s1 + $0x38] sm:$0xff]
    %v213 = vunpack.c.l.b16 %v197
    %v214 = vunpack.c.h.b16 %v197
    %v215 = vunpack.c.l.b16 %v198
    %v216 = vunpack.c.h.b16 %v198
    %v217 = vunpack.c.l.b16 %v199
    %v218 = vunpack.c.h.b16 %v199
    %v219 = vunpack.c.l.b16 %v200
    %v220 = vunpack.c.h.b16 %v200
    %v221 = vunpack.c.l.b16 %v201
    %v222 = vunpack.c.h.b16 %v201
    %v223 = vunpack.c.l.b16 %v202
    %v224 = vunpack.c.h.b16 %v202
    %v225 = vunpack.c.l.b16 %v203
    %v226 = vunpack.c.h.b16 %v203
    %v227 = vunpack.c.l.b16 %v204
    %v228 = vunpack.c.h.b16 %v204
    %v229 = vpack.c.b16 %v215, %v213
    %v230 = vpack.c.b16 %v216, %v214
    %v231 = vpack.c.b16 %v219, %v217
    %v232 = vpack.c.b16 %v220, %v218
    %v233 = vpack.c.b16 %v223, %v221
    %v234 = vpack.c.b16 %v224, %v222
    %v235 = vpack.c.b16 %v227, %v225
    %v236 = vpack.c.b16 %v228, %v226
    %v246 = vsel %vm63, %v193, 0
    %v249 = vsel %vm63, %v194, 0
    %v252 = vsel %vm63, %v195, 0
    %v255 = vsel %vm63, %v196, 0
    %257 = vmatprep.subr.bf16.mxu0 0
    %258 = vmatpush1.bf16.msra.mxu0 0
    %259 = vmatprep.subr.bf16.mxu0 0
    %260 = vmatpush1.bf16.msra.mxu0 0
    %261 = vmatprep.subr.bf16.mxu0 0
    %262 = vmatpush1.bf16.msra.mxu0 0
    %263 = vmatprep.subr.bf16.mxu0 0
    %264 = vmatpush1.bf16.msra.mxu0 0
    %265 = vmatprep.subr.bf16.mxu0 %v236
    %266 = vmatpush1.bf16.msra.mxu0 %v235
    %267 = vmatprep.subr.bf16.mxu0 %v234
    %268 = vmatpush1.bf16.msra.mxu0 %v233
    %269 = vmatprep.subr.bf16.mxu0 %v232
    %270 = vmatpush1.bf16.msra.mxu0 %v231
    %271 = vmatprep.subr.bf16.mxu0 %v230
    %272 = vmatpush1.bf16.msra.mxu0 %v229
    %273 = vmatprep.subr.bf16.mxu0 0
    %274 = vmatpush2.bf16.msra.mxu0 0
    %275 = vmatprep.subr.bf16.mxu0 0
    %276 = vmatpush2.bf16.msra.mxu0 0
    %277 = vmatprep.subr.bf16.mxu0 0
    %278 = vmatpush2.bf16.msra.mxu0 0
    %279 = vmatprep.subr.bf16.mxu0 0
    %280 = vmatpush2.bf16.msra.mxu0 0
    %281 = vmatprep.subr.bf16.mxu0 0
    %282 = vmatpush2.bf16.msra.mxu0 0
    %283 = vmatprep.subr.bf16.mxu0 0
    %284 = vmatpush2.bf16.msra.mxu0 0
    %285 = vmatprep.subr.bf16.mxu0 0
    %286 = vmatpush2.bf16.msra.mxu0 0
    %287 = vmatprep.subr.bf16.mxu0 0
    %288 = vmatpush2.bf16.msra.mxu0 0
    %289 = vmatprep.mubr.bf16.mxu0 0
    %290 = vmatmul.mubr.bf16.gmra.mxu0 %v246
    %v291 = vpop.f32.mrf.mxu0
    %v292 = vadd.f32 0.0, %v291
    %v293 = vpop.f32.mrf.mxu0
    %v294 = vadd.f32 0.0, %v293
    %v295 = vpop.f32.mrf.mxu0
    %v296 = vadd.f32 0.0, %v295
    %v297 = vpop.f32.mrf.mxu0
    %v298 = vadd.f32 0.0, %v297
    %299 = vmatprep.mubr.bf16.mxu0 0
    %300 = vmatmul.mubr.bf16.gmra.mxu0 %v249
    %v301 = vpop.f32.mrf.mxu0
    %v302 = vadd.f32 0.0, %v301
    %v303 = vpop.f32.mrf.mxu0
    %v304 = vadd.f32 0.0, %v303
    %v305 = vpop.f32.mrf.mxu0
    %v306 = vadd.f32 0.0, %v305
    %v307 = vpop.f32.mrf.mxu0
    %v308 = vadd.f32 0.0, %v307
    %309 = vmatprep.mubr.bf16.mxu0 0
    %310 = vmatmul.mubr.bf16.gmra.mxu0 %v252
    %v311 = vpop.f32.mrf.mxu0
    %v312 = vadd.f32 0.0, %v311
    %v313 = vpop.f32.mrf.mxu0
    %v314 = vadd.f32 0.0, %v313
    %v315 = vpop.f32.mrf.mxu0
    %v316 = vadd.f32 0.0, %v315
    %v317 = vpop.f32.mrf.mxu0
    %v318 = vadd.f32 0.0, %v317
    %319 = vmatprep.mubr.bf16.mxu0 0
    %320 = vmatmul.mubr.bf16.gmra.mxu0 %v255
    %v321 = vpop.f32.mrf.mxu0
    %v322 = vadd.f32 0.0, %v321
    %v323 = vpop.f32.mrf.mxu0
    %v324 = vadd.f32 0.0, %v323
    %v325 = vpop.f32.mrf.mxu0
    %v326 = vadd.f32 0.0, %v325
    %v327 = vpop.f32.mrf.mxu0
    %v328 = vadd.f32 0.0, %v327
    %329 = vdwg.mxu0
    %334 = vrot.lane.b32.xlu0 %v292, 112
    %v335 = vpop.permute.xlu0 %334
    %336 = vrot.lane.b32.xlu0 %v296, 112
    %v337 = vpop.permute.xlu0 %336
    %338 = vrot.lane.b32.xlu0 %v302, 112
    %v339 = vpop.permute.xlu0 %338
    %340 = vrot.lane.b32.xlu0 %v306, 112
    %v341 = vpop.permute.xlu0 %340
    %342 = vrot.lane.b32.xlu0 %v292, 96
    %v343 = vpop.permute.xlu0 %342
    %344 = vrot.lane.b32.xlu0 %v296, 96
    %v345 = vpop.permute.xlu0 %344
    %346 = vrot.lane.b32.xlu0 %v302, 96
    %v347 = vpop.permute.xlu0 %346
    %348 = vrot.lane.b32.xlu0 %v306, 96
    %v349 = vpop.permute.xlu0 %348
    %350 = vrot.lane.b32.xlu0 %v292, 80
    %v351 = vpop.permute.xlu0 %350
    %352 = vrot.lane.b32.xlu0 %v296, 80
    %v353 = vpop.permute.xlu0 %352
    %354 = vrot.lane.b32.xlu0 %v302, 80
    %v355 = vpop.permute.xlu0 %354
    %356 = vrot.lane.b32.xlu0 %v306, 80
    %v357 = vpop.permute.xlu0 %356
    %362 = vrot.lane.b32.xlu0 %v312, 112
    %v363 = vpop.permute.xlu0 %362
    %364 = vrot.lane.b32.xlu0 %v316, 112
    %v365 = vpop.permute.xlu0 %364
    %366 = vrot.lane.b32.xlu0 %v322, 112
    %v367 = vpop.permute.xlu0 %366
    %368 = vrot.lane.b32.xlu0 %v326, 112
    %v369 = vpop.permute.xlu0 %368
    %370 = vrot.lane.b32.xlu0 %v312, 96
    %v371 = vpop.permute.xlu0 %370
    %372 = vrot.lane.b32.xlu0 %v316, 96
    %v373 = vpop.permute.xlu0 %372
    %374 = vrot.lane.b32.xlu0 %v322, 96
    %v375 = vpop.permute.xlu0 %374
    %376 = vrot.lane.b32.xlu0 %v326, 96
    %v377 = vpop.permute.xlu0 %376
    %378 = vrot.lane.b32.xlu0 %v312, 80
    %v379 = vpop.permute.xlu0 %378
    %380 = vrot.lane.b32.xlu0 %v316, 80
    %v381 = vpop.permute.xlu0 %380
    %382 = vrot.lane.b32.xlu0 %v322, 80
    %v383 = vpop.permute.xlu0 %382
    %384 = vrot.lane.b32.xlu0 %v326, 80
    %v385 = vpop.permute.xlu0 %384
    %390 = vrot.lane.b32.xlu0 %v294, 112
    %v391 = vpop.permute.xlu0 %390
    %392 = vrot.lane.b32.xlu0 %v298, 112
    %v393 = vpop.permute.xlu0 %392
    %394 = vrot.lane.b32.xlu0 %v304, 112
    %v395 = vpop.permute.xlu0 %394
    %396 = vrot.lane.b32.xlu0 %v308, 112
    %v397 = vpop.permute.xlu0 %396
    %402 = vrot.lane.b32.xlu0 %v294, 96
    %v403 = vpop.permute.xlu0 %402
    %404 = vrot.lane.b32.xlu0 %v298, 96
    %v405 = vpop.permute.xlu0 %404
    %406 = vrot.lane.b32.xlu0 %v304, 96
    %v407 = vpop.permute.xlu0 %406
    %408 = vrot.lane.b32.xlu0 %v308, 96
    %v409 = vpop.permute.xlu0 %408
    %414 = vrot.lane.b32.xlu0 %v294, 80
    %v415 = vpop.permute.xlu0 %414
    %416 = vrot.lane.b32.xlu0 %v298, 80
    %v417 = vpop.permute.xlu0 %416
    %418 = vrot.lane.b32.xlu0 %v304, 80
    %v419 = vpop.permute.xlu0 %418
    %420 = vrot.lane.b32.xlu0 %v308, 80
    %v421 = vpop.permute.xlu0 %420
    %430 = vrot.lane.b32.xlu0 %v314, 112
    %v431 = vpop.permute.xlu0 %430
    %432 = vrot.lane.b32.xlu0 %v318, 112
    %v433 = vpop.permute.xlu0 %432
    %434 = vrot.lane.b32.xlu0 %v324, 112
    %v435 = vpop.permute.xlu0 %434
    %436 = vrot.lane.b32.xlu0 %v328, 112
    %v437 = vpop.permute.xlu0 %436
    %442 = vrot.lane.b32.xlu0 %v314, 96
    %v443 = vpop.permute.xlu0 %442
    %444 = vrot.lane.b32.xlu0 %v318, 96
    %v445 = vpop.permute.xlu0 %444
    %446 = vrot.lane.b32.xlu0 %v324, 96
    %v447 = vpop.permute.xlu0 %446
    %448 = vrot.lane.b32.xlu0 %v328, 96
    %v449 = vpop.permute.xlu0 %448
    %454 = vrot.lane.b32.xlu0 %v314, 80
    %v455 = vpop.permute.xlu0 %454
    %456 = vrot.lane.b32.xlu0 %v318, 80
    %v457 = vpop.permute.xlu0 %456
    %458 = vrot.lane.b32.xlu0 %v324, 80
    %v459 = vpop.permute.xlu0 %458
    %460 = vrot.lane.b32.xlu0 %v328, 80
    %v461 = vpop.permute.xlu0 %460
    %466 = vrot.lane.b32.xlu0 %v292, 64
    %v467 = vpop.permute.xlu0 %466
    %468 = vrot.lane.b32.xlu0 %v296, 64
    %v469 = vpop.permute.xlu0 %468
    %470 = vrot.lane.b32.xlu0 %v302, 64
    %v471 = vpop.permute.xlu0 %470
    %472 = vrot.lane.b32.xlu0 %v306, 64
    %v473 = vpop.permute.xlu0 %472
    %vm474 = vcmask 130048
    %v475 = vsel %vm474, %v292, 0
    %v477 = vsel %vm474, %v296, 0
    %v479 = vsel %vm474, %v302, 0
    %v481 = vsel %vm474, %v306, 0
    %v483 = vsel %vm474, %v467, 0
    %v485 = vsel %vm474, %v469, 0
    %v487 = vsel %vm474, %v471, 0
    %v489 = vsel %vm474, %v473, 0
    %491 = vmatprep.subr.mxu0 0.0
    %492 = vmatpush1.xpose.msra.mxu0 0.0
    %493 = vmatprep.subr.mxu0 0.0
    %494 = vmatpush1.xpose.msra.mxu0 0.0
    %495 = vmatprep.subr.mxu0 0.0
    %496 = vmatpush1.xpose.msra.mxu0 0.0
    %497 = vmatprep.subr.mxu0 0.0
    %498 = vmatpush1.xpose.msra.mxu0 0.0
    %499 = vmatprep.subr.mxu0 0.0
    %500 = vmatpush1.xpose.msra.mxu0 0.0
    %501 = vmatprep.subr.mxu0 0.0
    %502 = vmatpush1.xpose.msra.mxu0 0.0
    %503 = vmatprep.subr.mxu0 0.0
    %504 = vmatpush1.xpose.msra.mxu0 0.0
    %505 = vmatprep.subr.mxu0 0.0
    %506 = vmatpush1.xpose.msra.mxu0 0.0
    %507 = vmatprep.subr.mxu0 0.0
    %508 = vmatpush1.xpose.msra.mxu0 0.0
    %509 = vmatprep.subr.mxu0 0.0
    %510 = vmatpush1.xpose.msra.mxu0 0.0
    %511 = vmatprep.subr.mxu0 0.0
    %512 = vmatpush1.xpose.msra.mxu0 0.0
    %513 = vmatprep.subr.mxu0 0.0
    %514 = vmatpush1.xpose.msra.mxu0 0.0
    %515 = vmatprep.subr.mxu0 0.0
    %516 = vmatpush1.xpose.msra.mxu0 %v489
    %517 = vmatprep.subr.mxu0 0.0
    %518 = vmatpush1.xpose.msra.mxu0 %v487
    %519 = vmatprep.subr.mxu0 0.0
    %520 = vmatpush1.xpose.msra.mxu0 %v485
    %521 = vmatprep.subr.mxu0 0.0
    %522 = vmatpush1.xpose.msra.mxu0 %v483
    %523 = vmatprep.subr.mxu0 0.0
    %524 = vmatpush2.xpose.msra.mxu0 0.0
    %525 = vmatprep.subr.mxu0 0.0
    %526 = vmatpush2.xpose.msra.mxu0 0.0
    %527 = vmatprep.subr.mxu0 0.0
    %528 = vmatpush2.xpose.msra.mxu0 0.0
    %529 = vmatprep.subr.mxu0 0.0
    %530 = vmatpush2.xpose.msra.mxu0 0.0
    %531 = vmatprep.subr.mxu0 0.0
    %532 = vmatpush2.xpose.msra.mxu0 0.0
    %533 = vmatprep.subr.mxu0 0.0
    %534 = vmatpush2.xpose.msra.mxu0 0.0
    %535 = vmatprep.subr.mxu0 0.0
    %536 = vmatpush2.xpose.msra.mxu0 0.0
    %537 = vmatprep.subr.mxu0 0.0
    %538 = vmatpush2.xpose.msra.mxu0 0.0
    %539 = vmatprep.subr.mxu0 0.0
    %540 = vmatpush2.xpose.msra.mxu0 0.0
    %541 = vmatprep.subr.mxu0 0.0
    %542 = vmatpush2.xpose.msra.mxu0 0.0
    %543 = vmatprep.subr.mxu0 0.0
    %544 = vmatpush2.xpose.msra.mxu0 0.0
    %545 = vmatprep.subr.mxu0 0.0
    %546 = vmatpush2.xpose.msra.mxu0 0.0
    %547 = vmatprep.subr.mxu0 0.0
    %548 = vmatpush2.xpose.msra.mxu0 0.0
    %549 = vmatprep.subr.mxu0 0.0
    %550 = vmatpush2.xpose.msra.mxu0 0.0
    %551 = vmatprep.subr.mxu0 0.0
    %552 = vmatpush2.xpose.msra.mxu0 0.0
    %553 = vmatprep.subr.mxu0 0.0
    %554 = vmatpush2.xpose.msra.mxu0 0.0
    %555 = vmatprep.mubr.f32.mxu0 0.0
    %556 = vmatmul.mubr.f32.gmra.mxu0 %v475
    %v557 = vpop.f32.mrf.mxu0
    %v558 = vadd.f32 0.0, %v557
    %v559 = vpop.f32.mrf.mxu0
    %560 = vmatprep.mubr.f32.mxu0 0.0
    %561 = vmatmul.mubr.f32.gmra.mxu0 %v477
    %v562 = vpop.f32.mrf.mxu0
    %v563 = vadd.f32 0.0, %v562
    %v564 = vpop.f32.mrf.mxu0
    %565 = vmatprep.mubr.f32.mxu0 0.0
    %566 = vmatmul.mubr.f32.gmra.mxu0 %v479
    %v567 = vpop.f32.mrf.mxu0
    %v568 = vadd.f32 0.0, %v567
    %v569 = vpop.f32.mrf.mxu0
    %570 = vmatprep.mubr.f32.mxu0 0.0
    %571 = vmatmul.mubr.f32.gmra.mxu0 %v481
    %v572 = vpop.f32.mrf.mxu0
    %v573 = vadd.f32 0.0, %v572
    %v574 = vpop.f32.mrf.mxu0
    %575 = vdwg.mxu0
    %576 = vrot.lane.b32.xlu0 %v335, 64
    %v577 = vpop.permute.xlu0 %576
    %578 = vrot.lane.b32.xlu0 %v337, 64
    %v579 = vpop.permute.xlu0 %578
    %580 = vrot.lane.b32.xlu0 %v339, 64
    %v581 = vpop.permute.xlu0 %580
    %582 = vrot.lane.b32.xlu0 %v341, 64
    %v583 = vpop.permute.xlu0 %582
    %v584 = vsel %vm474, %v335, 0
    %v586 = vsel %vm474, %v337, 0
    %v588 = vsel %vm474, %v339, 0
    %v590 = vsel %vm474, %v341, 0
    %v592 = vsel %vm474, %v577, 0
    %v594 = vsel %vm474, %v579, 0
    %v596 = vsel %vm474, %v581, 0
    %v598 = vsel %vm474, %v583, 0
    %600 = vmatprep.subr.mxu0 0.0
    %601 = vmatpush1.xpose.msra.mxu0 0.0
    %602 = vmatprep.subr.mxu0 0.0
    %603 = vmatpush1.xpose.msra.mxu0 0.0
    %604 = vmatprep.subr.mxu0 0.0
    %605 = vmatpush1.xpose.msra.mxu0 0.0
    %606 = vmatprep.subr.mxu0 0.0
    %607 = vmatpush1.xpose.msra.mxu0 0.0
    %608 = vmatprep.subr.mxu0 0.0
    %609 = vmatpush1.xpose.msra.mxu0 0.0
    %610 = vmatprep.subr.mxu0 0.0
    %611 = vmatpush1.xpose.msra.mxu0 0.0
    %612 = vmatprep.subr.mxu0 0.0
    %613 = vmatpush1.xpose.msra.mxu0 0.0
    %614 = vmatprep.subr.mxu0 0.0
    %615 = vmatpush1.xpose.msra.mxu0 0.0
    %616 = vmatprep.subr.mxu0 0.0
    %617 = vmatpush1.xpose.msra.mxu0 0.0
    %618 = vmatprep.subr.mxu0 0.0
    %619 = vmatpush1.xpose.msra.mxu0 0.0
    %620 = vmatprep.subr.mxu0 0.0
    %621 = vmatpush1.xpose.msra.mxu0 0.0
    %622 = vmatprep.subr.mxu0 0.0
    %623 = vmatpush1.xpose.msra.mxu0 0.0
    %624 = vmatprep.subr.mxu0 0.0
    %625 = vmatpush1.xpose.msra.mxu0 %v598
    %626 = vmatprep.subr.mxu0 0.0
    %627 = vmatpush1.xpose.msra.mxu0 %v596
    %628 = vmatprep.subr.mxu0 0.0
    %629 = vmatpush1.xpose.msra.mxu0 %v594
    %630 = vmatprep.subr.mxu0 0.0
    %631 = vmatpush1.xpose.msra.mxu0 %v592
    %632 = vmatprep.subr.mxu0 0.0
    %633 = vmatpush2.xpose.msra.mxu0 0.0
    %634 = vmatprep.subr.mxu0 0.0
    %635 = vmatpush2.xpose.msra.mxu0 0.0
    %636 = vmatprep.subr.mxu0 0.0
    %637 = vmatpush2.xpose.msra.mxu0 0.0
    %638 = vmatprep.subr.mxu0 0.0
    %639 = vmatpush2.xpose.msra.mxu0 0.0
    %640 = vmatprep.subr.mxu0 0.0
    %641 = vmatpush2.xpose.msra.mxu0 0.0
    %642 = vmatprep.subr.mxu0 0.0
    %643 = vmatpush2.xpose.msra.mxu0 0.0
    %644 = vmatprep.subr.mxu0 0.0
    %645 = vmatpush2.xpose.msra.mxu0 0.0
    %646 = vmatprep.subr.mxu0 0.0
    %647 = vmatpush2.xpose.msra.mxu0 0.0
    %648 = vmatprep.subr.mxu0 0.0
    %649 = vmatpush2.xpose.msra.mxu0 0.0
    %650 = vmatprep.subr.mxu0 0.0
    %651 = vmatpush2.xpose.msra.mxu0 0.0
    %652 = vmatprep.subr.mxu0 0.0
    %653 = vmatpush2.xpose.msra.mxu0 0.0
    %654 = vmatprep.subr.mxu0 0.0
    %655 = vmatpush2.xpose.msra.mxu0 0.0
    %656 = vmatprep.subr.mxu0 0.0
    %657 = vmatpush2.xpose.msra.mxu0 0.0
    %658 = vmatprep.subr.mxu0 0.0
    %659 = vmatpush2.xpose.msra.mxu0 0.0
    %660 = vmatprep.subr.mxu0 0.0
    %661 = vmatpush2.xpose.msra.mxu0 0.0
    %662 = vmatprep.subr.mxu0 0.0
    %663 = vmatpush2.xpose.msra.mxu0 0.0
    %664 = vmatprep.mubr.f32.mxu0 0.0
    %665 = vmatmul.mubr.f32.gmra.mxu0 %v584
    %v666 = vpop.f32.mrf.mxu0
    %v667 = vadd.f32 0.0, %v666
    %v668 = vpop.f32.mrf.mxu0
    %669 = vmatprep.mubr.f32.mxu0 0.0
    %670 = vmatmul.mubr.f32.gmra.mxu0 %v586
    %v671 = vpop.f32.mrf.mxu0
    %v672 = vadd.f32 0.0, %v671
    %v673 = vpop.f32.mrf.mxu0
    %674 = vmatprep.mubr.f32.mxu0 0.0
    %675 = vmatmul.mubr.f32.gmra.mxu0 %v588
    %v676 = vpop.f32.mrf.mxu0
    %v677 = vadd.f32 0.0, %v676
    %v678 = vpop.f32.mrf.mxu0
    %679 = vmatprep.mubr.f32.mxu0 0.0
    %680 = vmatmul.mubr.f32.gmra.mxu0 %v590
    %v681 = vpop.f32.mrf.mxu0
    %v682 = vadd.f32 0.0, %v681
    %v683 = vpop.f32.mrf.mxu0
    %684 = vdwg.mxu0
    %685 = vrot.lane.b32.xlu0 %v343, 64
    %v686 = vpop.permute.xlu0 %685
    %687 = vrot.lane.b32.xlu0 %v345, 64
    %v688 = vpop.permute.xlu0 %687
    %689 = vrot.lane.b32.xlu0 %v347, 64
    %v690 = vpop.permute.xlu0 %689
    %691 = vrot.lane.b32.xlu0 %v349, 64
    %v692 = vpop.permute.xlu0 %691
    %v693 = vsel %vm474, %v343, 0
    %v695 = vsel %vm474, %v345, 0
    %v697 = vsel %vm474, %v347, 0
    %v699 = vsel %vm474, %v349, 0
    %v701 = vsel %vm474, %v686, 0
    %v703 = vsel %vm474, %v688, 0
    %v705 = vsel %vm474, %v690, 0
    %v707 = vsel %vm474, %v692, 0
    %709 = vmatprep.subr.mxu0 0.0
    %710 = vmatpush1.xpose.msra.mxu0 0.0
    %711 = vmatprep.subr.mxu0 0.0
    %712 = vmatpush1.xpose.msra.mxu0 0.0
    %713 = vmatprep.subr.mxu0 0.0
    %714 = vmatpush1.xpose.msra.mxu0 0.0
    %715 = vmatprep.subr.mxu0 0.0
    %716 = vmatpush1.xpose.msra.mxu0 0.0
    %717 = vmatprep.subr.mxu0 0.0
    %718 = vmatpush1.xpose.msra.mxu0 0.0
    %719 = vmatprep.subr.mxu0 0.0
    %720 = vmatpush1.xpose.msra.mxu0 0.0
    %721 = vmatprep.subr.mxu0 0.0
    %722 = vmatpush1.xpose.msra.mxu0 0.0
    %723 = vmatprep.subr.mxu0 0.0
    %724 = vmatpush1.xpose.msra.mxu0 0.0
    %725 = vmatprep.subr.mxu0 0.0
    %726 = vmatpush1.xpose.msra.mxu0 0.0
    %727 = vmatprep.subr.mxu0 0.0
    %728 = vmatpush1.xpose.msra.mxu0 0.0
    %729 = vmatprep.subr.mxu0 0.0
    %730 = vmatpush1.xpose.msra.mxu0 0.0
    %731 = vmatprep.subr.mxu0 0.0
    %732 = vmatpush1.xpose.msra.mxu0 0.0
    %733 = vmatprep.subr.mxu0 0.0
    %734 = vmatpush1.xpose.msra.mxu0 %v707
    %735 = vmatprep.subr.mxu0 0.0
    %736 = vmatpush1.xpose.msra.mxu0 %v705
    %737 = vmatprep.subr.mxu0 0.0
    %738 = vmatpush1.xpose.msra.mxu0 %v703
    %739 = vmatprep.subr.mxu0 0.0
    %740 = vmatpush1.xpose.msra.mxu0 %v701
    %741 = vmatprep.subr.mxu0 0.0
    %742 = vmatpush2.xpose.msra.mxu0 0.0
    %743 = vmatprep.subr.mxu0 0.0
    %744 = vmatpush2.xpose.msra.mxu0 0.0
    %745 = vmatprep.subr.mxu0 0.0
    %746 = vmatpush2.xpose.msra.mxu0 0.0
    %747 = vmatprep.subr.mxu0 0.0
    %748 = vmatpush2.xpose.msra.mxu0 0.0
    %749 = vmatprep.subr.mxu0 0.0
    %750 = vmatpush2.xpose.msra.mxu0 0.0
    %751 = vmatprep.subr.mxu0 0.0
    %752 = vmatpush2.xpose.msra.mxu0 0.0
    %753 = vmatprep.subr.mxu0 0.0
    %754 = vmatpush2.xpose.msra.mxu0 0.0
    %755 = vmatprep.subr.mxu0 0.0
    %756 = vmatpush2.xpose.msra.mxu0 0.0
    %757 = vmatprep.subr.mxu0 0.0
    %758 = vmatpush2.xpose.msra.mxu0 0.0
    %759 = vmatprep.subr.mxu0 0.0
    %760 = vmatpush2.xpose.msra.mxu0 0.0
    %761 = vmatprep.subr.mxu0 0.0
    %762 = vmatpush2.xpose.msra.mxu0 0.0
    %763 = vmatprep.subr.mxu0 0.0
    %764 = vmatpush2.xpose.msra.mxu0 0.0
    %765 = vmatprep.subr.mxu0 0.0
    %766 = vmatpush2.xpose.msra.mxu0 0.0
    %767 = vmatprep.subr.mxu0 0.0
    %768 = vmatpush2.xpose.msra.mxu0 0.0
    %769 = vmatprep.subr.mxu0 0.0
    %770 = vmatpush2.xpose.msra.mxu0 0.0
    %771 = vmatprep.subr.mxu0 0.0
    %772 = vmatpush2.xpose.msra.mxu0 0.0
    %773 = vmatprep.mubr.f32.mxu0 0.0
    %774 = vmatmul.mubr.f32.gmra.mxu0 %v693
    %v775 = vpop.f32.mrf.mxu0
    %v776 = vadd.f32 0.0, %v775
    %v777 = vpop.f32.mrf.mxu0
    %778 = vmatprep.mubr.f32.mxu0 0.0
    %779 = vmatmul.mubr.f32.gmra.mxu0 %v695
    %v780 = vpop.f32.mrf.mxu0
    %v781 = vadd.f32 0.0, %v780
    %v782 = vpop.f32.mrf.mxu0
    %783 = vmatprep.mubr.f32.mxu0 0.0
    %784 = vmatmul.mubr.f32.gmra.mxu0 %v697
    %v785 = vpop.f32.mrf.mxu0
    %v786 = vadd.f32 0.0, %v785
    %v787 = vpop.f32.mrf.mxu0
    %788 = vmatprep.mubr.f32.mxu0 0.0
    %789 = vmatmul.mubr.f32.gmra.mxu0 %v699
    %v790 = vpop.f32.mrf.mxu0
    %v791 = vadd.f32 0.0, %v790
    %v792 = vpop.f32.mrf.mxu0
    %793 = vdwg.mxu0
    %794 = vrot.lane.b32.xlu0 %v351, 64
    %v795 = vpop.permute.xlu0 %794
    %796 = vrot.lane.b32.xlu0 %v353, 64
    %v797 = vpop.permute.xlu0 %796
    %798 = vrot.lane.b32.xlu0 %v355, 64
    %v799 = vpop.permute.xlu0 %798
    %800 = vrot.lane.b32.xlu0 %v357, 64
    %v801 = vpop.permute.xlu0 %800
    %v802 = vsel %vm474, %v351, 0
    %v804 = vsel %vm474, %v353, 0
    %v806 = vsel %vm474, %v355, 0
    %v808 = vsel %vm474, %v357, 0
    %v810 = vsel %vm474, %v795, 0
    %v812 = vsel %vm474, %v797, 0
    %v814 = vsel %vm474, %v799, 0
    %v816 = vsel %vm474, %v801, 0
    %818 = vmatprep.subr.mxu0 0.0
    %819 = vmatpush1.xpose.msra.mxu0 0.0
    %820 = vmatprep.subr.mxu0 0.0
    %821 = vmatpush1.xpose.msra.mxu0 0.0
    %822 = vmatprep.subr.mxu0 0.0
    %823 = vmatpush1.xpose.msra.mxu0 0.0
    %824 = vmatprep.subr.mxu0 0.0
    %825 = vmatpush1.xpose.msra.mxu0 0.0
    %826 = vmatprep.subr.mxu0 0.0
    %827 = vmatpush1.xpose.msra.mxu0 0.0
    %828 = vmatprep.subr.mxu0 0.0
    %829 = vmatpush1.xpose.msra.mxu0 0.0
    %830 = vmatprep.subr.mxu0 0.0
    %831 = vmatpush1.xpose.msra.mxu0 0.0
    %832 = vmatprep.subr.mxu0 0.0
    %833 = vmatpush1.xpose.msra.mxu0 0.0
    %834 = vmatprep.subr.mxu0 0.0
    %835 = vmatpush1.xpose.msra.mxu0 0.0
    %836 = vmatprep.subr.mxu0 0.0
    %837 = vmatpush1.xpose.msra.mxu0 0.0
    %838 = vmatprep.subr.mxu0 0.0
    %839 = vmatpush1.xpose.msra.mxu0 0.0
    %840 = vmatprep.subr.mxu0 0.0
    %841 = vmatpush1.xpose.msra.mxu0 0.0
    %842 = vmatprep.subr.mxu0 0.0
    %843 = vmatpush1.xpose.msra.mxu0 %v816
    %844 = vmatprep.subr.mxu0 0.0
    %845 = vmatpush1.xpose.msra.mxu0 %v814
    %846 = vmatprep.subr.mxu0 0.0
    %847 = vmatpush1.xpose.msra.mxu0 %v812
    %848 = vmatprep.subr.mxu0 0.0
    %849 = vmatpush1.xpose.msra.mxu0 %v810
    %850 = vmatprep.subr.mxu0 0.0
    %851 = vmatpush2.xpose.msra.mxu0 0.0
    %852 = vmatprep.subr.mxu0 0.0
    %853 = vmatpush2.xpose.msra.mxu0 0.0
    %854 = vmatprep.subr.mxu0 0.0
    %855 = vmatpush2.xpose.msra.mxu0 0.0
    %856 = vmatprep.subr.mxu0 0.0
    %857 = vmatpush2.xpose.msra.mxu0 0.0
    %858 = vmatprep.subr.mxu0 0.0
    %859 = vmatpush2.xpose.msra.mxu0 0.0
    %860 = vmatprep.subr.mxu0 0.0
    %861 = vmatpush2.xpose.msra.mxu0 0.0
    %862 = vmatprep.subr.mxu0 0.0
    %863 = vmatpush2.xpose.msra.mxu0 0.0
    %864 = vmatprep.subr.mxu0 0.0
    %865 = vmatpush2.xpose.msra.mxu0 0.0
    %866 = vmatprep.subr.mxu0 0.0
    %867 = vmatpush2.xpose.msra.mxu0 0.0
    %868 = vmatprep.subr.mxu0 0.0
    %869 = vmatpush2.xpose.msra.mxu0 0.0
    %870 = vmatprep.subr.mxu0 0.0
    %871 = vmatpush2.xpose.msra.mxu0 0.0
    %872 = vmatprep.subr.mxu0 0.0
    %873 = vmatpush2.xpose.msra.mxu0 0.0
    %874 = vmatprep.subr.mxu0 0.0
    %875 = vmatpush2.xpose.msra.mxu0 0.0
    %876 = vmatprep.subr.mxu0 0.0
    %877 = vmatpush2.xpose.msra.mxu0 0.0
    %878 = vmatprep.subr.mxu0 0.0
    %879 = vmatpush2.xpose.msra.mxu0 0.0
    %880 = vmatprep.subr.mxu0 0.0
    %881 = vmatpush2.xpose.msra.mxu0 0.0
    %882 = vmatprep.mubr.f32.mxu0 0.0
    %883 = vmatmul.mubr.f32.gmra.mxu0 %v802
    %v884 = vpop.f32.mrf.mxu0
    %v885 = vadd.f32 0.0, %v884
    %v886 = vpop.f32.mrf.mxu0
    %887 = vmatprep.mubr.f32.mxu0 0.0
    %888 = vmatmul.mubr.f32.gmra.mxu0 %v804
    %v889 = vpop.f32.mrf.mxu0
    %v890 = vadd.f32 0.0, %v889
    %v891 = vpop.f32.mrf.mxu0
    %892 = vmatprep.mubr.f32.mxu0 0.0
    %893 = vmatmul.mubr.f32.gmra.mxu0 %v806
    %v894 = vpop.f32.mrf.mxu0
    %v895 = vadd.f32 0.0, %v894
    %v896 = vpop.f32.mrf.mxu0
    %897 = vmatprep.mubr.f32.mxu0 0.0
    %898 = vmatmul.mubr.f32.gmra.mxu0 %v808
    %v899 = vpop.f32.mrf.mxu0
    %v900 = vadd.f32 0.0, %v899
    %v901 = vpop.f32.mrf.mxu0
    %902 = vdwg.mxu0
    %903 = vrot.lane.b32.xlu0 %v312, 64
    %v904 = vpop.permute.xlu0 %903
    %905 = vrot.lane.b32.xlu0 %v316, 64
    %v906 = vpop.permute.xlu0 %905
    %907 = vrot.lane.b32.xlu0 %v322, 64
    %v908 = vpop.permute.xlu0 %907
    %909 = vrot.lane.b32.xlu0 %v326, 64
    %v910 = vpop.permute.xlu0 %909
    %v911 = vsel %vm474, %v312, 0
    %v913 = vsel %vm474, %v316, 0
    %v915 = vsel %vm474, %v322, 0
    %v917 = vsel %vm474, %v326, 0
    %v919 = vsel %vm474, %v904, 0
    %v921 = vsel %vm474, %v906, 0
    %v923 = vsel %vm474, %v908, 0
    %v925 = vsel %vm474, %v910, 0
    %927 = vmatprep.subr.mxu0 0.0
    %928 = vmatpush1.xpose.msra.mxu0 0.0
    %929 = vmatprep.subr.mxu0 0.0
    %930 = vmatpush1.xpose.msra.mxu0 0.0
    %931 = vmatprep.subr.mxu0 0.0
    %932 = vmatpush1.xpose.msra.mxu0 0.0
    %933 = vmatprep.subr.mxu0 0.0
    %934 = vmatpush1.xpose.msra.mxu0 0.0
    %935 = vmatprep.subr.mxu0 0.0
    %936 = vmatpush1.xpose.msra.mxu0 0.0
    %937 = vmatprep.subr.mxu0 0.0
    %938 = vmatpush1.xpose.msra.mxu0 0.0
    %939 = vmatprep.subr.mxu0 0.0
    %940 = vmatpush1.xpose.msra.mxu0 0.0
    %941 = vmatprep.subr.mxu0 0.0
    %942 = vmatpush1.xpose.msra.mxu0 0.0
    %943 = vmatprep.subr.mxu0 0.0
    %944 = vmatpush1.xpose.msra.mxu0 0.0
    %945 = vmatprep.subr.mxu0 0.0
    %946 = vmatpush1.xpose.msra.mxu0 0.0
    %947 = vmatprep.subr.mxu0 0.0
    %948 = vmatpush1.xpose.msra.mxu0 0.0
    %949 = vmatprep.subr.mxu0 0.0
    %950 = vmatpush1.xpose.msra.mxu0 0.0
    %951 = vmatprep.subr.mxu0 0.0
    %952 = vmatpush1.xpose.msra.mxu0 %v925
    %953 = vmatprep.subr.mxu0 0.0
    %954 = vmatpush1.xpose.msra.mxu0 %v923
    %955 = vmatprep.subr.mxu0 0.0
    %956 = vmatpush1.xpose.msra.mxu0 %v921
    %957 = vmatprep.subr.mxu0 0.0
    %958 = vmatpush1.xpose.msra.mxu0 %v919
    %959 = vmatprep.subr.mxu0 0.0
    %960 = vmatpush2.xpose.msra.mxu0 0.0
    %961 = vmatprep.subr.mxu0 0.0
    %962 = vmatpush2.xpose.msra.mxu0 0.0
    %963 = vmatprep.subr.mxu0 0.0
    %964 = vmatpush2.xpose.msra.mxu0 0.0
    %965 = vmatprep.subr.mxu0 0.0
    %966 = vmatpush2.xpose.msra.mxu0 0.0
    %967 = vmatprep.subr.mxu0 0.0
    %968 = vmatpush2.xpose.msra.mxu0 0.0
    %969 = vmatprep.subr.mxu0 0.0
    %970 = vmatpush2.xpose.msra.mxu0 0.0
    %971 = vmatprep.subr.mxu0 0.0
    %972 = vmatpush2.xpose.msra.mxu0 0.0
    %973 = vmatprep.subr.mxu0 0.0
    %974 = vmatpush2.xpose.msra.mxu0 0.0
    %975 = vmatprep.subr.mxu0 0.0
    %976 = vmatpush2.xpose.msra.mxu0 0.0
    %977 = vmatprep.subr.mxu0 0.0
    %978 = vmatpush2.xpose.msra.mxu0 0.0
    %979 = vmatprep.subr.mxu0 0.0
    %980 = vmatpush2.xpose.msra.mxu0 0.0
    %981 = vmatprep.subr.mxu0 0.0
    %982 = vmatpush2.xpose.msra.mxu0 0.0
    %983 = vmatprep.subr.mxu0 0.0
    %984 = vmatpush2.xpose.msra.mxu0 0.0
    %985 = vmatprep.subr.mxu0 0.0
    %986 = vmatpush2.xpose.msra.mxu0 0.0
    %987 = vmatprep.subr.mxu0 0.0
    %988 = vmatpush2.xpose.msra.mxu0 0.0
    %989 = vmatprep.subr.mxu0 0.0
    %990 = vmatpush2.xpose.msra.mxu0 0.0
    %991 = vmatprep.mubr.f32.mxu0 0.0
    %992 = vmatmul.mubr.f32.gmra.mxu0 %v911
    %v993 = vpop.f32.mrf.mxu0
    %v994 = vadd.f32 0.0, %v993
    %v995 = vpop.f32.mrf.mxu0
    %996 = vmatprep.mubr.f32.mxu0 0.0
    %997 = vmatmul.mubr.f32.gmra.mxu0 %v913
    %v998 = vpop.f32.mrf.mxu0
    %v999 = vadd.f32 0.0, %v998
    %v1000 = vpop.f32.mrf.mxu0
    %1001 = vmatprep.mubr.f32.mxu0 0.0
    %1002 = vmatmul.mubr.f32.gmra.mxu0 %v915
    %v1003 = vpop.f32.mrf.mxu0
    %v1004 = vadd.f32 0.0, %v1003
    %v1005 = vpop.f32.mrf.mxu0
    %1006 = vmatprep.mubr.f32.mxu0 0.0
    %1007 = vmatmul.mubr.f32.gmra.mxu0 %v917
    %v1008 = vpop.f32.mrf.mxu0
    %v1009 = vadd.f32 0.0, %v1008
    %v1010 = vpop.f32.mrf.mxu0
    %1011 = vdwg.mxu0
    %1012 = vrot.lane.b32.xlu0 %v363, 64
    %v1013 = vpop.permute.xlu0 %1012
    %1014 = vrot.lane.b32.xlu0 %v365, 64
    %v1015 = vpop.permute.xlu0 %1014
    %1016 = vrot.lane.b32.xlu0 %v367, 64
    %v1017 = vpop.permute.xlu0 %1016
    %1018 = vrot.lane.b32.xlu0 %v369, 64
    %v1019 = vpop.permute.xlu0 %1018
    %v1020 = vsel %vm474, %v363, 0
    %v1022 = vsel %vm474, %v365, 0
    %v1024 = vsel %vm474, %v367, 0
    %v1026 = vsel %vm474, %v369, 0
    %v1028 = vsel %vm474, %v1013, 0
    %v1030 = vsel %vm474, %v1015, 0
    %v1032 = vsel %vm474, %v1017, 0
    %v1034 = vsel %vm474, %v1019, 0
    %1036 = vmatprep.subr.mxu0 0.0
    %1037 = vmatpush1.xpose.msra.mxu0 0.0
    %1038 = vmatprep.subr.mxu0 0.0
    %1039 = vmatpush1.xpose.msra.mxu0 0.0
    %1040 = vmatprep.subr.mxu0 0.0
    %1041 = vmatpush1.xpose.msra.mxu0 0.0
    %1042 = vmatprep.subr.mxu0 0.0
    %1043 = vmatpush1.xpose.msra.mxu0 0.0
    %1044 = vmatprep.subr.mxu0 0.0
    %1045 = vmatpush1.xpose.msra.mxu0 0.0
    %1046 = vmatprep.subr.mxu0 0.0
    %1047 = vmatpush1.xpose.msra.mxu0 0.0
    %1048 = vmatprep.subr.mxu0 0.0
    %1049 = vmatpush1.xpose.msra.mxu0 0.0
    %1050 = vmatprep.subr.mxu0 0.0
    %1051 = vmatpush1.xpose.msra.mxu0 0.0
    %1052 = vmatprep.subr.mxu0 0.0
    %1053 = vmatpush1.xpose.msra.mxu0 0.0
    %1054 = vmatprep.subr.mxu0 0.0
    %1055 = vmatpush1.xpose.msra.mxu0 0.0
    %1056 = vmatprep.subr.mxu0 0.0
    %1057 = vmatpush1.xpose.msra.mxu0 0.0
    %1058 = vmatprep.subr.mxu0 0.0
    %1059 = vmatpush1.xpose.msra.mxu0 0.0
    %1060 = vmatprep.subr.mxu0 0.0
    %1061 = vmatpush1.xpose.msra.mxu0 %v1034
    %1062 = vmatprep.subr.mxu0 0.0
    %1063 = vmatpush1.xpose.msra.mxu0 %v1032
    %1064 = vmatprep.subr.mxu0 0.0
    %1065 = vmatpush1.xpose.msra.mxu0 %v1030
    %1066 = vmatprep.subr.mxu0 0.0
    %1067 = vmatpush1.xpose.msra.mxu0 %v1028
    %1068 = vmatprep.subr.mxu0 0.0
    %1069 = vmatpush2.xpose.msra.mxu0 0.0
    %1070 = vmatprep.subr.mxu0 0.0
    %1071 = vmatpush2.xpose.msra.mxu0 0.0
    %1072 = vmatprep.subr.mxu0 0.0
    %1073 = vmatpush2.xpose.msra.mxu0 0.0
    %1074 = vmatprep.subr.mxu0 0.0
    %1075 = vmatpush2.xpose.msra.mxu0 0.0
    %1076 = vmatprep.subr.mxu0 0.0
    %1077 = vmatpush2.xpose.msra.mxu0 0.0
    %1078 = vmatprep.subr.mxu0 0.0
    %1079 = vmatpush2.xpose.msra.mxu0 0.0
    %1080 = vmatprep.subr.mxu0 0.0
    %1081 = vmatpush2.xpose.msra.mxu0 0.0
    %1082 = vmatprep.subr.mxu0 0.0
    %1083 = vmatpush2.xpose.msra.mxu0 0.0
    %1084 = vmatprep.subr.mxu0 0.0
    %1085 = vmatpush2.xpose.msra.mxu0 0.0
    %1086 = vmatprep.subr.mxu0 0.0
    %1087 = vmatpush2.xpose.msra.mxu0 0.0
    %1088 = vmatprep.subr.mxu0 0.0
    %1089 = vmatpush2.xpose.msra.mxu0 0.0
    %1090 = vmatprep.subr.mxu0 0.0
    %1091 = vmatpush2.xpose.msra.mxu0 0.0
    %1092 = vmatprep.subr.mxu0 0.0
    %1093 = vmatpush2.xpose.msra.mxu0 0.0
    %1094 = vmatprep.subr.mxu0 0.0
    %1095 = vmatpush2.xpose.msra.mxu0 0.0
    %1096 = vmatprep.subr.mxu0 0.0
    %1097 = vmatpush2.xpose.msra.mxu0 0.0
    %1098 = vmatprep.subr.mxu0 0.0
    %1099 = vmatpush2.xpose.msra.mxu0 0.0
    %1100 = vmatprep.mubr.f32.mxu0 0.0
    %1101 = vmatmul.mubr.f32.gmra.mxu0 %v1020
    %v1102 = vpop.f32.mrf.mxu0
    %v1103 = vadd.f32 0.0, %v1102
    %v1104 = vpop.f32.mrf.mxu0
    %1105 = vmatprep.mubr.f32.mxu0 0.0
    %1106 = vmatmul.mubr.f32.gmra.mxu0 %v1022
    %v1107 = vpop.f32.mrf.mxu0
    %v1108 = vadd.f32 0.0, %v1107
    %v1109 = vpop.f32.mrf.mxu0
    %1110 = vmatprep.mubr.f32.mxu0 0.0
    %1111 = vmatmul.mubr.f32.gmra.mxu0 %v1024
    %v1112 = vpop.f32.mrf.mxu0
    %v1113 = vadd.f32 0.0, %v1112
    %v1114 = vpop.f32.mrf.mxu0
    %1115 = vmatprep.mubr.f32.mxu0 0.0
    %1116 = vmatmul.mubr.f32.gmra.mxu0 %v1026
    %v1117 = vpop.f32.mrf.mxu0
    %v1118 = vadd.f32 0.0, %v1117
    %v1119 = vpop.f32.mrf.mxu0
    %1120 = vdwg.mxu0
    %1121 = vrot.lane.b32.xlu0 %v371, 64
    %v1122 = vpop.permute.xlu0 %1121
    %1123 = vrot.lane.b32.xlu0 %v373, 64
    %v1124 = vpop.permute.xlu0 %1123
    %1125 = vrot.lane.b32.xlu0 %v375, 64
    %v1126 = vpop.permute.xlu0 %1125
    %1127 = vrot.lane.b32.xlu0 %v377, 64
    %v1128 = vpop.permute.xlu0 %1127
    %v1129 = vsel %vm474, %v371, 0
    %v1131 = vsel %vm474, %v373, 0
    %v1133 = vsel %vm474, %v375, 0
    %v1135 = vsel %vm474, %v377, 0
    %v1137 = vsel %vm474, %v1122, 0
    %v1139 = vsel %vm474, %v1124, 0
    %v1141 = vsel %vm474, %v1126, 0
    %v1143 = vsel %vm474, %v1128, 0
    %1145 = vmatprep.subr.mxu0 0.0
    %1146 = vmatpush1.xpose.msra.mxu0 0.0
    %1147 = vmatprep.subr.mxu0 0.0
    %1148 = vmatpush1.xpose.msra.mxu0 0.0
    %1149 = vmatprep.subr.mxu0 0.0
    %1150 = vmatpush1.xpose.msra.mxu0 0.0
    %1151 = vmatprep.subr.mxu0 0.0
    %1152 = vmatpush1.xpose.msra.mxu0 0.0
    %1153 = vmatprep.subr.mxu0 0.0
    %1154 = vmatpush1.xpose.msra.mxu0 0.0
    %1155 = vmatprep.subr.mxu0 0.0
    %1156 = vmatpush1.xpose.msra.mxu0 0.0
    %1157 = vmatprep.subr.mxu0 0.0
    %1158 = vmatpush1.xpose.msra.mxu0 0.0
    %1159 = vmatprep.subr.mxu0 0.0
    %1160 = vmatpush1.xpose.msra.mxu0 0.0
    %1161 = vmatprep.subr.mxu0 0.0
    %1162 = vmatpush1.xpose.msra.mxu0 0.0
    %1163 = vmatprep.subr.mxu0 0.0
    %1164 = vmatpush1.xpose.msra.mxu0 0.0
    %1165 = vmatprep.subr.mxu0 0.0
    %1166 = vmatpush1.xpose.msra.mxu0 0.0
    %1167 = vmatprep.subr.mxu0 0.0
    %1168 = vmatpush1.xpose.msra.mxu0 0.0
    %1169 = vmatprep.subr.mxu0 0.0
    %1170 = vmatpush1.xpose.msra.mxu0 %v1143
    %1171 = vmatprep.subr.mxu0 0.0
    %1172 = vmatpush1.xpose.msra.mxu0 %v1141
    %1173 = vmatprep.subr.mxu0 0.0
    %1174 = vmatpush1.xpose.msra.mxu0 %v1139
    %1175 = vmatprep.subr.mxu0 0.0
    %1176 = vmatpush1.xpose.msra.mxu0 %v1137
    %1177 = vmatprep.subr.mxu0 0.0
    %1178 = vmatpush2.xpose.msra.mxu0 0.0
    %1179 = vmatprep.subr.mxu0 0.0
    %1180 = vmatpush2.xpose.msra.mxu0 0.0
    %1181 = vmatprep.subr.mxu0 0.0
    %1182 = vmatpush2.xpose.msra.mxu0 0.0
    %1183 = vmatprep.subr.mxu0 0.0
    %1184 = vmatpush2.xpose.msra.mxu0 0.0
    %1185 = vmatprep.subr.mxu0 0.0
    %1186 = vmatpush2.xpose.msra.mxu0 0.0
    %1187 = vmatprep.subr.mxu0 0.0
    %1188 = vmatpush2.xpose.msra.mxu0 0.0
    %1189 = vmatprep.subr.mxu0 0.0
    %1190 = vmatpush2.xpose.msra.mxu0 0.0
    %1191 = vmatprep.subr.mxu0 0.0
    %1192 = vmatpush2.xpose.msra.mxu0 0.0
    %1193 = vmatprep.subr.mxu0 0.0
    %1194 = vmatpush2.xpose.msra.mxu0 0.0
    %1195 = vmatprep.subr.mxu0 0.0
    %1196 = vmatpush2.xpose.msra.mxu0 0.0
    %1197 = vmatprep.subr.mxu0 0.0
    %1198 = vmatpush2.xpose.msra.mxu0 0.0
    %1199 = vmatprep.subr.mxu0 0.0
    %1200 = vmatpush2.xpose.msra.mxu0 0.0
    %1201 = vmatprep.subr.mxu0 0.0
    %1202 = vmatpush2.xpose.msra.mxu0 0.0
    %1203 = vmatprep.subr.mxu0 0.0
    %1204 = vmatpush2.xpose.msra.mxu0 0.0
    %1205 = vmatprep.subr.mxu0 0.0
    %1206 = vmatpush2.xpose.msra.mxu0 0.0
    %1207 = vmatprep.subr.mxu0 0.0
    %1208 = vmatpush2.xpose.msra.mxu0 0.0
    %1209 = vmatprep.mubr.f32.mxu0 0.0
    %1210 = vmatmul.mubr.f32.gmra.mxu0 %v1129
    %v1211 = vpop.f32.mrf.mxu0
    %v1212 = vadd.f32 0.0, %v1211
    %v1213 = vpop.f32.mrf.mxu0
    %1214 = vmatprep.mubr.f32.mxu0 0.0
    %1215 = vmatmul.mubr.f32.gmra.mxu0 %v1131
    %v1216 = vpop.f32.mrf.mxu0
    %v1217 = vadd.f32 0.0, %v1216
    %v1218 = vpop.f32.mrf.mxu0
    %1219 = vmatprep.mubr.f32.mxu0 0.0
    %1220 = vmatmul.mubr.f32.gmra.mxu0 %v1133
    %v1221 = vpop.f32.mrf.mxu0
    %v1222 = vadd.f32 0.0, %v1221
    %v1223 = vpop.f32.mrf.mxu0
    %1224 = vmatprep.mubr.f32.mxu0 0.0
    %1225 = vmatmul.mubr.f32.gmra.mxu0 %v1135
    %v1226 = vpop.f32.mrf.mxu0
    %v1227 = vadd.f32 0.0, %v1226
    %v1228 = vpop.f32.mrf.mxu0
    %1229 = vdwg.mxu0
    %1230 = vrot.lane.b32.xlu0 %v379, 64
    %v1231 = vpop.permute.xlu0 %1230
    %1232 = vrot.lane.b32.xlu0 %v381, 64
    %v1233 = vpop.permute.xlu0 %1232
    %1234 = vrot.lane.b32.xlu0 %v383, 64
    %v1235 = vpop.permute.xlu0 %1234
    %1236 = vrot.lane.b32.xlu0 %v385, 64
    %v1237 = vpop.permute.xlu0 %1236
    %v1238 = vsel %vm474, %v379, 0
    %v1240 = vsel %vm474, %v381, 0
    %v1242 = vsel %vm474, %v383, 0
    %v1244 = vsel %vm474, %v385, 0
    %v1246 = vsel %vm474, %v1231, 0
    %v1248 = vsel %vm474, %v1233, 0
    %v1250 = vsel %vm474, %v1235, 0
    %v1252 = vsel %vm474, %v1237, 0
    %1254 = vmatprep.subr.mxu0 0.0
    %1255 = vmatpush1.xpose.msra.mxu0 0.0
    %1256 = vmatprep.subr.mxu0 0.0
    %1257 = vmatpush1.xpose.msra.mxu0 0.0
    %1258 = vmatprep.subr.mxu0 0.0
    %1259 = vmatpush1.xpose.msra.mxu0 0.0
    %1260 = vmatprep.subr.mxu0 0.0
    %1261 = vmatpush1.xpose.msra.mxu0 0.0
    %1262 = vmatprep.subr.mxu0 0.0
    %1263 = vmatpush1.xpose.msra.mxu0 0.0
    %1264 = vmatprep.subr.mxu0 0.0
    %1265 = vmatpush1.xpose.msra.mxu0 0.0
    %1266 = vmatprep.subr.mxu0 0.0
    %1267 = vmatpush1.xpose.msra.mxu0 0.0
    %1268 = vmatprep.subr.mxu0 0.0
    %1269 = vmatpush1.xpose.msra.mxu0 0.0
    %1270 = vmatprep.subr.mxu0 0.0
    %1271 = vmatpush1.xpose.msra.mxu0 0.0
    %1272 = vmatprep.subr.mxu0 0.0
    %1273 = vmatpush1.xpose.msra.mxu0 0.0
    %1274 = vmatprep.subr.mxu0 0.0
    %1275 = vmatpush1.xpose.msra.mxu0 0.0
    %1276 = vmatprep.subr.mxu0 0.0
    %1277 = vmatpush1.xpose.msra.mxu0 0.0
    %1278 = vmatprep.subr.mxu0 0.0
    %1279 = vmatpush1.xpose.msra.mxu0 %v1252
    %1280 = vmatprep.subr.mxu0 0.0
    %1281 = vmatpush1.xpose.msra.mxu0 %v1250
    %1282 = vmatprep.subr.mxu0 0.0
    %1283 = vmatpush1.xpose.msra.mxu0 %v1248
    %1284 = vmatprep.subr.mxu0 0.0
    %1285 = vmatpush1.xpose.msra.mxu0 %v1246
    %1286 = vmatprep.subr.mxu0 0.0
    %1287 = vmatpush2.xpose.msra.mxu0 0.0
    %1288 = vmatprep.subr.mxu0 0.0
    %1289 = vmatpush2.xpose.msra.mxu0 0.0
    %1290 = vmatprep.subr.mxu0 0.0
    %1291 = vmatpush2.xpose.msra.mxu0 0.0
    %1292 = vmatprep.subr.mxu0 0.0
    %1293 = vmatpush2.xpose.msra.mxu0 0.0
    %1294 = vmatprep.subr.mxu0 0.0
    %1295 = vmatpush2.xpose.msra.mxu0 0.0
    %1296 = vmatprep.subr.mxu0 0.0
    %1297 = vmatpush2.xpose.msra.mxu0 0.0
    %1298 = vmatprep.subr.mxu0 0.0
    %1299 = vmatpush2.xpose.msra.mxu0 0.0
    %1300 = vmatprep.subr.mxu0 0.0
    %1301 = vmatpush2.xpose.msra.mxu0 0.0
    %1302 = vmatprep.subr.mxu0 0.0
    %1303 = vmatpush2.xpose.msra.mxu0 0.0
    %1304 = vmatprep.subr.mxu0 0.0
    %1305 = vmatpush2.xpose.msra.mxu0 0.0
    %1306 = vmatprep.subr.mxu0 0.0
    %1307 = vmatpush2.xpose.msra.mxu0 0.0
    %1308 = vmatprep.subr.mxu0 0.0
    %1309 = vmatpush2.xpose.msra.mxu0 0.0
    %1310 = vmatprep.subr.mxu0 0.0
    %1311 = vmatpush2.xpose.msra.mxu0 0.0
    %1312 = vmatprep.subr.mxu0 0.0
    %1313 = vmatpush2.xpose.msra.mxu0 0.0
    %1314 = vmatprep.subr.mxu0 0.0
    %1315 = vmatpush2.xpose.msra.mxu0 0.0
    %1316 = vmatprep.subr.mxu0 0.0
    %1317 = vmatpush2.xpose.msra.mxu0 0.0
    %1318 = vmatprep.mubr.f32.mxu0 0.0
    %1319 = vmatmul.mubr.f32.gmra.mxu0 %v1238
    %v1320 = vpop.f32.mrf.mxu0
    %v1321 = vadd.f32 0.0, %v1320
    %v1322 = vpop.f32.mrf.mxu0
    %1323 = vmatprep.mubr.f32.mxu0 0.0
    %1324 = vmatmul.mubr.f32.gmra.mxu0 %v1240
    %v1325 = vpop.f32.mrf.mxu0
    %v1326 = vadd.f32 0.0, %v1325
    %v1327 = vpop.f32.mrf.mxu0
    %1328 = vmatprep.mubr.f32.mxu0 0.0
    %1329 = vmatmul.mubr.f32.gmra.mxu0 %v1242
    %v1330 = vpop.f32.mrf.mxu0
    %v1331 = vadd.f32 0.0, %v1330
    %v1332 = vpop.f32.mrf.mxu0
    %1333 = vmatprep.mubr.f32.mxu0 0.0
    %1334 = vmatmul.mubr.f32.gmra.mxu0 %v1244
    %v1335 = vpop.f32.mrf.mxu0
    %v1336 = vadd.f32 0.0, %v1335
    %v1337 = vpop.f32.mrf.mxu0
    %1338 = vdwg.mxu0
    %v1339 = vlaneseq
    %v1340 = vshrl.u32 %v1339, 7
    %v1341 = vadd.s32 %v1340, 8
    %v1342 = vadd.s32 %v1340, 16
    %v1343 = vadd.s32 %v1340, 24
    %v1344 = vlaneseq
    %v1345 = vand.u32 %v1344, 127
    %vm1346 = vcmp.ge.s32.totalorder %v1340, %v1345
    %vm1347 = vcmp.ge.s32.totalorder %v1341, %v1345
    %vm1348 = vcmp.ge.s32.totalorder %v1342, %v1345
    %vm1349 = vcmp.ge.s32.totalorder %v1343, %v1345
    %v1350 = vsel %vm1346, 1, 0
    %v1351 = vsel %vm1347, 1, 0
    %v1352 = vsel %vm1348, 1, 0
    %v1353 = vsel %vm1349, 1, 0
    %vm1354 = vcmp.eq.s32.totalorder %v1350, 1
    %vm1355 = vcmp.eq.s32.totalorder %v1351, 1
    %vm1356 = vcmp.eq.s32.totalorder %v1352, 1
    %vm1357 = vcmp.eq.s32.totalorder %v1353, 1
    %v1358 = vsel %vm1354, %v558, -1e+30
    %v1359 = vsel %vm1355, %v563, -1e+30
    %v1360 = vsel %vm1356, %v568, -1e+30
    %v1361 = vsel %vm1357, %v573, -1e+30
    %v1362 = vsel %vm1354, %v667, -1e+30
    %v1363 = vsel %vm1355, %v672, -1e+30
    %v1364 = vsel %vm1356, %v677, -1e+30
    %v1365 = vsel %vm1357, %v682, -1e+30
    %v1366 = vsel %vm1354, %v776, -1e+30
    %v1367 = vsel %vm1355, %v781, -1e+30
    %v1368 = vsel %vm1356, %v786, -1e+30
    %v1369 = vsel %vm1357, %v791, -1e+30
    %v1370 = vsel %vm1354, %v885, -1e+30
    %v1371 = vsel %vm1355, %v890, -1e+30
    %v1372 = vsel %vm1356, %v895, -1e+30
    %v1373 = vsel %vm1357, %v900, -1e+30
    %v1374 = vsel %vm1354, %v994, -1e+30
    %v1375 = vsel %vm1355, %v999, -1e+30
    %v1376 = vsel %vm1356, %v1004, -1e+30
    %v1377 = vsel %vm1357, %v1009, -1e+30
    %v1378 = vsel %vm1354, %v1103, -1e+30
    %v1379 = vsel %vm1355, %v1108, -1e+30
    %v1380 = vsel %vm1356, %v1113, -1e+30
    %v1381 = vsel %vm1357, %v1118, -1e+30
    %v1382 = vsel %vm1354, %v1212, -1e+30
    %v1383 = vsel %vm1355, %v1217, -1e+30
    %v1384 = vsel %vm1356, %v1222, -1e+30
    %v1385 = vsel %vm1357, %v1227, -1e+30
    %v1386 = vsel %vm1354, %v1321, -1e+30
    %v1387 = vsel %vm1355, %v1326, -1e+30
    %v1388 = vsel %vm1356, %v1331, -1e+30
    %v1389 = vsel %vm1357, %v1336, -1e+30
    %vm1390 = vcmask 261120
    %v1391 = vsel %vm1390, %v1358, -inf
    %1392 = vmax.xlane.f32.xlu0 %v1391
    %v1393 = vpop.xlane.xlu0 %1392
    %v1394 = vsel %vm1390, %v1359, -inf
    %1395 = vmax.xlane.f32.xlu0 %v1394
    %v1396 = vpop.xlane.xlu0 %1395
    %v1397 = vsel %vm1390, %v1360, -inf
    %1398 = vmax.xlane.f32.xlu0 %v1397
    %v1399 = vpop.xlane.xlu0 %1398
    %v1400 = vsel %vm1390, %v1361, -inf
    %1401 = vmax.xlane.f32.xlu0 %v1400
    %v1402 = vpop.xlane.xlu0 %1401
    %v1403 = vsel %vm1390, %v1362, -inf
    %1404 = vmax.xlane.f32.xlu0 %v1403
    %v1405 = vpop.xlane.xlu0 %1404
    %v1406 = vsel %vm1390, %v1363, -inf
    %1407 = vmax.xlane.f32.xlu0 %v1406
    %v1408 = vpop.xlane.xlu0 %1407
    %v1409 = vsel %vm1390, %v1364, -inf
    %1410 = vmax.xlane.f32.xlu0 %v1409
    %v1411 = vpop.xlane.xlu0 %1410
    %v1412 = vsel %vm1390, %v1365, -inf
    %1413 = vmax.xlane.f32.xlu0 %v1412
    %v1414 = vpop.xlane.xlu0 %1413
    %v1415 = vsel %vm1390, %v1366, -inf
    %1416 = vmax.xlane.f32.xlu0 %v1415
    %v1417 = vpop.xlane.xlu0 %1416
    %v1418 = vsel %vm1390, %v1367, -inf
    %1419 = vmax.xlane.f32.xlu0 %v1418
    %v1420 = vpop.xlane.xlu0 %1419
    %v1421 = vsel %vm1390, %v1368, -inf
    %1422 = vmax.xlane.f32.xlu0 %v1421
    %v1423 = vpop.xlane.xlu0 %1422
    %v1424 = vsel %vm1390, %v1369, -inf
    %1425 = vmax.xlane.f32.xlu0 %v1424
    %v1426 = vpop.xlane.xlu0 %1425
    %v1427 = vsel %vm1390, %v1370, -inf
    %1428 = vmax.xlane.f32.xlu0 %v1427
    %v1429 = vpop.xlane.xlu0 %1428
    %v1430 = vsel %vm1390, %v1371, -inf
    %1431 = vmax.xlane.f32.xlu0 %v1430
    %v1432 = vpop.xlane.xlu0 %1431
    %v1433 = vsel %vm1390, %v1372, -inf
    %1434 = vmax.xlane.f32.xlu0 %v1433
    %v1435 = vpop.xlane.xlu0 %1434
    %v1436 = vsel %vm1390, %v1373, -inf
    %1437 = vmax.xlane.f32.xlu0 %v1436
    %v1438 = vpop.xlane.xlu0 %1437
    %v1439 = vsel %vm1390, %v1374, -inf
    %1440 = vmax.xlane.f32.xlu0 %v1439
    %v1441 = vpop.xlane.xlu0 %1440
    %v1442 = vsel %vm1390, %v1375, -inf
    %1443 = vmax.xlane.f32.xlu0 %v1442
    %v1444 = vpop.xlane.xlu0 %1443
    %v1445 = vsel %vm1390, %v1376, -inf
    %1446 = vmax.xlane.f32.xlu0 %v1445
    %v1447 = vpop.xlane.xlu0 %1446
    %v1448 = vsel %vm1390, %v1377, -inf
    %1449 = vmax.xlane.f32.xlu0 %v1448
    %v1450 = vpop.xlane.xlu0 %1449
    %v1451 = vsel %vm1390, %v1378, -inf
    %1452 = vmax.xlane.f32.xlu0 %v1451
    %v1453 = vpop.xlane.xlu0 %1452
    %v1454 = vsel %vm1390, %v1379, -inf
    %1455 = vmax.xlane.f32.xlu0 %v1454
    %v1456 = vpop.xlane.xlu0 %1455
    %v1457 = vsel %vm1390, %v1380, -inf
    %1458 = vmax.xlane.f32.xlu0 %v1457
    %v1459 = vpop.xlane.xlu0 %1458
    %v1460 = vsel %vm1390, %v1381, -inf
    %1461 = vmax.xlane.f32.xlu0 %v1460
    %v1462 = vpop.xlane.xlu0 %1461
    %v1463 = vsel %vm1390, %v1382, -inf
    %1464 = vmax.xlane.f32.xlu0 %v1463
    %v1465 = vpop.xlane.xlu0 %1464
    %v1466 = vsel %vm1390, %v1383, -inf
    %1467 = vmax.xlane.f32.xlu0 %v1466
    %v1468 = vpop.xlane.xlu0 %1467
    %v1469 = vsel %vm1390, %v1384, -inf
    %1470 = vmax.xlane.f32.xlu0 %v1469
    %v1471 = vpop.xlane.xlu0 %1470
    %v1472 = vsel %vm1390, %v1385, -inf
    %1473 = vmax.xlane.f32.xlu0 %v1472
    %v1474 = vpop.xlane.xlu0 %1473
    %v1475 = vsel %vm1390, %v1386, -inf
    %1476 = vmax.xlane.f32.xlu0 %v1475
    %v1477 = vpop.xlane.xlu0 %1476
    %v1478 = vsel %vm1390, %v1387, -inf
    %1479 = vmax.xlane.f32.xlu0 %v1478
    %v1480 = vpop.xlane.xlu0 %1479
    %v1481 = vsel %vm1390, %v1388, -inf
    %1482 = vmax.xlane.f32.xlu0 %v1481
    %v1483 = vpop.xlane.xlu0 %1482
    %v1484 = vsel %vm1390, %v1389, -inf
    %1485 = vmax.xlane.f32.xlu0 %v1484
    %v1486 = vpop.xlane.xlu0 %1485
    %v1487 = vsub.f32 %v1358, %v1393
    %v1488 = vsub.f32 %v1359, %v1396
    %v1489 = vsub.f32 %v1360, %v1399
    %v1490 = vsub.f32 %v1361, %v1402
    %v1491 = vsub.f32 %v1362, %v1405
    %v1492 = vsub.f32 %v1363, %v1408
    %v1493 = vsub.f32 %v1364, %v1411
    %v1494 = vsub.f32 %v1365, %v1414
    %v1495 = vsub.f32 %v1366, %v1417
    %v1496 = vsub.f32 %v1367, %v1420
    %v1497 = vsub.f32 %v1368, %v1423
    %v1498 = vsub.f32 %v1369, %v1426
    %v1499 = vsub.f32 %v1370, %v1429
    %v1500 = vsub.f32 %v1371, %v1432
    %v1501 = vsub.f32 %v1372, %v1435
    %v1502 = vsub.f32 %v1373, %v1438
    %v1503 = vsub.f32 %v1374, %v1441
    %v1504 = vsub.f32 %v1375, %v1444
    %v1505 = vsub.f32 %v1376, %v1447
    %v1506 = vsub.f32 %v1377, %v1450
    %v1507 = vsub.f32 %v1378, %v1453
    %v1508 = vsub.f32 %v1379, %v1456
    %v1509 = vsub.f32 %v1380, %v1459
    %v1510 = vsub.f32 %v1381, %v1462
    %v1511 = vsub.f32 %v1382, %v1465
    %v1512 = vsub.f32 %v1383, %v1468
    %v1513 = vsub.f32 %v1384, %v1471
    %v1514 = vsub.f32 %v1385, %v1474
    %v1515 = vsub.f32 %v1386, %v1477
    %v1516 = vsub.f32 %v1387, %v1480
    %v1517 = vsub.f32 %v1388, %v1483
    %v1518 = vsub.f32 %v1389, %v1486
    %v1519 = vmul.f32 %v1487, 1.442695
    %v1520 = vpow.pop %v1519
    %v1521 = vmul.f32 %v1488, 1.442695
    %v1522 = vpow.pop %v1521
    %v1523 = vmul.f32 %v1489, 1.442695
    %v1524 = vpow.pop %v1523
    %v1525 = vmul.f32 %v1490, 1.442695
    %v1526 = vpow.pop %v1525
    %v1527 = vmul.f32 %v1491, 1.442695
    %v1528 = vpow.pop %v1527
    %v1529 = vmul.f32 %v1492, 1.442695
    %v1530 = vpow.pop %v1529
    %v1531 = vmul.f32 %v1493, 1.442695
    %v1532 = vpow.pop %v1531
    %v1533 = vmul.f32 %v1494, 1.442695
    %v1534 = vpow.pop %v1533
    %v1535 = vmul.f32 %v1495, 1.442695
    %v1536 = vpow.pop %v1535
    %v1537 = vmul.f32 %v1496, 1.442695
    %v1538 = vpow.pop %v1537
    %v1539 = vmul.f32 %v1497, 1.442695
    %v1540 = vpow.pop %v1539
    %v1541 = vmul.f32 %v1498, 1.442695
    %v1542 = vpow.pop %v1541
    %v1543 = vmul.f32 %v1499, 1.442695
    %v1544 = vpow.pop %v1543
    %v1545 = vmul.f32 %v1500, 1.442695
    %v1546 = vpow.pop %v1545
    %v1547 = vmul.f32 %v1501, 1.442695
    %v1548 = vpow.pop %v1547
    %v1549 = vmul.f32 %v1502, 1.442695
    %v1550 = vpow.pop %v1549
    %v1551 = vmul.f32 %v1503, 1.442695
    %v1552 = vpow.pop %v1551
    %v1553 = vmul.f32 %v1504, 1.442695
    %v1554 = vpow.pop %v1553
    %v1555 = vmul.f32 %v1505, 1.442695
    %v1556 = vpow.pop %v1555
    %v1557 = vmul.f32 %v1506, 1.442695
    %v1558 = vpow.pop %v1557
    %v1559 = vmul.f32 %v1507, 1.442695
    %v1560 = vpow.pop %v1559
    %v1561 = vmul.f32 %v1508, 1.442695
    %v1562 = vpow.pop %v1561
    %v1563 = vmul.f32 %v1509, 1.442695
    %v1564 = vpow.pop %v1563
    %v1565 = vmul.f32 %v1510, 1.442695
    %v1566 = vpow.pop %v1565
    %v1567 = vmul.f32 %v1511, 1.442695
    %v1568 = vpow.pop %v1567
    %v1569 = vmul.f32 %v1512, 1.442695
    %v1570 = vpow.pop %v1569
    %v1571 = vmul.f32 %v1513, 1.442695
    %v1572 = vpow.pop %v1571
    %v1573 = vmul.f32 %v1514, 1.442695
    %v1574 = vpow.pop %v1573
    %v1575 = vmul.f32 %v1515, 1.442695
    %v1576 = vpow.pop %v1575
    %v1577 = vmul.f32 %v1516, 1.442695
    %v1578 = vpow.pop %v1577
    %v1579 = vmul.f32 %v1517, 1.442695
    %v1580 = vpow.pop %v1579
    %v1581 = vmul.f32 %v1518, 1.442695
    %v1582 = vpow.pop %v1581
    %v1583 = vsel %vm1390, %v1520, 0.0
    %1584 = vadd.xlane.f32.xlu0 %v1583
    %v1585 = vpop.xlane.xlu0 %1584
    %v1586 = vsel %vm1390, %v1522, 0.0
    %1587 = vadd.xlane.f32.xlu0 %v1586
    %v1588 = vpop.xlane.xlu0 %1587
    %v1589 = vsel %vm1390, %v1524, 0.0
    %1590 = vadd.xlane.f32.xlu0 %v1589
    %v1591 = vpop.xlane.xlu0 %1590
    %v1592 = vsel %vm1390, %v1526, 0.0
    %1593 = vadd.xlane.f32.xlu0 %v1592
    %v1594 = vpop.xlane.xlu0 %1593
    %v1595 = vsel %vm1390, %v1528, 0.0
    %1596 = vadd.xlane.f32.xlu0 %v1595
    %v1597 = vpop.xlane.xlu0 %1596
    %v1598 = vsel %vm1390, %v1530, 0.0
    %1599 = vadd.xlane.f32.xlu0 %v1598
    %v1600 = vpop.xlane.xlu0 %1599
    %v1601 = vsel %vm1390, %v1532, 0.0
    %1602 = vadd.xlane.f32.xlu0 %v1601
    %v1603 = vpop.xlane.xlu0 %1602
    %v1604 = vsel %vm1390, %v1534, 0.0
    %1605 = vadd.xlane.f32.xlu0 %v1604
    %v1606 = vpop.xlane.xlu0 %1605
    %v1607 = vsel %vm1390, %v1536, 0.0
    %1608 = vadd.xlane.f32.xlu0 %v1607
    %v1609 = vpop.xlane.xlu0 %1608
    %v1610 = vsel %vm1390, %v1538, 0.0
    %1611 = vadd.xlane.f32.xlu0 %v1610
    %v1612 = vpop.xlane.xlu0 %1611
    %v1613 = vsel %vm1390, %v1540, 0.0
    %1614 = vadd.xlane.f32.xlu0 %v1613
    %v1615 = vpop.xlane.xlu0 %1614
    %v1616 = vsel %vm1390, %v1542, 0.0
    %1617 = vadd.xlane.f32.xlu0 %v1616
    %v1618 = vpop.xlane.xlu0 %1617
    %v1619 = vsel %vm1390, %v1544, 0.0
    %1620 = vadd.xlane.f32.xlu0 %v1619
    %v1621 = vpop.xlane.xlu0 %1620
    %v1622 = vsel %vm1390, %v1546, 0.0
    %1623 = vadd.xlane.f32.xlu0 %v1622
    %v1624 = vpop.xlane.xlu0 %1623
    %v1625 = vsel %vm1390, %v1548, 0.0
    %1626 = vadd.xlane.f32.xlu0 %v1625
    %v1627 = vpop.xlane.xlu0 %1626
    %v1628 = vsel %vm1390, %v1550, 0.0
    %1629 = vadd.xlane.f32.xlu0 %v1628
    %v1630 = vpop.xlane.xlu0 %1629
    %v1631 = vsel %vm1390, %v1552, 0.0
    %1632 = vadd.xlane.f32.xlu0 %v1631
    %v1633 = vpop.xlane.xlu0 %1632
    %v1634 = vsel %vm1390, %v1554, 0.0
    %1635 = vadd.xlane.f32.xlu0 %v1634
    %v1636 = vpop.xlane.xlu0 %1635
    %v1637 = vsel %vm1390, %v1556, 0.0
    %1638 = vadd.xlane.f32.xlu0 %v1637
    %v1639 = vpop.xlane.xlu0 %1638
    %v1640 = vsel %vm1390, %v1558, 0.0
    %1641 = vadd.xlane.f32.xlu0 %v1640
    %v1642 = vpop.xlane.xlu0 %1641
    %v1643 = vsel %vm1390, %v1560, 0.0
    %1644 = vadd.xlane.f32.xlu0 %v1643
    %v1645 = vpop.xlane.xlu0 %1644
    %v1646 = vsel %vm1390, %v1562, 0.0
    %1647 = vadd.xlane.f32.xlu0 %v1646
    %v1648 = vpop.xlane.xlu0 %1647
    %v1649 = vsel %vm1390, %v1564, 0.0
    %1650 = vadd.xlane.f32.xlu0 %v1649
    %v1651 = vpop.xlane.xlu0 %1650
    %v1652 = vsel %vm1390, %v1566, 0.0
    %1653 = vadd.xlane.f32.xlu0 %v1652
    %v1654 = vpop.xlane.xlu0 %1653
    %v1655 = vsel %vm1390, %v1568, 0.0
    %1656 = vadd.xlane.f32.xlu0 %v1655
    %v1657 = vpop.xlane.xlu0 %1656
    %v1658 = vsel %vm1390, %v1570, 0.0
    %1659 = vadd.xlane.f32.xlu0 %v1658
    %v1660 = vpop.xlane.xlu0 %1659
    %v1661 = vsel %vm1390, %v1572, 0.0
    %1662 = vadd.xlane.f32.xlu0 %v1661
    %v1663 = vpop.xlane.xlu0 %1662
    %v1664 = vsel %vm1390, %v1574, 0.0
    %1665 = vadd.xlane.f32.xlu0 %v1664
    %v1666 = vpop.xlane.xlu0 %1665
    %v1667 = vsel %vm1390, %v1576, 0.0
    %1668 = vadd.xlane.f32.xlu0 %v1667
    %v1669 = vpop.xlane.xlu0 %1668
    %v1670 = vsel %vm1390, %v1578, 0.0
    %1671 = vadd.xlane.f32.xlu0 %v1670
    %v1672 = vpop.xlane.xlu0 %1671
    %v1673 = vsel %vm1390, %v1580, 0.0
    %1674 = vadd.xlane.f32.xlu0 %v1673
    %v1675 = vpop.xlane.xlu0 %1674
    %v1676 = vsel %vm1390, %v1582, 0.0
    %1677 = vadd.xlane.f32.xlu0 %v1676
    %v1678 = vpop.xlane.xlu0 %1677
    %v1680 = vsel %vm1390, %v1520, 0
    %v1683 = vsel %vm1390, %v1522, 0
    %v1686 = vsel %vm1390, %v1524, 0
    %v1689 = vsel %vm1390, %v1526, 0
    %1691 = vmatprep.subr.mxu0 0.0
    %1692 = vmatpush1.msra.mxu0 0.0
    %1693 = vmatprep.subr.mxu0 0.0
    %1694 = vmatpush1.msra.mxu0 0.0
    %1695 = vmatprep.subr.mxu0 0.0
    %1696 = vmatpush1.msra.mxu0 0.0
    %1697 = vmatprep.subr.mxu0 0.0
    %1698 = vmatpush1.msra.mxu0 0.0
    %1699 = vmatprep.subr.mxu0 0.0
    %1700 = vmatpush1.msra.mxu0 0.0
    %1701 = vmatprep.subr.mxu0 0.0
    %1702 = vmatpush1.msra.mxu0 0.0
    %1703 = vmatprep.subr.mxu0 0.0
    %1704 = vmatpush1.msra.mxu0 0.0
    %1705 = vmatprep.subr.mxu0 0.0
    %1706 = vmatpush1.msra.mxu0 0.0
    %1707 = vmatprep.subr.mxu0 0.0
    %1708 = vmatpush1.msra.mxu0 0.0
    %1709 = vmatprep.subr.mxu0 0.0
    %1710 = vmatpush1.msra.mxu0 0.0
    %1711 = vmatprep.subr.mxu0 0.0
    %1712 = vmatpush1.msra.mxu0 0.0
    %1713 = vmatprep.subr.mxu0 0.0
    %1714 = vmatpush1.msra.mxu0 0.0
    %1715 = vmatprep.subr.mxu0 0.0
    %1716 = vmatpush1.msra.mxu0 %v308
    %1717 = vmatprep.subr.mxu0 0.0
    %1718 = vmatpush1.msra.mxu0 %v304
    %1719 = vmatprep.subr.mxu0 0.0
    %1720 = vmatpush1.msra.mxu0 %v298
    %1721 = vmatprep.subr.mxu0 0.0
    %1722 = vmatpush1.msra.mxu0 %v294
    %1723 = vmatprep.subr.mxu0 0.0
    %1724 = vmatpush2.msra.mxu0 0.0
    %1725 = vmatprep.subr.mxu0 0.0
    %1726 = vmatpush2.msra.mxu0 0.0
    %1727 = vmatprep.subr.mxu0 0.0
    %1728 = vmatpush2.msra.mxu0 0.0
    %1729 = vmatprep.subr.mxu0 0.0
    %1730 = vmatpush2.msra.mxu0 0.0
    %1731 = vmatprep.subr.mxu0 0.0
    %1732 = vmatpush2.msra.mxu0 0.0
    %1733 = vmatprep.subr.mxu0 0.0
    %1734 = vmatpush2.msra.mxu0 0.0
    %1735 = vmatprep.subr.mxu0 0.0
    %1736 = vmatpush2.msra.mxu0 0.0
    %1737 = vmatprep.subr.mxu0 0.0
    %1738 = vmatpush2.msra.mxu0 0.0
    %1739 = vmatprep.subr.mxu0 0.0
    %1740 = vmatpush2.msra.mxu0 0.0
    %1741 = vmatprep.subr.mxu0 0.0
    %1742 = vmatpush2.msra.mxu0 0.0
    %1743 = vmatprep.subr.mxu0 0.0
    %1744 = vmatpush2.msra.mxu0 0.0
    %1745 = vmatprep.subr.mxu0 0.0
    %1746 = vmatpush2.msra.mxu0 0.0
    %1747 = vmatprep.subr.mxu0 0.0
    %1748 = vmatpush2.msra.mxu0 0.0
    %1749 = vmatprep.subr.mxu0 0.0
    %1750 = vmatpush2.msra.mxu0 0.0
    %1751 = vmatprep.subr.mxu0 0.0
    %1752 = vmatpush2.msra.mxu0 0.0
    %1753 = vmatprep.subr.mxu0 0.0
    %1754 = vmatpush2.msra.mxu0 0.0
    %1755 = vmatprep.mubr.f32.mxu0 0.0
    %1756 = vmatmul.mubr.f32.gmra.mxu0 %v1680
    %v1757 = vpop.f32.mrf.mxu0
    %v1758 = vadd.f32 0.0, %v1757
    %v1759 = vpop.f32.mrf.mxu0
    %1760 = vmatprep.mubr.f32.mxu0 0.0
    %1761 = vmatmul.mubr.f32.gmra.mxu0 %v1683
    %v1762 = vpop.f32.mrf.mxu0
    %v1763 = vadd.f32 0.0, %v1762
    %v1764 = vpop.f32.mrf.mxu0
    %1765 = vmatprep.mubr.f32.mxu0 0.0
    %1766 = vmatmul.mubr.f32.gmra.mxu0 %v1686
    %v1767 = vpop.f32.mrf.mxu0
    %v1768 = vadd.f32 0.0, %v1767
    %v1769 = vpop.f32.mrf.mxu0
    %1770 = vmatprep.mubr.f32.mxu0 0.0
    %1771 = vmatmul.mubr.f32.gmra.mxu0 %v1689
    %v1772 = vpop.f32.mrf.mxu0
    %v1773 = vadd.f32 0.0, %v1772
    %v1774 = vpop.f32.mrf.mxu0
    %1775 = vdwg.mxu0
    %v1777 = vsel %vm1390, %v1528, 0
    %v1780 = vsel %vm1390, %v1530, 0
    %v1783 = vsel %vm1390, %v1532, 0
    %v1786 = vsel %vm1390, %v1534, 0
    %1788 = vmatprep.subr.mxu0 0.0
    %1789 = vmatpush1.msra.mxu0 0.0
    %1790 = vmatprep.subr.mxu0 0.0
    %1791 = vmatpush1.msra.mxu0 0.0
    %1792 = vmatprep.subr.mxu0 0.0
    %1793 = vmatpush1.msra.mxu0 0.0
    %1794 = vmatprep.subr.mxu0 0.0
    %1795 = vmatpush1.msra.mxu0 0.0
    %1796 = vmatprep.subr.mxu0 0.0
    %1797 = vmatpush1.msra.mxu0 0.0
    %1798 = vmatprep.subr.mxu0 0.0
    %1799 = vmatpush1.msra.mxu0 0.0
    %1800 = vmatprep.subr.mxu0 0.0
    %1801 = vmatpush1.msra.mxu0 0.0
    %1802 = vmatprep.subr.mxu0 0.0
    %1803 = vmatpush1.msra.mxu0 0.0
    %1804 = vmatprep.subr.mxu0 0.0
    %1805 = vmatpush1.msra.mxu0 0.0
    %1806 = vmatprep.subr.mxu0 0.0
    %1807 = vmatpush1.msra.mxu0 0.0
    %1808 = vmatprep.subr.mxu0 0.0
    %1809 = vmatpush1.msra.mxu0 0.0
    %1810 = vmatprep.subr.mxu0 0.0
    %1811 = vmatpush1.msra.mxu0 0.0
    %1812 = vmatprep.subr.mxu0 0.0
    %1813 = vmatpush1.msra.mxu0 %v397
    %1814 = vmatprep.subr.mxu0 0.0
    %1815 = vmatpush1.msra.mxu0 %v395
    %1816 = vmatprep.subr.mxu0 0.0
    %1817 = vmatpush1.msra.mxu0 %v393
    %1818 = vmatprep.subr.mxu0 0.0
    %1819 = vmatpush1.msra.mxu0 %v391
    %1820 = vmatprep.subr.mxu0 0.0
    %1821 = vmatpush2.msra.mxu0 0.0
    %1822 = vmatprep.subr.mxu0 0.0
    %1823 = vmatpush2.msra.mxu0 0.0
    %1824 = vmatprep.subr.mxu0 0.0
    %1825 = vmatpush2.msra.mxu0 0.0
    %1826 = vmatprep.subr.mxu0 0.0
    %1827 = vmatpush2.msra.mxu0 0.0
    %1828 = vmatprep.subr.mxu0 0.0
    %1829 = vmatpush2.msra.mxu0 0.0
    %1830 = vmatprep.subr.mxu0 0.0
    %1831 = vmatpush2.msra.mxu0 0.0
    %1832 = vmatprep.subr.mxu0 0.0
    %1833 = vmatpush2.msra.mxu0 0.0
    %1834 = vmatprep.subr.mxu0 0.0
    %1835 = vmatpush2.msra.mxu0 0.0
    %1836 = vmatprep.subr.mxu0 0.0
    %1837 = vmatpush2.msra.mxu0 0.0
    %1838 = vmatprep.subr.mxu0 0.0
    %1839 = vmatpush2.msra.mxu0 0.0
    %1840 = vmatprep.subr.mxu0 0.0
    %1841 = vmatpush2.msra.mxu0 0.0
    %1842 = vmatprep.subr.mxu0 0.0
    %1843 = vmatpush2.msra.mxu0 0.0
    %1844 = vmatprep.subr.mxu0 0.0
    %1845 = vmatpush2.msra.mxu0 0.0
    %1846 = vmatprep.subr.mxu0 0.0
    %1847 = vmatpush2.msra.mxu0 0.0
    %1848 = vmatprep.subr.mxu0 0.0
    %1849 = vmatpush2.msra.mxu0 0.0
    %1850 = vmatprep.subr.mxu0 0.0
    %1851 = vmatpush2.msra.mxu0 0.0
    %1852 = vmatprep.mubr.f32.mxu0 0.0
    %1853 = vmatmul.mubr.f32.gmra.mxu0 %v1777
    %v1854 = vpop.f32.mrf.mxu0
    %v1855 = vadd.f32 0.0, %v1854
    %v1856 = vpop.f32.mrf.mxu0
    %1857 = vmatprep.mubr.f32.mxu0 0.0
    %1858 = vmatmul.mubr.f32.gmra.mxu0 %v1780
    %v1859 = vpop.f32.mrf.mxu0
    %v1860 = vadd.f32 0.0, %v1859
    %v1861 = vpop.f32.mrf.mxu0
    %1862 = vmatprep.mubr.f32.mxu0 0.0
    %1863 = vmatmul.mubr.f32.gmra.mxu0 %v1783
    %v1864 = vpop.f32.mrf.mxu0
    %v1865 = vadd.f32 0.0, %v1864
    %v1866 = vpop.f32.mrf.mxu0
    %1867 = vmatprep.mubr.f32.mxu0 0.0
    %1868 = vmatmul.mubr.f32.gmra.mxu0 %v1786
    %v1869 = vpop.f32.mrf.mxu0
    %v1870 = vadd.f32 0.0, %v1869
    %v1871 = vpop.f32.mrf.mxu0
    %1872 = vdwg.mxu0
    %v1874 = vsel %vm1390, %v1536, 0
    %v1877 = vsel %vm1390, %v1538, 0
    %v1880 = vsel %vm1390, %v1540, 0
    %v1883 = vsel %vm1390, %v1542, 0
    %1885 = vmatprep.subr.mxu0 0.0
    %1886 = vmatpush1.msra.mxu0 0.0
    %1887 = vmatprep.subr.mxu0 0.0
    %1888 = vmatpush1.msra.mxu0 0.0
    %1889 = vmatprep.subr.mxu0 0.0
    %1890 = vmatpush1.msra.mxu0 0.0
    %1891 = vmatprep.subr.mxu0 0.0
    %1892 = vmatpush1.msra.mxu0 0.0
    %1893 = vmatprep.subr.mxu0 0.0
    %1894 = vmatpush1.msra.mxu0 0.0
    %1895 = vmatprep.subr.mxu0 0.0
    %1896 = vmatpush1.msra.mxu0 0.0
    %1897 = vmatprep.subr.mxu0 0.0
    %1898 = vmatpush1.msra.mxu0 0.0
    %1899 = vmatprep.subr.mxu0 0.0
    %1900 = vmatpush1.msra.mxu0 0.0
    %1901 = vmatprep.subr.mxu0 0.0
    %1902 = vmatpush1.msra.mxu0 0.0
    %1903 = vmatprep.subr.mxu0 0.0
    %1904 = vmatpush1.msra.mxu0 0.0
    %1905 = vmatprep.subr.mxu0 0.0
    %1906 = vmatpush1.msra.mxu0 0.0
    %1907 = vmatprep.subr.mxu0 0.0
    %1908 = vmatpush1.msra.mxu0 0.0
    %1909 = vmatprep.subr.mxu0 0.0
    %1910 = vmatpush1.msra.mxu0 %v409
    %1911 = vmatprep.subr.mxu0 0.0
    %1912 = vmatpush1.msra.mxu0 %v407
    %1913 = vmatprep.subr.mxu0 0.0
    %1914 = vmatpush1.msra.mxu0 %v405
    %1915 = vmatprep.subr.mxu0 0.0
    %1916 = vmatpush1.msra.mxu0 %v403
    %1917 = vmatprep.subr.mxu0 0.0
    %1918 = vmatpush2.msra.mxu0 0.0
    %1919 = vmatprep.subr.mxu0 0.0
    %1920 = vmatpush2.msra.mxu0 0.0
    %1921 = vmatprep.subr.mxu0 0.0
    %1922 = vmatpush2.msra.mxu0 0.0
    %1923 = vmatprep.subr.mxu0 0.0
    %1924 = vmatpush2.msra.mxu0 0.0
    %1925 = vmatprep.subr.mxu0 0.0
    %1926 = vmatpush2.msra.mxu0 0.0
    %1927 = vmatprep.subr.mxu0 0.0
    %1928 = vmatpush2.msra.mxu0 0.0
    %1929 = vmatprep.subr.mxu0 0.0
    %1930 = vmatpush2.msra.mxu0 0.0
    %1931 = vmatprep.subr.mxu0 0.0
    %1932 = vmatpush2.msra.mxu0 0.0
    %1933 = vmatprep.subr.mxu0 0.0
    %1934 = vmatpush2.msra.mxu0 0.0
    %1935 = vmatprep.subr.mxu0 0.0
    %1936 = vmatpush2.msra.mxu0 0.0
    %1937 = vmatprep.subr.mxu0 0.0
    %1938 = vmatpush2.msra.mxu0 0.0
    %1939 = vmatprep.subr.mxu0 0.0
    %1940 = vmatpush2.msra.mxu0 0.0
    %1941 = vmatprep.subr.mxu0 0.0
    %1942 = vmatpush2.msra.mxu0 0.0
    %1943 = vmatprep.subr.mxu0 0.0
    %1944 = vmatpush2.msra.mxu0 0.0
    %1945 = vmatprep.subr.mxu0 0.0
    %1946 = vmatpush2.msra.mxu0 0.0
    %1947 = vmatprep.subr.mxu0 0.0
    %1948 = vmatpush2.msra.mxu0 0.0
    %1949 = vmatprep.mubr.f32.mxu0 0.0
    %1950 = vmatmul.mubr.f32.gmra.mxu0 %v1874
    %v1951 = vpop.f32.mrf.mxu0
    %v1952 = vadd.f32 0.0, %v1951
    %v1953 = vpop.f32.mrf.mxu0
    %1954 = vmatprep.mubr.f32.mxu0 0.0
    %1955 = vmatmul.mubr.f32.gmra.mxu0 %v1877
    %v1956 = vpop.f32.mrf.mxu0
    %v1957 = vadd.f32 0.0, %v1956
    %v1958 = vpop.f32.mrf.mxu0
    %1959 = vmatprep.mubr.f32.mxu0 0.0
    %1960 = vmatmul.mubr.f32.gmra.mxu0 %v1880
    %v1961 = vpop.f32.mrf.mxu0
    %v1962 = vadd.f32 0.0, %v1961
    %v1963 = vpop.f32.mrf.mxu0
    %1964 = vmatprep.mubr.f32.mxu0 0.0
    %1965 = vmatmul.mubr.f32.gmra.mxu0 %v1883
    %v1966 = vpop.f32.mrf.mxu0
    %v1967 = vadd.f32 0.0, %v1966
    %v1968 = vpop.f32.mrf.mxu0
    %1969 = vdwg.mxu0
    %v1971 = vsel %vm1390, %v1544, 0
    %v1974 = vsel %vm1390, %v1546, 0
    %v1977 = vsel %vm1390, %v1548, 0
    %v1980 = vsel %vm1390, %v1550, 0
    %1982 = vmatprep.subr.mxu0 0.0
    %1983 = vmatpush1.msra.mxu0 0.0
    %1984 = vmatprep.subr.mxu0 0.0
    %1985 = vmatpush1.msra.mxu0 0.0
    %1986 = vmatprep.subr.mxu0 0.0
    %1987 = vmatpush1.msra.mxu0 0.0
    %1988 = vmatprep.subr.mxu0 0.0
    %1989 = vmatpush1.msra.mxu0 0.0
    %1990 = vmatprep.subr.mxu0 0.0
    %1991 = vmatpush1.msra.mxu0 0.0
    %1992 = vmatprep.subr.mxu0 0.0
    %1993 = vmatpush1.msra.mxu0 0.0
    %1994 = vmatprep.subr.mxu0 0.0
    %1995 = vmatpush1.msra.mxu0 0.0
    %1996 = vmatprep.subr.mxu0 0.0
    %1997 = vmatpush1.msra.mxu0 0.0
    %1998 = vmatprep.subr.mxu0 0.0
    %1999 = vmatpush1.msra.mxu0 0.0
    %2000 = vmatprep.subr.mxu0 0.0
    %2001 = vmatpush1.msra.mxu0 0.0
    %2002 = vmatprep.subr.mxu0 0.0
    %2003 = vmatpush1.msra.mxu0 0.0
    %2004 = vmatprep.subr.mxu0 0.0
    %2005 = vmatpush1.msra.mxu0 0.0
    %2006 = vmatprep.subr.mxu0 0.0
    %2007 = vmatpush1.msra.mxu0 %v421
    %2008 = vmatprep.subr.mxu0 0.0
    %2009 = vmatpush1.msra.mxu0 %v419
    %2010 = vmatprep.subr.mxu0 0.0
    %2011 = vmatpush1.msra.mxu0 %v417
    %2012 = vmatprep.subr.mxu0 0.0
    %2013 = vmatpush1.msra.mxu0 %v415
    %2014 = vmatprep.subr.mxu0 0.0
    %2015 = vmatpush2.msra.mxu0 0.0
    %2016 = vmatprep.subr.mxu0 0.0
    %2017 = vmatpush2.msra.mxu0 0.0
    %2018 = vmatprep.subr.mxu0 0.0
    %2019 = vmatpush2.msra.mxu0 0.0
    %2020 = vmatprep.subr.mxu0 0.0
    %2021 = vmatpush2.msra.mxu0 0.0
    %2022 = vmatprep.subr.mxu0 0.0
    %2023 = vmatpush2.msra.mxu0 0.0
    %2024 = vmatprep.subr.mxu0 0.0
    %2025 = vmatpush2.msra.mxu0 0.0
    %2026 = vmatprep.subr.mxu0 0.0
    %2027 = vmatpush2.msra.mxu0 0.0
    %2028 = vmatprep.subr.mxu0 0.0
    %2029 = vmatpush2.msra.mxu0 0.0
    %2030 = vmatprep.subr.mxu0 0.0
    %2031 = vmatpush2.msra.mxu0 0.0
    %2032 = vmatprep.subr.mxu0 0.0
    %2033 = vmatpush2.msra.mxu0 0.0
    %2034 = vmatprep.subr.mxu0 0.0
    %2035 = vmatpush2.msra.mxu0 0.0
    %2036 = vmatprep.subr.mxu0 0.0
    %2037 = vmatpush2.msra.mxu0 0.0
    %2038 = vmatprep.subr.mxu0 0.0
    %2039 = vmatpush2.msra.mxu0 0.0
    %2040 = vmatprep.subr.mxu0 0.0
    %2041 = vmatpush2.msra.mxu0 0.0
    %2042 = vmatprep.subr.mxu0 0.0
    %2043 = vmatpush2.msra.mxu0 0.0
    %2044 = vmatprep.subr.mxu0 0.0
    %2045 = vmatpush2.msra.mxu0 0.0
    %2046 = vmatprep.mubr.f32.mxu0 0.0
    %2047 = vmatmul.mubr.f32.gmra.mxu0 %v1971
    %v2048 = vpop.f32.mrf.mxu0
    %v2049 = vadd.f32 0.0, %v2048
    %v2050 = vpop.f32.mrf.mxu0
    %2051 = vmatprep.mubr.f32.mxu0 0.0
    %2052 = vmatmul.mubr.f32.gmra.mxu0 %v1974
    %v2053 = vpop.f32.mrf.mxu0
    %v2054 = vadd.f32 0.0, %v2053
    %v2055 = vpop.f32.mrf.mxu0
    %2056 = vmatprep.mubr.f32.mxu0 0.0
    %2057 = vmatmul.mubr.f32.gmra.mxu0 %v1977
    %v2058 = vpop.f32.mrf.mxu0
    %v2059 = vadd.f32 0.0, %v2058
    %v2060 = vpop.f32.mrf.mxu0
    %2061 = vmatprep.mubr.f32.mxu0 0.0
    %2062 = vmatmul.mubr.f32.gmra.mxu0 %v1980
    %v2063 = vpop.f32.mrf.mxu0
    %v2064 = vadd.f32 0.0, %v2063
    %v2065 = vpop.f32.mrf.mxu0
    %2066 = vdwg.mxu0
    %v2068 = vsel %vm1390, %v1552, 0
    %v2071 = vsel %vm1390, %v1554, 0
    %v2074 = vsel %vm1390, %v1556, 0
    %v2077 = vsel %vm1390, %v1558, 0
    %2079 = vmatprep.subr.mxu0 0.0
    %2080 = vmatpush1.msra.mxu0 0.0
    %2081 = vmatprep.subr.mxu0 0.0
    %2082 = vmatpush1.msra.mxu0 0.0
    %2083 = vmatprep.subr.mxu0 0.0
    %2084 = vmatpush1.msra.mxu0 0.0
    %2085 = vmatprep.subr.mxu0 0.0
    %2086 = vmatpush1.msra.mxu0 0.0
    %2087 = vmatprep.subr.mxu0 0.0
    %2088 = vmatpush1.msra.mxu0 0.0
    %2089 = vmatprep.subr.mxu0 0.0
    %2090 = vmatpush1.msra.mxu0 0.0
    %2091 = vmatprep.subr.mxu0 0.0
    %2092 = vmatpush1.msra.mxu0 0.0
    %2093 = vmatprep.subr.mxu0 0.0
    %2094 = vmatpush1.msra.mxu0 0.0
    %2095 = vmatprep.subr.mxu0 0.0
    %2096 = vmatpush1.msra.mxu0 0.0
    %2097 = vmatprep.subr.mxu0 0.0
    %2098 = vmatpush1.msra.mxu0 0.0
    %2099 = vmatprep.subr.mxu0 0.0
    %2100 = vmatpush1.msra.mxu0 0.0
    %2101 = vmatprep.subr.mxu0 0.0
    %2102 = vmatpush1.msra.mxu0 0.0
    %2103 = vmatprep.subr.mxu0 0.0
    %2104 = vmatpush1.msra.mxu0 %v328
    %2105 = vmatprep.subr.mxu0 0.0
    %2106 = vmatpush1.msra.mxu0 %v324
    %2107 = vmatprep.subr.mxu0 0.0
    %2108 = vmatpush1.msra.mxu0 %v318
    %2109 = vmatprep.subr.mxu0 0.0
    %2110 = vmatpush1.msra.mxu0 %v314
    %2111 = vmatprep.subr.mxu0 0.0
    %2112 = vmatpush2.msra.mxu0 0.0
    %2113 = vmatprep.subr.mxu0 0.0
    %2114 = vmatpush2.msra.mxu0 0.0
    %2115 = vmatprep.subr.mxu0 0.0
    %2116 = vmatpush2.msra.mxu0 0.0
    %2117 = vmatprep.subr.mxu0 0.0
    %2118 = vmatpush2.msra.mxu0 0.0
    %2119 = vmatprep.subr.mxu0 0.0
    %2120 = vmatpush2.msra.mxu0 0.0
    %2121 = vmatprep.subr.mxu0 0.0
    %2122 = vmatpush2.msra.mxu0 0.0
    %2123 = vmatprep.subr.mxu0 0.0
    %2124 = vmatpush2.msra.mxu0 0.0
    %2125 = vmatprep.subr.mxu0 0.0
    %2126 = vmatpush2.msra.mxu0 0.0
    %2127 = vmatprep.subr.mxu0 0.0
    %2128 = vmatpush2.msra.mxu0 0.0
    %2129 = vmatprep.subr.mxu0 0.0
    %2130 = vmatpush2.msra.mxu0 0.0
    %2131 = vmatprep.subr.mxu0 0.0
    %2132 = vmatpush2.msra.mxu0 0.0
    %2133 = vmatprep.subr.mxu0 0.0
    %2134 = vmatpush2.msra.mxu0 0.0
    %2135 = vmatprep.subr.mxu0 0.0
    %2136 = vmatpush2.msra.mxu0 0.0
    %2137 = vmatprep.subr.mxu0 0.0
    %2138 = vmatpush2.msra.mxu0 0.0
    %2139 = vmatprep.subr.mxu0 0.0
    %2140 = vmatpush2.msra.mxu0 0.0
    %2141 = vmatprep.subr.mxu0 0.0
    %2142 = vmatpush2.msra.mxu0 0.0
    %2143 = vmatprep.mubr.f32.mxu0 0.0
    %2144 = vmatmul.mubr.f32.gmra.mxu0 %v2068
    %v2145 = vpop.f32.mrf.mxu0
    %v2146 = vadd.f32 0.0, %v2145
    %v2147 = vpop.f32.mrf.mxu0
    %2148 = vmatprep.mubr.f32.mxu0 0.0
    %2149 = vmatmul.mubr.f32.gmra.mxu0 %v2071
    %v2150 = vpop.f32.mrf.mxu0
    %v2151 = vadd.f32 0.0, %v2150
    %v2152 = vpop.f32.mrf.mxu0
    %2153 = vmatprep.mubr.f32.mxu0 0.0
    %2154 = vmatmul.mubr.f32.gmra.mxu0 %v2074
    %v2155 = vpop.f32.mrf.mxu0
    %v2156 = vadd.f32 0.0, %v2155
    %v2157 = vpop.f32.mrf.mxu0
    %2158 = vmatprep.mubr.f32.mxu0 0.0
    %2159 = vmatmul.mubr.f32.gmra.mxu0 %v2077
    %v2160 = vpop.f32.mrf.mxu0
    %v2161 = vadd.f32 0.0, %v2160
    %v2162 = vpop.f32.mrf.mxu0
    %2163 = vdwg.mxu0
    %v2165 = vsel %vm1390, %v1560, 0
    %v2168 = vsel %vm1390, %v1562, 0
    %v2171 = vsel %vm1390, %v1564, 0
    %v2174 = vsel %vm1390, %v1566, 0
    %2176 = vmatprep.subr.mxu0 0.0
    %2177 = vmatpush1.msra.mxu0 0.0
    %2178 = vmatprep.subr.mxu0 0.0
    %2179 = vmatpush1.msra.mxu0 0.0
    %2180 = vmatprep.subr.mxu0 0.0
    %2181 = vmatpush1.msra.mxu0 0.0
    %2182 = vmatprep.subr.mxu0 0.0
    %2183 = vmatpush1.msra.mxu0 0.0
    %2184 = vmatprep.subr.mxu0 0.0
    %2185 = vmatpush1.msra.mxu0 0.0
    %2186 = vmatprep.subr.mxu0 0.0
    %2187 = vmatpush1.msra.mxu0 0.0
    %2188 = vmatprep.subr.mxu0 0.0
    %2189 = vmatpush1.msra.mxu0 0.0
    %2190 = vmatprep.subr.mxu0 0.0
    %2191 = vmatpush1.msra.mxu0 0.0
    %2192 = vmatprep.subr.mxu0 0.0
    %2193 = vmatpush1.msra.mxu0 0.0
    %2194 = vmatprep.subr.mxu0 0.0
    %2195 = vmatpush1.msra.mxu0 0.0
    %2196 = vmatprep.subr.mxu0 0.0
    %2197 = vmatpush1.msra.mxu0 0.0
    %2198 = vmatprep.subr.mxu0 0.0
    %2199 = vmatpush1.msra.mxu0 0.0
    %2200 = vmatprep.subr.mxu0 0.0
    %2201 = vmatpush1.msra.mxu0 %v437
    %2202 = vmatprep.subr.mxu0 0.0
    %2203 = vmatpush1.msra.mxu0 %v435
    %2204 = vmatprep.subr.mxu0 0.0
    %2205 = vmatpush1.msra.mxu0 %v433
    %2206 = vmatprep.subr.mxu0 0.0
    %2207 = vmatpush1.msra.mxu0 %v431
    %2208 = vmatprep.subr.mxu0 0.0
    %2209 = vmatpush2.msra.mxu0 0.0
    %2210 = vmatprep.subr.mxu0 0.0
    %2211 = vmatpush2.msra.mxu0 0.0
    %2212 = vmatprep.subr.mxu0 0.0
    %2213 = vmatpush2.msra.mxu0 0.0
    %2214 = vmatprep.subr.mxu0 0.0
    %2215 = vmatpush2.msra.mxu0 0.0
    %2216 = vmatprep.subr.mxu0 0.0
    %2217 = vmatpush2.msra.mxu0 0.0
    %2218 = vmatprep.subr.mxu0 0.0
    %2219 = vmatpush2.msra.mxu0 0.0
    %2220 = vmatprep.subr.mxu0 0.0
    %2221 = vmatpush2.msra.mxu0 0.0
    %2222 = vmatprep.subr.mxu0 0.0
    %2223 = vmatpush2.msra.mxu0 0.0
    %2224 = vmatprep.subr.mxu0 0.0
    %2225 = vmatpush2.msra.mxu0 0.0
    %2226 = vmatprep.subr.mxu0 0.0
    %2227 = vmatpush2.msra.mxu0 0.0
    %2228 = vmatprep.subr.mxu0 0.0
    %2229 = vmatpush2.msra.mxu0 0.0
    %2230 = vmatprep.subr.mxu0 0.0
    %2231 = vmatpush2.msra.mxu0 0.0
    %2232 = vmatprep.subr.mxu0 0.0
    %2233 = vmatpush2.msra.mxu0 0.0
    %2234 = vmatprep.subr.mxu0 0.0
    %2235 = vmatpush2.msra.mxu0 0.0
    %2236 = vmatprep.subr.mxu0 0.0
    %2237 = vmatpush2.msra.mxu0 0.0
    %2238 = vmatprep.subr.mxu0 0.0
    %2239 = vmatpush2.msra.mxu0 0.0
    %2240 = vmatprep.mubr.f32.mxu0 0.0
    %2241 = vmatmul.mubr.f32.gmra.mxu0 %v2165
    %v2242 = vpop.f32.mrf.mxu0
    %v2243 = vadd.f32 0.0, %v2242
    %v2244 = vpop.f32.mrf.mxu0
    %2245 = vmatprep.mubr.f32.mxu0 0.0
    %2246 = vmatmul.mubr.f32.gmra.mxu0 %v2168
    %v2247 = vpop.f32.mrf.mxu0
    %v2248 = vadd.f32 0.0, %v2247
    %v2249 = vpop.f32.mrf.mxu0
    %2250 = vmatprep.mubr.f32.mxu0 0.0
    %2251 = vmatmul.mubr.f32.gmra.mxu0 %v2171
    %v2252 = vpop.f32.mrf.mxu0
    %v2253 = vadd.f32 0.0, %v2252
    %v2254 = vpop.f32.mrf.mxu0
    %2255 = vmatprep.mubr.f32.mxu0 0.0
    %2256 = vmatmul.mubr.f32.gmra.mxu0 %v2174
    %v2257 = vpop.f32.mrf.mxu0
    %v2258 = vadd.f32 0.0, %v2257
    %v2259 = vpop.f32.mrf.mxu0
    %2260 = vdwg.mxu0
    %v2262 = vsel %vm1390, %v1568, 0
    %v2265 = vsel %vm1390, %v1570, 0
    %v2268 = vsel %vm1390, %v1572, 0
    %v2271 = vsel %vm1390, %v1574, 0
    %2273 = vmatprep.subr.mxu0 0.0
    %2274 = vmatpush1.msra.mxu0 0.0
    %2275 = vmatprep.subr.mxu0 0.0
    %2276 = vmatpush1.msra.mxu0 0.0
    %2277 = vmatprep.subr.mxu0 0.0
    %2278 = vmatpush1.msra.mxu0 0.0
    %2279 = vmatprep.subr.mxu0 0.0
    %2280 = vmatpush1.msra.mxu0 0.0
    %2281 = vmatprep.subr.mxu0 0.0
    %2282 = vmatpush1.msra.mxu0 0.0
    %2283 = vmatprep.subr.mxu0 0.0
    %2284 = vmatpush1.msra.mxu0 0.0
    %2285 = vmatprep.subr.mxu0 0.0
    %2286 = vmatpush1.msra.mxu0 0.0
    %2287 = vmatprep.subr.mxu0 0.0
    %2288 = vmatpush1.msra.mxu0 0.0
    %2289 = vmatprep.subr.mxu0 0.0
    %2290 = vmatpush1.msra.mxu0 0.0
    %2291 = vmatprep.subr.mxu0 0.0
    %2292 = vmatpush1.msra.mxu0 0.0
    %2293 = vmatprep.subr.mxu0 0.0
    %2294 = vmatpush1.msra.mxu0 0.0
    %2295 = vmatprep.subr.mxu0 0.0
    %2296 = vmatpush1.msra.mxu0 0.0
    %2297 = vmatprep.subr.mxu0 0.0
    %2298 = vmatpush1.msra.mxu0 %v449
    %2299 = vmatprep.subr.mxu0 0.0
    %2300 = vmatpush1.msra.mxu0 %v447
    %2301 = vmatprep.subr.mxu0 0.0
    %2302 = vmatpush1.msra.mxu0 %v445
    %2303 = vmatprep.subr.mxu0 0.0
    %2304 = vmatpush1.msra.mxu0 %v443
    %2305 = vmatprep.subr.mxu0 0.0
    %2306 = vmatpush2.msra.mxu0 0.0
    %2307 = vmatprep.subr.mxu0 0.0
    %2308 = vmatpush2.msra.mxu0 0.0
    %2309 = vmatprep.subr.mxu0 0.0
    %2310 = vmatpush2.msra.mxu0 0.0
    %2311 = vmatprep.subr.mxu0 0.0
    %2312 = vmatpush2.msra.mxu0 0.0
    %2313 = vmatprep.subr.mxu0 0.0
    %2314 = vmatpush2.msra.mxu0 0.0
    %2315 = vmatprep.subr.mxu0 0.0
    %2316 = vmatpush2.msra.mxu0 0.0
    %2317 = vmatprep.subr.mxu0 0.0
    %2318 = vmatpush2.msra.mxu0 0.0
    %2319 = vmatprep.subr.mxu0 0.0
    %2320 = vmatpush2.msra.mxu0 0.0
    %2321 = vmatprep.subr.mxu0 0.0
    %2322 = vmatpush2.msra.mxu0 0.0
    %2323 = vmatprep.subr.mxu0 0.0
    %2324 = vmatpush2.msra.mxu0 0.0
    %2325 = vmatprep.subr.mxu0 0.0
    %2326 = vmatpush2.msra.mxu0 0.0
    %2327 = vmatprep.subr.mxu0 0.0
    %2328 = vmatpush2.msra.mxu0 0.0
    %2329 = vmatprep.subr.mxu0 0.0
    %2330 = vmatpush2.msra.mxu0 0.0
    %2331 = vmatprep.subr.mxu0 0.0
    %2332 = vmatpush2.msra.mxu0 0.0
    %2333 = vmatprep.subr.mxu0 0.0
    %2334 = vmatpush2.msra.mxu0 0.0
    %2335 = vmatprep.subr.mxu0 0.0
    %2336 = vmatpush2.msra.mxu0 0.0
    %2337 = vmatprep.mubr.f32.mxu0 0.0
    %2338 = vmatmul.mubr.f32.gmra.mxu0 %v2262
    %v2339 = vpop.f32.mrf.mxu0
    %v2340 = vadd.f32 0.0, %v2339
    %v2341 = vpop.f32.mrf.mxu0
    %2342 = vmatprep.mubr.f32.mxu0 0.0
    %2343 = vmatmul.mubr.f32.gmra.mxu0 %v2265
    %v2344 = vpop.f32.mrf.mxu0
    %v2345 = vadd.f32 0.0, %v2344
    %v2346 = vpop.f32.mrf.mxu0
    %2347 = vmatprep.mubr.f32.mxu0 0.0
    %2348 = vmatmul.mubr.f32.gmra.mxu0 %v2268
    %v2349 = vpop.f32.mrf.mxu0
    %v2350 = vadd.f32 0.0, %v2349
    %v2351 = vpop.f32.mrf.mxu0
    %2352 = vmatprep.mubr.f32.mxu0 0.0
    %2353 = vmatmul.mubr.f32.gmra.mxu0 %v2271
    %v2354 = vpop.f32.mrf.mxu0
    %v2355 = vadd.f32 0.0, %v2354
    %v2356 = vpop.f32.mrf.mxu0
    %2357 = vdwg.mxu0
    %v2359 = vsel %vm1390, %v1576, 0
    %v2362 = vsel %vm1390, %v1578, 0
    %v2365 = vsel %vm1390, %v1580, 0
    %v2368 = vsel %vm1390, %v1582, 0
    %2370 = vmatprep.subr.mxu0 0.0
    %2371 = vmatpush1.msra.mxu0 0.0
    %2372 = vmatprep.subr.mxu0 0.0
    %2373 = vmatpush1.msra.mxu0 0.0
    %2374 = vmatprep.subr.mxu0 0.0
    %2375 = vmatpush1.msra.mxu0 0.0
    %2376 = vmatprep.subr.mxu0 0.0
    %2377 = vmatpush1.msra.mxu0 0.0
    %2378 = vmatprep.subr.mxu0 0.0
    %2379 = vmatpush1.msra.mxu0 0.0
    %2380 = vmatprep.subr.mxu0 0.0
    %2381 = vmatpush1.msra.mxu0 0.0
    %2382 = vmatprep.subr.mxu0 0.0
    %2383 = vmatpush1.msra.mxu0 0.0
    %2384 = vmatprep.subr.mxu0 0.0
    %2385 = vmatpush1.msra.mxu0 0.0
    %2386 = vmatprep.subr.mxu0 0.0
    %2387 = vmatpush1.msra.mxu0 0.0
    %2388 = vmatprep.subr.mxu0 0.0
    %2389 = vmatpush1.msra.mxu0 0.0
    %2390 = vmatprep.subr.mxu0 0.0
    %2391 = vmatpush1.msra.mxu0 0.0
    %2392 = vmatprep.subr.mxu0 0.0
    %2393 = vmatpush1.msra.mxu0 0.0
    %2394 = vmatprep.subr.mxu0 0.0
    %2395 = vmatpush1.msra.mxu0 %v461
    %2396 = vmatprep.subr.mxu0 0.0
    %2397 = vmatpush1.msra.mxu0 %v459
    %2398 = vmatprep.subr.mxu0 0.0
    %2399 = vmatpush1.msra.mxu0 %v457
    %2400 = vmatprep.subr.mxu0 0.0
    %2401 = vmatpush1.msra.mxu0 %v455
    %2402 = vmatprep.subr.mxu0 0.0
    %2403 = vmatpush2.msra.mxu0 0.0
    %2404 = vmatprep.subr.mxu0 0.0
    %2405 = vmatpush2.msra.mxu0 0.0
    %2406 = vmatprep.subr.mxu0 0.0
    %2407 = vmatpush2.msra.mxu0 0.0
    %2408 = vmatprep.subr.mxu0 0.0
    %2409 = vmatpush2.msra.mxu0 0.0
    %2410 = vmatprep.subr.mxu0 0.0
    %2411 = vmatpush2.msra.mxu0 0.0
    %2412 = vmatprep.subr.mxu0 0.0
    %2413 = vmatpush2.msra.mxu0 0.0
    %2414 = vmatprep.subr.mxu0 0.0
    %2415 = vmatpush2.msra.mxu0 0.0
    %2416 = vmatprep.subr.mxu0 0.0
    %2417 = vmatpush2.msra.mxu0 0.0
    %2418 = vmatprep.subr.mxu0 0.0
    %2419 = vmatpush2.msra.mxu0 0.0
    %2420 = vmatprep.subr.mxu0 0.0
    %2421 = vmatpush2.msra.mxu0 0.0
    %2422 = vmatprep.subr.mxu0 0.0
    %2423 = vmatpush2.msra.mxu0 0.0
    %2424 = vmatprep.subr.mxu0 0.0
    %2425 = vmatpush2.msra.mxu0 0.0
    %2426 = vmatprep.subr.mxu0 0.0
    %2427 = vmatpush2.msra.mxu0 0.0
    %2428 = vmatprep.subr.mxu0 0.0
    %2429 = vmatpush2.msra.mxu0 0.0
    %2430 = vmatprep.subr.mxu0 0.0
    %2431 = vmatpush2.msra.mxu0 0.0
    %2432 = vmatprep.subr.mxu0 0.0
    %2433 = vmatpush2.msra.mxu0 0.0
    %2434 = vmatprep.mubr.f32.mxu0 0.0
    %2435 = vmatmul.mubr.f32.gmra.mxu0 %v2359
    %v2436 = vpop.f32.mrf.mxu0
    %v2437 = vadd.f32 0.0, %v2436
    %v2438 = vpop.f32.mrf.mxu0
    %2439 = vmatprep.mubr.f32.mxu0 0.0
    %2440 = vmatmul.mubr.f32.gmra.mxu0 %v2362
    %v2441 = vpop.f32.mrf.mxu0
    %v2442 = vadd.f32 0.0, %v2441
    %v2443 = vpop.f32.mrf.mxu0
    %2444 = vmatprep.mubr.f32.mxu0 0.0
    %2445 = vmatmul.mubr.f32.gmra.mxu0 %v2365
    %v2446 = vpop.f32.mrf.mxu0
    %v2447 = vadd.f32 0.0, %v2446
    %v2448 = vpop.f32.mrf.mxu0
    %2449 = vmatprep.mubr.f32.mxu0 0.0
    %2450 = vmatmul.mubr.f32.gmra.mxu0 %v2368
    %v2451 = vpop.f32.mrf.mxu0
    %v2452 = vadd.f32 0.0, %v2451
    %v2453 = vpop.f32.mrf.mxu0
    %2454 = vdwg.mxu0
    %v2455 = vrcp.pop %v1585
    %v2456 = vrcp.pop %v1588
    %v2457 = vrcp.pop %v1591
    %v2458 = vrcp.pop %v1594
    %v2459 = vrcp.pop %v1597
    %v2460 = vrcp.pop %v1600
    %v2461 = vrcp.pop %v1603
    %v2462 = vrcp.pop %v1606
    %v2463 = vrcp.pop %v1609
    %v2464 = vrcp.pop %v1612
    %v2465 = vrcp.pop %v1615
    %v2466 = vrcp.pop %v1618
    %v2467 = vrcp.pop %v1621
    %v2468 = vrcp.pop %v1624
    %v2469 = vrcp.pop %v1627
    %v2470 = vrcp.pop %v1630
    %v2471 = vrcp.pop %v1633
    %v2472 = vrcp.pop %v1636
    %v2473 = vrcp.pop %v1639
    %v2474 = vrcp.pop %v1642
    %v2475 = vrcp.pop %v1645
    %v2476 = vrcp.pop %v1648
    %v2477 = vrcp.pop %v1651
    %v2478 = vrcp.pop %v1654
    %v2479 = vrcp.pop %v1657
    %v2480 = vrcp.pop %v1660
    %v2481 = vrcp.pop %v1663
    %v2482 = vrcp.pop %v1666
    %v2483 = vrcp.pop %v1669
    %v2484 = vrcp.pop %v1672
    %v2485 = vrcp.pop %v1675
    %v2486 = vrcp.pop %v1678
    %v2487 = vmul.f32 %v1758, %v2455
    %v2488 = vmul.f32 %v1763, %v2456
    %v2489 = vmul.f32 %v1768, %v2457
    %v2490 = vmul.f32 %v1773, %v2458
    %v2491 = vmul.f32 %v1855, %v2459
    %v2492 = vmul.f32 %v1860, %v2460
    %v2493 = vmul.f32 %v1865, %v2461
    %v2494 = vmul.f32 %v1870, %v2462
    %v2495 = vmul.f32 %v1952, %v2463
    %v2496 = vmul.f32 %v1957, %v2464
    %v2497 = vmul.f32 %v1962, %v2465
    %v2498 = vmul.f32 %v1967, %v2466
    %v2499 = vmul.f32 %v2049, %v2467
    %v2500 = vmul.f32 %v2054, %v2468
    %v2501 = vmul.f32 %v2059, %v2469
    %v2502 = vmul.f32 %v2064, %v2470
    %v2503 = vmul.f32 %v2146, %v2471
    %v2504 = vmul.f32 %v2151, %v2472
    %v2505 = vmul.f32 %v2156, %v2473
    %v2506 = vmul.f32 %v2161, %v2474
    %v2507 = vmul.f32 %v2243, %v2475
    %v2508 = vmul.f32 %v2248, %v2476
    %v2509 = vmul.f32 %v2253, %v2477
    %v2510 = vmul.f32 %v2258, %v2478
    %v2511 = vmul.f32 %v2340, %v2479
    %v2512 = vmul.f32 %v2345, %v2480
    %v2513 = vmul.f32 %v2350, %v2481
    %v2514 = vmul.f32 %v2355, %v2482
    %v2515 = vmul.f32 %v2437, %v2483
    %v2516 = vmul.f32 %v2442, %v2484
    %v2517 = vmul.f32 %v2447, %v2485
    %v2518 = vmul.f32 %v2452, %v2486
    %v2519 = vld [vmem:[%s2] sm:$0xff]
    %v2520 = vld [vmem:[%s2 + $0x8] sm:$0xff]
    %v2521 = vld [vmem:[%s2 + $0x10] sm:$0xff]
    %v2522 = vld [vmem:[%s2 + $0x18] sm:$0xff]
    %v2523 = vld [vmem:[%s2 + $0x20] sm:$0xff]
    %v2524 = vld [vmem:[%s2 + $0x28] sm:$0xff]
    %v2525 = vld [vmem:[%s2 + $0x30] sm:$0xff]
    %v2526 = vld [vmem:[%s2 + $0x38] sm:$0xff]
    %v2528 = vsel %vm474, %v2487, 0
    %v2531 = vsel %vm474, %v2488, 0
    %v2534 = vsel %vm474, %v2489, 0
    %v2537 = vsel %vm474, %v2490, 0
    %2539 = vmatprep.subr.mxu0 0.0
    %2540 = vmatpush1.msra.mxu0 0.0
    %2541 = vmatprep.subr.mxu0 0.0
    %2542 = vmatpush1.msra.mxu0 0.0
    %2543 = vmatprep.subr.mxu0 0.0
    %2544 = vmatpush1.msra.mxu0 0.0
    %2545 = vmatprep.subr.mxu0 0.0
    %2546 = vmatpush1.msra.mxu0 0.0
    %2547 = vmatprep.subr.mxu0 0.0
    %2548 = vmatpush1.msra.mxu0 0.0
    %2549 = vmatprep.subr.mxu0 0.0
    %2550 = vmatpush1.msra.mxu0 0.0
    %2551 = vmatprep.subr.mxu0 0.0
    %2552 = vmatpush1.msra.mxu0 0.0
    %2553 = vmatprep.subr.mxu0 0.0
    %2554 = vmatpush1.msra.mxu0 0.0
    %2555 = vmatprep.subr.mxu0 0.0
    %2556 = vmatpush1.msra.mxu0 0.0
    %2557 = vmatprep.subr.mxu0 0.0
    %2558 = vmatpush1.msra.mxu0 0.0
    %2559 = vmatprep.subr.mxu0 0.0
    %2560 = vmatpush1.msra.mxu0 0.0
    %2561 = vmatprep.subr.mxu0 0.0
    %2562 = vmatpush1.msra.mxu0 0.0
    %2563 = vmatprep.subr.mxu0 0.0
    %2564 = vmatpush1.msra.mxu0 0.0
    %2565 = vmatprep.subr.mxu0 0.0
    %2566 = vmatpush1.msra.mxu0 0.0
    %2567 = vmatprep.subr.mxu0 0.0
    %2568 = vmatpush1.msra.mxu0 %v2520
    %2569 = vmatprep.subr.mxu0 0.0
    %2570 = vmatpush1.msra.mxu0 %v2519
    %2571 = vmatprep.subr.mxu0 0.0
    %2572 = vmatpush2.msra.mxu0 0.0
    %2573 = vmatprep.subr.mxu0 0.0
    %2574 = vmatpush2.msra.mxu0 0.0
    %2575 = vmatprep.subr.mxu0 0.0
    %2576 = vmatpush2.msra.mxu0 0.0
    %2577 = vmatprep.subr.mxu0 0.0
    %2578 = vmatpush2.msra.mxu0 0.0
    %2579 = vmatprep.subr.mxu0 0.0
    %2580 = vmatpush2.msra.mxu0 0.0
    %2581 = vmatprep.subr.mxu0 0.0
    %2582 = vmatpush2.msra.mxu0 0.0
    %2583 = vmatprep.subr.mxu0 0.0
    %2584 = vmatpush2.msra.mxu0 0.0
    %2585 = vmatprep.subr.mxu0 0.0
    %2586 = vmatpush2.msra.mxu0 0.0
    %2587 = vmatprep.subr.mxu0 0.0
    %2588 = vmatpush2.msra.mxu0 0.0
    %2589 = vmatprep.subr.mxu0 0.0
    %2590 = vmatpush2.msra.mxu0 0.0
    %2591 = vmatprep.subr.mxu0 0.0
    %2592 = vmatpush2.msra.mxu0 0.0
    %2593 = vmatprep.subr.mxu0 0.0
    %2594 = vmatpush2.msra.mxu0 0.0
    %2595 = vmatprep.subr.mxu0 0.0
    %2596 = vmatpush2.msra.mxu0 0.0
    %2597 = vmatprep.subr.mxu0 0.0
    %2598 = vmatpush2.msra.mxu0 0.0
    %2599 = vmatprep.subr.mxu0 0.0
    %2600 = vmatpush2.msra.mxu0 0.0
    %2601 = vmatprep.subr.mxu0 0.0
    %2602 = vmatpush2.msra.mxu0 0.0
    %2603 = vmatprep.mubr.f32.mxu0 0.0
    %2604 = vmatmul.mubr.f32.gmra.mxu0 %v2528
    %v2605 = vpop.f32.mrf.mxu0
    %v2606 = vadd.f32 0.0, %v2605
    %v2607 = vpop.f32.mrf.mxu0
    %2608 = vmatprep.mubr.f32.mxu0 0.0
    %2609 = vmatmul.mubr.f32.gmra.mxu0 %v2531
    %v2610 = vpop.f32.mrf.mxu0
    %v2611 = vadd.f32 0.0, %v2610
    %v2612 = vpop.f32.mrf.mxu0
    %2613 = vmatprep.mubr.f32.mxu0 0.0
    %2614 = vmatmul.mubr.f32.gmra.mxu0 %v2534
    %v2615 = vpop.f32.mrf.mxu0
    %v2616 = vadd.f32 0.0, %v2615
    %v2617 = vpop.f32.mrf.mxu0
    %2618 = vmatprep.mubr.f32.mxu0 0.0
    %2619 = vmatmul.mubr.f32.gmra.mxu0 %v2537
    %v2620 = vpop.f32.mrf.mxu0
    %v2621 = vadd.f32 0.0, %v2620
    %v2622 = vpop.f32.mrf.mxu0
    %2623 = vdwg.mxu0
    %v2624 = vlaneseq
    %v2625 = vshrl.u32 %v2624, 7
    %v2626 = vsub.s32 4, %v2625
    %v2627 = vrot.slane %v62, %v2626
    %v2628 = vadd.f32 %v2627, %v2606
    %v2629 = vadd.f32 %v2627, %v2611
    %v2630 = vadd.f32 %v2627, %v2616
    %v2631 = vadd.f32 %v2627, %v2621
    %v2633 = vsel %vm474, %v2491, 0
    %v2636 = vsel %vm474, %v2492, 0
    %v2639 = vsel %vm474, %v2493, 0
    %v2642 = vsel %vm474, %v2494, 0
    %2644 = vmatprep.subr.mxu0 0.0
    %2645 = vmatpush1.msra.mxu0 0.0
    %2646 = vmatprep.subr.mxu0 0.0
    %2647 = vmatpush1.msra.mxu0 0.0
    %2648 = vmatprep.subr.mxu0 0.0
    %2649 = vmatpush1.msra.mxu0 0.0
    %2650 = vmatprep.subr.mxu0 0.0
    %2651 = vmatpush1.msra.mxu0 0.0
    %2652 = vmatprep.subr.mxu0 0.0
    %2653 = vmatpush1.msra.mxu0 0.0
    %2654 = vmatprep.subr.mxu0 0.0
    %2655 = vmatpush1.msra.mxu0 0.0
    %2656 = vmatprep.subr.mxu0 0.0
    %2657 = vmatpush1.msra.mxu0 0.0
    %2658 = vmatprep.subr.mxu0 0.0
    %2659 = vmatpush1.msra.mxu0 0.0
    %2660 = vmatprep.subr.mxu0 0.0
    %2661 = vmatpush1.msra.mxu0 0.0
    %2662 = vmatprep.subr.mxu0 0.0
    %2663 = vmatpush1.msra.mxu0 0.0
    %2664 = vmatprep.subr.mxu0 0.0
    %2665 = vmatpush1.msra.mxu0 0.0
    %2666 = vmatprep.subr.mxu0 0.0
    %2667 = vmatpush1.msra.mxu0 0.0
    %2668 = vmatprep.subr.mxu0 0.0
    %2669 = vmatpush1.msra.mxu0 0.0
    %2670 = vmatprep.subr.mxu0 0.0
    %2671 = vmatpush1.msra.mxu0 0.0
    %2672 = vmatprep.subr.mxu0 0.0
    %2673 = vmatpush1.msra.mxu0 %v2522
    %2674 = vmatprep.subr.mxu0 0.0
    %2675 = vmatpush1.msra.mxu0 %v2521
    %2676 = vmatprep.subr.mxu0 0.0
    %2677 = vmatpush2.msra.mxu0 0.0
    %2678 = vmatprep.subr.mxu0 0.0
    %2679 = vmatpush2.msra.mxu0 0.0
    %2680 = vmatprep.subr.mxu0 0.0
    %2681 = vmatpush2.msra.mxu0 0.0
    %2682 = vmatprep.subr.mxu0 0.0
    %2683 = vmatpush2.msra.mxu0 0.0
    %2684 = vmatprep.subr.mxu0 0.0
    %2685 = vmatpush2.msra.mxu0 0.0
    %2686 = vmatprep.subr.mxu0 0.0
    %2687 = vmatpush2.msra.mxu0 0.0
    %2688 = vmatprep.subr.mxu0 0.0
    %2689 = vmatpush2.msra.mxu0 0.0
    %2690 = vmatprep.subr.mxu0 0.0
    %2691 = vmatpush2.msra.mxu0 0.0
    %2692 = vmatprep.subr.mxu0 0.0
    %2693 = vmatpush2.msra.mxu0 0.0
    %2694 = vmatprep.subr.mxu0 0.0
    %2695 = vmatpush2.msra.mxu0 0.0
    %2696 = vmatprep.subr.mxu0 0.0
    %2697 = vmatpush2.msra.mxu0 0.0
    %2698 = vmatprep.subr.mxu0 0.0
    %2699 = vmatpush2.msra.mxu0 0.0
    %2700 = vmatprep.subr.mxu0 0.0
    %2701 = vmatpush2.msra.mxu0 0.0
    %2702 = vmatprep.subr.mxu0 0.0
    %2703 = vmatpush2.msra.mxu0 0.0
    %2704 = vmatprep.subr.mxu0 0.0
    %2705 = vmatpush2.msra.mxu0 0.0
    %2706 = vmatprep.subr.mxu0 0.0
    %2707 = vmatpush2.msra.mxu0 0.0
    %2708 = vmatprep.mubr.f32.mxu0 0.0
    %2709 = vmatmul.mubr.f32.gmra.mxu0 %v2633
    %v2710 = vpop.f32.mrf.mxu0
    %v2711 = vadd.f32 0.0, %v2710
    %v2712 = vpop.f32.mrf.mxu0
    %2713 = vmatprep.mubr.f32.mxu0 0.0
    %2714 = vmatmul.mubr.f32.gmra.mxu0 %v2636
    %v2715 = vpop.f32.mrf.mxu0
    %v2716 = vadd.f32 0.0, %v2715
    %v2717 = vpop.f32.mrf.mxu0
    %2718 = vmatprep.mubr.f32.mxu0 0.0
    %2719 = vmatmul.mubr.f32.gmra.mxu0 %v2639
    %v2720 = vpop.f32.mrf.mxu0
    %v2721 = vadd.f32 0.0, %v2720
    %v2722 = vpop.f32.mrf.mxu0
    %2723 = vmatprep.mubr.f32.mxu0 0.0
    %2724 = vmatmul.mubr.f32.gmra.mxu0 %v2642
    %v2725 = vpop.f32.mrf.mxu0
    %v2726 = vadd.f32 0.0, %v2725
    %v2727 = vpop.f32.mrf.mxu0
    %2728 = vdwg.mxu0
    %v2729 = vadd.f32 %v2628, %v2711
    %v2730 = vadd.f32 %v2629, %v2716
    %v2731 = vadd.f32 %v2630, %v2721
    %v2732 = vadd.f32 %v2631, %v2726
    %v2734 = vsel %vm474, %v2495, 0
    %v2737 = vsel %vm474, %v2496, 0
    %v2740 = vsel %vm474, %v2497, 0
    %v2743 = vsel %vm474, %v2498, 0
    %2745 = vmatprep.subr.mxu0 0.0
    %2746 = vmatpush1.msra.mxu0 0.0
    %2747 = vmatprep.subr.mxu0 0.0
    %2748 = vmatpush1.msra.mxu0 0.0
    %2749 = vmatprep.subr.mxu0 0.0
    %2750 = vmatpush1.msra.mxu0 0.0
    %2751 = vmatprep.subr.mxu0 0.0
    %2752 = vmatpush1.msra.mxu0 0.0
    %2753 = vmatprep.subr.mxu0 0.0
    %2754 = vmatpush1.msra.mxu0 0.0
    %2755 = vmatprep.subr.mxu0 0.0
    %2756 = vmatpush1.msra.mxu0 0.0
    %2757 = vmatprep.subr.mxu0 0.0
    %2758 = vmatpush1.msra.mxu0 0.0
    %2759 = vmatprep.subr.mxu0 0.0
    %2760 = vmatpush1.msra.mxu0 0.0
    %2761 = vmatprep.subr.mxu0 0.0
    %2762 = vmatpush1.msra.mxu0 0.0
    %2763 = vmatprep.subr.mxu0 0.0
    %2764 = vmatpush1.msra.mxu0 0.0
    %2765 = vmatprep.subr.mxu0 0.0
    %2766 = vmatpush1.msra.mxu0 0.0
    %2767 = vmatprep.subr.mxu0 0.0
    %2768 = vmatpush1.msra.mxu0 0.0
    %2769 = vmatprep.subr.mxu0 0.0
    %2770 = vmatpush1.msra.mxu0 0.0
    %2771 = vmatprep.subr.mxu0 0.0
    %2772 = vmatpush1.msra.mxu0 0.0
    %2773 = vmatprep.subr.mxu0 0.0
    %2774 = vmatpush1.msra.mxu0 %v2524
    %2775 = vmatprep.subr.mxu0 0.0
    %2776 = vmatpush1.msra.mxu0 %v2523
    %2777 = vmatprep.subr.mxu0 0.0
    %2778 = vmatpush2.msra.mxu0 0.0
    %2779 = vmatprep.subr.mxu0 0.0
    %2780 = vmatpush2.msra.mxu0 0.0
    %2781 = vmatprep.subr.mxu0 0.0
    %2782 = vmatpush2.msra.mxu0 0.0
    %2783 = vmatprep.subr.mxu0 0.0
    %2784 = vmatpush2.msra.mxu0 0.0
    %2785 = vmatprep.subr.mxu0 0.0
    %2786 = vmatpush2.msra.mxu0 0.0
    %2787 = vmatprep.subr.mxu0 0.0
    %2788 = vmatpush2.msra.mxu0 0.0
    %2789 = vmatprep.subr.mxu0 0.0
    %2790 = vmatpush2.msra.mxu0 0.0
    %2791 = vmatprep.subr.mxu0 0.0
    %2792 = vmatpush2.msra.mxu0 0.0
    %2793 = vmatprep.subr.mxu0 0.0
    %2794 = vmatpush2.msra.mxu0 0.0
    %2795 = vmatprep.subr.mxu0 0.0
    %2796 = vmatpush2.msra.mxu0 0.0
    %2797 = vmatprep.subr.mxu0 0.0
    %2798 = vmatpush2.msra.mxu0 0.0
    %2799 = vmatprep.subr.mxu0 0.0
    %2800 = vmatpush2.msra.mxu0 0.0
    %2801 = vmatprep.subr.mxu0 0.0
    %2802 = vmatpush2.msra.mxu0 0.0
    %2803 = vmatprep.subr.mxu0 0.0
    %2804 = vmatpush2.msra.mxu0 0.0
    %2805 = vmatprep.subr.mxu0 0.0
    %2806 = vmatpush2.msra.mxu0 0.0
    %2807 = vmatprep.subr.mxu0 0.0
    %2808 = vmatpush2.msra.mxu0 0.0
    %2809 = vmatprep.mubr.f32.mxu0 0.0
    %2810 = vmatmul.mubr.f32.gmra.mxu0 %v2734
    %v2811 = vpop.f32.mrf.mxu0
    %v2812 = vadd.f32 0.0, %v2811
    %v2813 = vpop.f32.mrf.mxu0
    %2814 = vmatprep.mubr.f32.mxu0 0.0
    %2815 = vmatmul.mubr.f32.gmra.mxu0 %v2737
    %v2816 = vpop.f32.mrf.mxu0
    %v2817 = vadd.f32 0.0, %v2816
    %v2818 = vpop.f32.mrf.mxu0
    %2819 = vmatprep.mubr.f32.mxu0 0.0
    %2820 = vmatmul.mubr.f32.gmra.mxu0 %v2740
    %v2821 = vpop.f32.mrf.mxu0
    %v2822 = vadd.f32 0.0, %v2821
    %v2823 = vpop.f32.mrf.mxu0
    %2824 = vmatprep.mubr.f32.mxu0 0.0
    %2825 = vmatmul.mubr.f32.gmra.mxu0 %v2743
    %v2826 = vpop.f32.mrf.mxu0
    %v2827 = vadd.f32 0.0, %v2826
    %v2828 = vpop.f32.mrf.mxu0
    %2829 = vdwg.mxu0
    %v2830 = vadd.f32 %v2729, %v2812
    %v2831 = vadd.f32 %v2730, %v2817
    %v2832 = vadd.f32 %v2731, %v2822
    %v2833 = vadd.f32 %v2732, %v2827
    %v2835 = vsel %vm474, %v2499, 0
    %v2838 = vsel %vm474, %v2500, 0
    %v2841 = vsel %vm474, %v2501, 0
    %v2844 = vsel %vm474, %v2502, 0
    %2846 = vmatprep.subr.mxu0 0.0
    %2847 = vmatpush1.msra.mxu0 0.0
    %2848 = vmatprep.subr.mxu0 0.0
    %2849 = vmatpush1.msra.mxu0 0.0
    %2850 = vmatprep.subr.mxu0 0.0
    %2851 = vmatpush1.msra.mxu0 0.0
    %2852 = vmatprep.subr.mxu0 0.0
    %2853 = vmatpush1.msra.mxu0 0.0
    %2854 = vmatprep.subr.mxu0 0.0
    %2855 = vmatpush1.msra.mxu0 0.0
    %2856 = vmatprep.subr.mxu0 0.0
    %2857 = vmatpush1.msra.mxu0 0.0
    %2858 = vmatprep.subr.mxu0 0.0
    %2859 = vmatpush1.msra.mxu0 0.0
    %2860 = vmatprep.subr.mxu0 0.0
    %2861 = vmatpush1.msra.mxu0 0.0
    %2862 = vmatprep.subr.mxu0 0.0
    %2863 = vmatpush1.msra.mxu0 0.0
    %2864 = vmatprep.subr.mxu0 0.0
    %2865 = vmatpush1.msra.mxu0 0.0
    %2866 = vmatprep.subr.mxu0 0.0
    %2867 = vmatpush1.msra.mxu0 0.0
    %2868 = vmatprep.subr.mxu0 0.0
    %2869 = vmatpush1.msra.mxu0 0.0
    %2870 = vmatprep.subr.mxu0 0.0
    %2871 = vmatpush1.msra.mxu0 0.0
    %2872 = vmatprep.subr.mxu0 0.0
    %2873 = vmatpush1.msra.mxu0 0.0
    %2874 = vmatprep.subr.mxu0 0.0
    %2875 = vmatpush1.msra.mxu0 %v2526
    %2876 = vmatprep.subr.mxu0 0.0
    %2877 = vmatpush1.msra.mxu0 %v2525
    %2878 = vmatprep.subr.mxu0 0.0
    %2879 = vmatpush2.msra.mxu0 0.0
    %2880 = vmatprep.subr.mxu0 0.0
    %2881 = vmatpush2.msra.mxu0 0.0
    %2882 = vmatprep.subr.mxu0 0.0
    %2883 = vmatpush2.msra.mxu0 0.0
    %2884 = vmatprep.subr.mxu0 0.0
    %2885 = vmatpush2.msra.mxu0 0.0
    %2886 = vmatprep.subr.mxu0 0.0
    %2887 = vmatpush2.msra.mxu0 0.0
    %2888 = vmatprep.subr.mxu0 0.0
    %2889 = vmatpush2.msra.mxu0 0.0
    %2890 = vmatprep.subr.mxu0 0.0
    %2891 = vmatpush2.msra.mxu0 0.0
    %2892 = vmatprep.subr.mxu0 0.0
    %2893 = vmatpush2.msra.mxu0 0.0
    %2894 = vmatprep.subr.mxu0 0.0
    %2895 = vmatpush2.msra.mxu0 0.0
    %2896 = vmatprep.subr.mxu0 0.0
    %2897 = vmatpush2.msra.mxu0 0.0
    %2898 = vmatprep.subr.mxu0 0.0
    %2899 = vmatpush2.msra.mxu0 0.0
    %2900 = vmatprep.subr.mxu0 0.0
    %2901 = vmatpush2.msra.mxu0 0.0
    %2902 = vmatprep.subr.mxu0 0.0
    %2903 = vmatpush2.msra.mxu0 0.0
    %2904 = vmatprep.subr.mxu0 0.0
    %2905 = vmatpush2.msra.mxu0 0.0
    %2906 = vmatprep.subr.mxu0 0.0
    %2907 = vmatpush2.msra.mxu0 0.0
    %2908 = vmatprep.subr.mxu0 0.0
    %2909 = vmatpush2.msra.mxu0 0.0
    %2910 = vmatprep.mubr.f32.mxu0 0.0
    %2911 = vmatmul.mubr.f32.gmra.mxu0 %v2835
    %v2912 = vpop.f32.mrf.mxu0
    %v2913 = vadd.f32 0.0, %v2912
    %v2914 = vpop.f32.mrf.mxu0
    %2915 = vmatprep.mubr.f32.mxu0 0.0
    %2916 = vmatmul.mubr.f32.gmra.mxu0 %v2838
    %v2917 = vpop.f32.mrf.mxu0
    %v2918 = vadd.f32 0.0, %v2917
    %v2919 = vpop.f32.mrf.mxu0
    %2920 = vmatprep.mubr.f32.mxu0 0.0
    %2921 = vmatmul.mubr.f32.gmra.mxu0 %v2841
    %v2922 = vpop.f32.mrf.mxu0
    %v2923 = vadd.f32 0.0, %v2922
    %v2924 = vpop.f32.mrf.mxu0
    %2925 = vmatprep.mubr.f32.mxu0 0.0
    %2926 = vmatmul.mubr.f32.gmra.mxu0 %v2844
    %v2927 = vpop.f32.mrf.mxu0
    %v2928 = vadd.f32 0.0, %v2927
    %v2929 = vpop.f32.mrf.mxu0
    %2930 = vdwg.mxu0
    %v2931 = vadd.f32 %v2830, %v2913
    %v2932 = vadd.f32 %v2831, %v2918
    %v2933 = vadd.f32 %v2832, %v2923
    %v2934 = vadd.f32 %v2833, %v2928
    %v2936 = vsel %vm474, %v2503, 0
    %v2939 = vsel %vm474, %v2504, 0
    %v2942 = vsel %vm474, %v2505, 0
    %v2945 = vsel %vm474, %v2506, 0
    %2947 = vmatprep.subr.mxu0 0.0
    %2948 = vmatpush1.msra.mxu0 0.0
    %2949 = vmatprep.subr.mxu0 0.0
    %2950 = vmatpush1.msra.mxu0 0.0
    %2951 = vmatprep.subr.mxu0 0.0
    %2952 = vmatpush1.msra.mxu0 0.0
    %2953 = vmatprep.subr.mxu0 0.0
    %2954 = vmatpush1.msra.mxu0 0.0
    %2955 = vmatprep.subr.mxu0 0.0
    %2956 = vmatpush1.msra.mxu0 0.0
    %2957 = vmatprep.subr.mxu0 0.0
    %2958 = vmatpush1.msra.mxu0 0.0
    %2959 = vmatprep.subr.mxu0 0.0
    %2960 = vmatpush1.msra.mxu0 0.0
    %2961 = vmatprep.subr.mxu0 0.0
    %2962 = vmatpush1.msra.mxu0 0.0
    %2963 = vmatprep.subr.mxu0 0.0
    %2964 = vmatpush1.msra.mxu0 0.0
    %2965 = vmatprep.subr.mxu0 0.0
    %2966 = vmatpush1.msra.mxu0 0.0
    %2967 = vmatprep.subr.mxu0 0.0
    %2968 = vmatpush1.msra.mxu0 0.0
    %2969 = vmatprep.subr.mxu0 0.0
    %2970 = vmatpush1.msra.mxu0 0.0
    %2971 = vmatprep.subr.mxu0 0.0
    %2972 = vmatpush1.msra.mxu0 0.0
    %2973 = vmatprep.subr.mxu0 0.0
    %2974 = vmatpush1.msra.mxu0 0.0
    %2975 = vmatprep.subr.mxu0 0.0
    %2976 = vmatpush1.msra.mxu0 %v2520
    %2977 = vmatprep.subr.mxu0 0.0
    %2978 = vmatpush1.msra.mxu0 %v2519
    %2979 = vmatprep.subr.mxu0 0.0
    %2980 = vmatpush2.msra.mxu0 0.0
    %2981 = vmatprep.subr.mxu0 0.0
    %2982 = vmatpush2.msra.mxu0 0.0
    %2983 = vmatprep.subr.mxu0 0.0
    %2984 = vmatpush2.msra.mxu0 0.0
    %2985 = vmatprep.subr.mxu0 0.0
    %2986 = vmatpush2.msra.mxu0 0.0
    %2987 = vmatprep.subr.mxu0 0.0
    %2988 = vmatpush2.msra.mxu0 0.0
    %2989 = vmatprep.subr.mxu0 0.0
    %2990 = vmatpush2.msra.mxu0 0.0
    %2991 = vmatprep.subr.mxu0 0.0
    %2992 = vmatpush2.msra.mxu0 0.0
    %2993 = vmatprep.subr.mxu0 0.0
    %2994 = vmatpush2.msra.mxu0 0.0
    %2995 = vmatprep.subr.mxu0 0.0
    %2996 = vmatpush2.msra.mxu0 0.0
    %2997 = vmatprep.subr.mxu0 0.0
    %2998 = vmatpush2.msra.mxu0 0.0
    %2999 = vmatprep.subr.mxu0 0.0
    %3000 = vmatpush2.msra.mxu0 0.0
    %3001 = vmatprep.subr.mxu0 0.0
    %3002 = vmatpush2.msra.mxu0 0.0
    %3003 = vmatprep.subr.mxu0 0.0
    %3004 = vmatpush2.msra.mxu0 0.0
    %3005 = vmatprep.subr.mxu0 0.0
    %3006 = vmatpush2.msra.mxu0 0.0
    %3007 = vmatprep.subr.mxu0 0.0
    %3008 = vmatpush2.msra.mxu0 0.0
    %3009 = vmatprep.subr.mxu0 0.0
    %3010 = vmatpush2.msra.mxu0 0.0
    %3011 = vmatprep.mubr.f32.mxu0 0.0
    %3012 = vmatmul.mubr.f32.gmra.mxu0 %v2936
    %v3013 = vpop.f32.mrf.mxu0
    %v3014 = vadd.f32 0.0, %v3013
    %v3015 = vpop.f32.mrf.mxu0
    %3016 = vmatprep.mubr.f32.mxu0 0.0
    %3017 = vmatmul.mubr.f32.gmra.mxu0 %v2939
    %v3018 = vpop.f32.mrf.mxu0
    %v3019 = vadd.f32 0.0, %v3018
    %v3020 = vpop.f32.mrf.mxu0
    %3021 = vmatprep.mubr.f32.mxu0 0.0
    %3022 = vmatmul.mubr.f32.gmra.mxu0 %v2942
    %v3023 = vpop.f32.mrf.mxu0
    %v3024 = vadd.f32 0.0, %v3023
    %v3025 = vpop.f32.mrf.mxu0
    %3026 = vmatprep.mubr.f32.mxu0 0.0
    %3027 = vmatmul.mubr.f32.gmra.mxu0 %v2945
    %v3028 = vpop.f32.mrf.mxu0
    %v3029 = vadd.f32 0.0, %v3028
    %v3030 = vpop.f32.mrf.mxu0
    %3031 = vdwg.mxu0
    %v3032 = vadd.f32 %v2627, %v3014
    %v3033 = vadd.f32 %v2627, %v3019
    %v3034 = vadd.f32 %v2627, %v3024
    %v3035 = vadd.f32 %v2627, %v3029
    %v3037 = vsel %vm474, %v2507, 0
    %v3040 = vsel %vm474, %v2508, 0
    %v3043 = vsel %vm474, %v2509, 0
    %v3046 = vsel %vm474, %v2510, 0
    %3048 = vmatprep.subr.mxu0 0.0
    %3049 = vmatpush1.msra.mxu0 0.0
    %3050 = vmatprep.subr.mxu0 0.0
    %3051 = vmatpush1.msra.mxu0 0.0
    %3052 = vmatprep.subr.mxu0 0.0
    %3053 = vmatpush1.msra.mxu0 0.0
    %3054 = vmatprep.subr.mxu0 0.0
    %3055 = vmatpush1.msra.mxu0 0.0
    %3056 = vmatprep.subr.mxu0 0.0
    %3057 = vmatpush1.msra.mxu0 0.0
    %3058 = vmatprep.subr.mxu0 0.0
    %3059 = vmatpush1.msra.mxu0 0.0
    %3060 = vmatprep.subr.mxu0 0.0
    %3061 = vmatpush1.msra.mxu0 0.0
    %3062 = vmatprep.subr.mxu0 0.0
    %3063 = vmatpush1.msra.mxu0 0.0
    %3064 = vmatprep.subr.mxu0 0.0
    %3065 = vmatpush1.msra.mxu0 0.0
    %3066 = vmatprep.subr.mxu0 0.0
    %3067 = vmatpush1.msra.mxu0 0.0
    %3068 = vmatprep.subr.mxu0 0.0
    %3069 = vmatpush1.msra.mxu0 0.0
    %3070 = vmatprep.subr.mxu0 0.0
    %3071 = vmatpush1.msra.mxu0 0.0
    %3072 = vmatprep.subr.mxu0 0.0
    %3073 = vmatpush1.msra.mxu0 0.0
    %3074 = vmatprep.subr.mxu0 0.0
    %3075 = vmatpush1.msra.mxu0 0.0
    %3076 = vmatprep.subr.mxu0 0.0
    %3077 = vmatpush1.msra.mxu0 %v2522
    %3078 = vmatprep.subr.mxu0 0.0
    %3079 = vmatpush1.msra.mxu0 %v2521
    %3080 = vmatprep.subr.mxu0 0.0
    %3081 = vmatpush2.msra.mxu0 0.0
    %3082 = vmatprep.subr.mxu0 0.0
    %3083 = vmatpush2.msra.mxu0 0.0
    %3084 = vmatprep.subr.mxu0 0.0
    %3085 = vmatpush2.msra.mxu0 0.0
    %3086 = vmatprep.subr.mxu0 0.0
    %3087 = vmatpush2.msra.mxu0 0.0
    %3088 = vmatprep.subr.mxu0 0.0
    %3089 = vmatpush2.msra.mxu0 0.0
    %3090 = vmatprep.subr.mxu0 0.0
    %3091 = vmatpush2.msra.mxu0 0.0
    %3092 = vmatprep.subr.mxu0 0.0
    %3093 = vmatpush2.msra.mxu0 0.0
    %3094 = vmatprep.subr.mxu0 0.0
    %3095 = vmatpush2.msra.mxu0 0.0
    %3096 = vmatprep.subr.mxu0 0.0
    %3097 = vmatpush2.msra.mxu0 0.0
    %3098 = vmatprep.subr.mxu0 0.0
    %3099 = vmatpush2.msra.mxu0 0.0
    %3100 = vmatprep.subr.mxu0 0.0
    %3101 = vmatpush2.msra.mxu0 0.0
    %3102 = vmatprep.subr.mxu0 0.0
    %3103 = vmatpush2.msra.mxu0 0.0
    %3104 = vmatprep.subr.mxu0 0.0
    %3105 = vmatpush2.msra.mxu0 0.0
    %3106 = vmatprep.subr.mxu0 0.0
    %3107 = vmatpush2.msra.mxu0 0.0
    %3108 = vmatprep.subr.mxu0 0.0
    %3109 = vmatpush2.msra.mxu0 0.0
    %3110 = vmatprep.subr.mxu0 0.0
    %3111 = vmatpush2.msra.mxu0 0.0
    %3112 = vmatprep.mubr.f32.mxu0 0.0
    %3113 = vmatmul.mubr.f32.gmra.mxu0 %v3037
    %v3114 = vpop.f32.mrf.mxu0
    %v3115 = vadd.f32 0.0, %v3114
    %v3116 = vpop.f32.mrf.mxu0
    %3117 = vmatprep.mubr.f32.mxu0 0.0
    %3118 = vmatmul.mubr.f32.gmra.mxu0 %v3040
    %v3119 = vpop.f32.mrf.mxu0
    %v3120 = vadd.f32 0.0, %v3119
    %v3121 = vpop.f32.mrf.mxu0
    %3122 = vmatprep.mubr.f32.mxu0 0.0
    %3123 = vmatmul.mubr.f32.gmra.mxu0 %v3043
    %v3124 = vpop.f32.mrf.mxu0
    %v3125 = vadd.f32 0.0, %v3124
    %v3126 = vpop.f32.mrf.mxu0
    %3127 = vmatprep.mubr.f32.mxu0 0.0
    %3128 = vmatmul.mubr.f32.gmra.mxu0 %v3046
    %v3129 = vpop.f32.mrf.mxu0
    %v3130 = vadd.f32 0.0, %v3129
    %v3131 = vpop.f32.mrf.mxu0
    %3132 = vdwg.mxu0
    %v3133 = vadd.f32 %v3032, %v3115
    %v3134 = vadd.f32 %v3033, %v3120
    %v3135 = vadd.f32 %v3034, %v3125
    %v3136 = vadd.f32 %v3035, %v3130
    %v3138 = vsel %vm474, %v2511, 0
    %v3141 = vsel %vm474, %v2512, 0
    %v3144 = vsel %vm474, %v2513, 0
    %v3147 = vsel %vm474, %v2514, 0
    %3149 = vmatprep.subr.mxu0 0.0
    %3150 = vmatpush1.msra.mxu0 0.0
    %3151 = vmatprep.subr.mxu0 0.0
    %3152 = vmatpush1.msra.mxu0 0.0
    %3153 = vmatprep.subr.mxu0 0.0
    %3154 = vmatpush1.msra.mxu0 0.0
    %3155 = vmatprep.subr.mxu0 0.0
    %3156 = vmatpush1.msra.mxu0 0.0
    %3157 = vmatprep.subr.mxu0 0.0
    %3158 = vmatpush1.msra.mxu0 0.0
    %3159 = vmatprep.subr.mxu0 0.0
    %3160 = vmatpush1.msra.mxu0 0.0
    %3161 = vmatprep.subr.mxu0 0.0
    %3162 = vmatpush1.msra.mxu0 0.0
    %3163 = vmatprep.subr.mxu0 0.0
    %3164 = vmatpush1.msra.mxu0 0.0
    %3165 = vmatprep.subr.mxu0 0.0
    %3166 = vmatpush1.msra.mxu0 0.0
    %3167 = vmatprep.subr.mxu0 0.0
    %3168 = vmatpush1.msra.mxu0 0.0
    %3169 = vmatprep.subr.mxu0 0.0
    %3170 = vmatpush1.msra.mxu0 0.0
    %3171 = vmatprep.subr.mxu0 0.0
    %3172 = vmatpush1.msra.mxu0 0.0
    %3173 = vmatprep.subr.mxu0 0.0
    %3174 = vmatpush1.msra.mxu0 0.0
    %3175 = vmatprep.subr.mxu0 0.0
    %3176 = vmatpush1.msra.mxu0 0.0
    %3177 = vmatprep.subr.mxu0 0.0
    %3178 = vmatpush1.msra.mxu0 %v2524
    %3179 = vmatprep.subr.mxu0 0.0
    %3180 = vmatpush1.msra.mxu0 %v2523
    %3181 = vmatprep.subr.mxu0 0.0
    %3182 = vmatpush2.msra.mxu0 0.0
    %3183 = vmatprep.subr.mxu0 0.0
    %3184 = vmatpush2.msra.mxu0 0.0
    %3185 = vmatprep.subr.mxu0 0.0
    %3186 = vmatpush2.msra.mxu0 0.0
    %3187 = vmatprep.subr.mxu0 0.0
    %3188 = vmatpush2.msra.mxu0 0.0
    %3189 = vmatprep.subr.mxu0 0.0
    %3190 = vmatpush2.msra.mxu0 0.0
    %3191 = vmatprep.subr.mxu0 0.0
    %3192 = vmatpush2.msra.mxu0 0.0
    %3193 = vmatprep.subr.mxu0 0.0
    %3194 = vmatpush2.msra.mxu0 0.0
    %3195 = vmatprep.subr.mxu0 0.0
    %3196 = vmatpush2.msra.mxu0 0.0
    %3197 = vmatprep.subr.mxu0 0.0
    %3198 = vmatpush2.msra.mxu0 0.0
    %3199 = vmatprep.subr.mxu0 0.0
    %3200 = vmatpush2.msra.mxu0 0.0
    %3201 = vmatprep.subr.mxu0 0.0
    %3202 = vmatpush2.msra.mxu0 0.0
    %3203 = vmatprep.subr.mxu0 0.0
    %3204 = vmatpush2.msra.mxu0 0.0
    %3205 = vmatprep.subr.mxu0 0.0
    %3206 = vmatpush2.msra.mxu0 0.0
    %3207 = vmatprep.subr.mxu0 0.0
    %3208 = vmatpush2.msra.mxu0 0.0
    %3209 = vmatprep.subr.mxu0 0.0
    %3210 = vmatpush2.msra.mxu0 0.0
    %3211 = vmatprep.subr.mxu0 0.0
    %3212 = vmatpush2.msra.mxu0 0.0
    %3213 = vmatprep.mubr.f32.mxu0 0.0
    %3214 = vmatmul.mubr.f32.gmra.mxu0 %v3138
    %v3215 = vpop.f32.mrf.mxu0
    %v3216 = vadd.f32 0.0, %v3215
    %v3217 = vpop.f32.mrf.mxu0
    %3218 = vmatprep.mubr.f32.mxu0 0.0
    %3219 = vmatmul.mubr.f32.gmra.mxu0 %v3141
    %v3220 = vpop.f32.mrf.mxu0
    %v3221 = vadd.f32 0.0, %v3220
    %v3222 = vpop.f32.mrf.mxu0
    %3223 = vmatprep.mubr.f32.mxu0 0.0
    %3224 = vmatmul.mubr.f32.gmra.mxu0 %v3144
    %v3225 = vpop.f32.mrf.mxu0
    %v3226 = vadd.f32 0.0, %v3225
    %v3227 = vpop.f32.mrf.mxu0
    %3228 = vmatprep.mubr.f32.mxu0 0.0
    %3229 = vmatmul.mubr.f32.gmra.mxu0 %v3147
    %v3230 = vpop.f32.mrf.mxu0
    %v3231 = vadd.f32 0.0, %v3230
    %v3232 = vpop.f32.mrf.mxu0
    %3233 = vdwg.mxu0
    %v3234 = vadd.f32 %v3133, %v3216
    %v3235 = vadd.f32 %v3134, %v3221
    %v3236 = vadd.f32 %v3135, %v3226
    %v3237 = vadd.f32 %v3136, %v3231
    %v3239 = vsel %vm474, %v2515, 0
    %v3242 = vsel %vm474, %v2516, 0
    %v3245 = vsel %vm474, %v2517, 0
    %v3248 = vsel %vm474, %v2518, 0
    %3250 = vmatprep.subr.mxu0 0.0
    %3251 = vmatpush1.msra.mxu0 0.0
    %3252 = vmatprep.subr.mxu0 0.0
    %3253 = vmatpush1.msra.mxu0 0.0
    %3254 = vmatprep.subr.mxu0 0.0
    %3255 = vmatpush1.msra.mxu0 0.0
    %3256 = vmatprep.subr.mxu0 0.0
    %3257 = vmatpush1.msra.mxu0 0.0
    %3258 = vmatprep.subr.mxu0 0.0
    %3259 = vmatpush1.msra.mxu0 0.0
    %3260 = vmatprep.subr.mxu0 0.0
    %3261 = vmatpush1.msra.mxu0 0.0
    %3262 = vmatprep.subr.mxu0 0.0
    %3263 = vmatpush1.msra.mxu0 0.0
    %3264 = vmatprep.subr.mxu0 0.0
    %3265 = vmatpush1.msra.mxu0 0.0
    %3266 = vmatprep.subr.mxu0 0.0
    %3267 = vmatpush1.msra.mxu0 0.0
    %3268 = vmatprep.subr.mxu0 0.0
    %3269 = vmatpush1.msra.mxu0 0.0
    %3270 = vmatprep.subr.mxu0 0.0
    %3271 = vmatpush1.msra.mxu0 0.0
    %3272 = vmatprep.subr.mxu0 0.0
    %3273 = vmatpush1.msra.mxu0 0.0
    %3274 = vmatprep.subr.mxu0 0.0
    %3275 = vmatpush1.msra.mxu0 0.0
    %3276 = vmatprep.subr.mxu0 0.0
    %3277 = vmatpush1.msra.mxu0 0.0
    %3278 = vmatprep.subr.mxu0 0.0
    %3279 = vmatpush1.msra.mxu0 %v2526
    %3280 = vmatprep.subr.mxu0 0.0
    %3281 = vmatpush1.msra.mxu0 %v2525
    %3282 = vmatprep.subr.mxu0 0.0
    %3283 = vmatpush2.msra.mxu0 0.0
    %3284 = vmatprep.subr.mxu0 0.0
    %3285 = vmatpush2.msra.mxu0 0.0
    %3286 = vmatprep.subr.mxu0 0.0
    %3287 = vmatpush2.msra.mxu0 0.0
    %3288 = vmatprep.subr.mxu0 0.0
    %3289 = vmatpush2.msra.mxu0 0.0
    %3290 = vmatprep.subr.mxu0 0.0
    %3291 = vmatpush2.msra.mxu0 0.0
    %3292 = vmatprep.subr.mxu0 0.0
    %3293 = vmatpush2.msra.mxu0 0.0
    %3294 = vmatprep.subr.mxu0 0.0
    %3295 = vmatpush2.msra.mxu0 0.0
    %3296 = vmatprep.subr.mxu0 0.0
    %3297 = vmatpush2.msra.mxu0 0.0
    %3298 = vmatprep.subr.mxu0 0.0
    %3299 = vmatpush2.msra.mxu0 0.0
    %3300 = vmatprep.subr.mxu0 0.0
    %3301 = vmatpush2.msra.mxu0 0.0
    %3302 = vmatprep.subr.mxu0 0.0
    %3303 = vmatpush2.msra.mxu0 0.0
    %3304 = vmatprep.subr.mxu0 0.0
    %3305 = vmatpush2.msra.mxu0 0.0
    %3306 = vmatprep.subr.mxu0 0.0
    %3307 = vmatpush2.msra.mxu0 0.0
    %3308 = vmatprep.subr.mxu0 0.0
    %3309 = vmatpush2.msra.mxu0 0.0
    %3310 = vmatprep.subr.mxu0 0.0
    %3311 = vmatpush2.msra.mxu0 0.0
    %3312 = vmatprep.subr.mxu0 0.0
    %3313 = vmatpush2.msra.mxu0 0.0
    %3314 = vmatprep.mubr.f32.mxu0 0.0
    %3315 = vmatmul.mubr.f32.gmra.mxu0 %v3239
    %v3316 = vpop.f32.mrf.mxu0
    %v3317 = vadd.f32 0.0, %v3316
    %v3318 = vpop.f32.mrf.mxu0
    %3319 = vmatprep.mubr.f32.mxu0 0.0
    %3320 = vmatmul.mubr.f32.gmra.mxu0 %v3242
    %v3321 = vpop.f32.mrf.mxu0
    %v3322 = vadd.f32 0.0, %v3321
    %v3323 = vpop.f32.mrf.mxu0
    %3324 = vmatprep.mubr.f32.mxu0 0.0
    %3325 = vmatmul.mubr.f32.gmra.mxu0 %v3245
    %v3326 = vpop.f32.mrf.mxu0
    %v3327 = vadd.f32 0.0, %v3326
    %v3328 = vpop.f32.mrf.mxu0
    %3329 = vmatprep.mubr.f32.mxu0 0.0
    %3330 = vmatmul.mubr.f32.gmra.mxu0 %v3248
    %v3331 = vpop.f32.mrf.mxu0
    %v3332 = vadd.f32 0.0, %v3331
    %v3333 = vpop.f32.mrf.mxu0
    %3334 = vdwg.mxu0
    %v3335 = vadd.f32 %v3234, %v3317
    %v3336 = vadd.f32 %v3235, %v3322
    %v3337 = vadd.f32 %v3236, %v3327
    %v3338 = vadd.f32 %v3237, %v3332
    %v3339 = vadd.f32 %v54, %v2931
    %v3340 = vadd.f32 %v55, %v2932
    %v3341 = vadd.f32 %v56, %v2933
    %v3342 = vadd.f32 %v57, %v2934
    %v3343 = vadd.f32 %v58, %v3335
    %v3344 = vadd.f32 %v59, %v3336
    %v3345 = vadd.f32 %v60, %v3337
    %v3346 = vadd.f32 %v61, %v3338
    %v3347 = vsel %vm63, %v3339, 0.0
    %3348 = vadd.xlane.f32.xlu0 %v3347
    %v3349 = vpop.xlane.xlu0 %3348
    %v3350 = vsel %vm63, %v3340, 0.0
    %3351 = vadd.xlane.f32.xlu0 %v3350
    %v3352 = vpop.xlane.xlu0 %3351
    %v3353 = vsel %vm63, %v3341, 0.0
    %3354 = vadd.xlane.f32.xlu0 %v3353
    %v3355 = vpop.xlane.xlu0 %3354
    %v3356 = vsel %vm63, %v3342, 0.0
    %3357 = vadd.xlane.f32.xlu0 %v3356
    %v3358 = vpop.xlane.xlu0 %3357
    %v3359 = vsel %vm63, %v3343, 0.0
    %3360 = vadd.xlane.f32.xlu0 %v3359
    %v3361 = vpop.xlane.xlu0 %3360
    %v3362 = vsel %vm63, %v3344, 0.0
    %3363 = vadd.xlane.f32.xlu0 %v3362
    %v3364 = vpop.xlane.xlu0 %3363
    %v3365 = vsel %vm63, %v3345, 0.0
    %3366 = vadd.xlane.f32.xlu0 %v3365
    %v3367 = vpop.xlane.xlu0 %3366
    %v3368 = vsel %vm63, %v3346, 0.0
    %3369 = vadd.xlane.f32.xlu0 %v3368
    %v3370 = vpop.xlane.xlu0 %3369
    %v3371 = vmul.f32 %v3349, %v88
    %v3372 = vmul.f32 %v3352, %v88
    %v3373 = vmul.f32 %v3355, %v88
    %v3374 = vmul.f32 %v3358, %v88
    %v3375 = vmul.f32 %v3361, %v88
    %v3376 = vmul.f32 %v3364, %v88
    %v3377 = vmul.f32 %v3367, %v88
    %v3378 = vmul.f32 %v3370, %v88
    %v3379 = vsub.f32 %v3339, %v3371
    %v3380 = vsub.f32 %v3340, %v3372
    %v3381 = vsub.f32 %v3341, %v3373
    %v3382 = vsub.f32 %v3342, %v3374
    %v3383 = vsub.f32 %v3343, %v3375
    %v3384 = vsub.f32 %v3344, %v3376
    %v3385 = vsub.f32 %v3345, %v3377
    %v3386 = vsub.f32 %v3346, %v3378
    %v3387 = vmul.f32 %v3379, %v3379
    %v3388 = vmul.f32 %v3380, %v3380
    %v3389 = vmul.f32 %v3381, %v3381
    %v3390 = vmul.f32 %v3382, %v3382
    %v3391 = vmul.f32 %v3383, %v3383
    %v3392 = vmul.f32 %v3384, %v3384
    %v3393 = vmul.f32 %v3385, %v3385
    %v3394 = vmul.f32 %v3386, %v3386
    %v3395 = vsel %vm63, %v3387, 0.0
    %3396 = vadd.xlane.f32.xlu0 %v3395
    %v3397 = vpop.xlane.xlu0 %3396
    %v3398 = vsel %vm63, %v3388, 0.0
    %3399 = vadd.xlane.f32.xlu0 %v3398
    %v3400 = vpop.xlane.xlu0 %3399
    %v3401 = vsel %vm63, %v3389, 0.0
    %3402 = vadd.xlane.f32.xlu0 %v3401
    %v3403 = vpop.xlane.xlu0 %3402
    %v3404 = vsel %vm63, %v3390, 0.0
    %3405 = vadd.xlane.f32.xlu0 %v3404
    %v3406 = vpop.xlane.xlu0 %3405
    %v3407 = vsel %vm63, %v3391, 0.0
    %3408 = vadd.xlane.f32.xlu0 %v3407
    %v3409 = vpop.xlane.xlu0 %3408
    %v3410 = vsel %vm63, %v3392, 0.0
    %3411 = vadd.xlane.f32.xlu0 %v3410
    %v3412 = vpop.xlane.xlu0 %3411
    %v3413 = vsel %vm63, %v3393, 0.0
    %3414 = vadd.xlane.f32.xlu0 %v3413
    %v3415 = vpop.xlane.xlu0 %3414
    %v3416 = vsel %vm63, %v3394, 0.0
    %3417 = vadd.xlane.f32.xlu0 %v3416
    %v3418 = vpop.xlane.xlu0 %3417
    %v3419 = vmul.f32 %v3397, %v88
    %v3420 = vmul.f32 %v3400, %v88
    %v3421 = vmul.f32 %v3403, %v88
    %v3422 = vmul.f32 %v3406, %v88
    %v3423 = vmul.f32 %v3409, %v88
    %v3424 = vmul.f32 %v3412, %v88
    %v3425 = vmul.f32 %v3415, %v88
    %v3426 = vmul.f32 %v3418, %v88
    %v3427 = vadd.f32 %v3419, 1e-05
    %v3428 = vadd.f32 %v3420, 1e-05
    %v3429 = vadd.f32 %v3421, 1e-05
    %v3430 = vadd.f32 %v3422, 1e-05
    %v3431 = vadd.f32 %v3423, 1e-05
    %v3432 = vadd.f32 %v3424, 1e-05
    %v3433 = vadd.f32 %v3425, 1e-05
    %v3434 = vadd.f32 %v3426, 1e-05
    %v3435 = vrsqrt.pop %v3427
    %v3436 = vrsqrt.pop %v3428
    %v3437 = vrsqrt.pop %v3429
    %v3438 = vrsqrt.pop %v3430
    %v3439 = vrsqrt.pop %v3431
    %v3440 = vrsqrt.pop %v3432
    %v3441 = vrsqrt.pop %v3433
    %v3442 = vrsqrt.pop %v3434
    %v3443 = vmul.f32 %v3379, %v3435
    %v3444 = vmul.f32 %v3380, %v3436
    %v3445 = vmul.f32 %v3381, %v3437
    %v3446 = vmul.f32 %v3382, %v3438
    %v3447 = vmul.f32 %v3383, %v3439
    %v3448 = vmul.f32 %v3384, %v3440
    %v3449 = vmul.f32 %v3385, %v3441
    %v3450 = vmul.f32 %v3386, %v3442
    %v3451 = vlaneseq
    %v3452 = vshrl.u32 %v3451, 7
    %v3453 = vsub.s32 2, %v3452
    %v3454 = vrot.slane %v62, %v3453
    %v3455 = vmul.f32 %v3443, %v3454
    %v3456 = vmul.f32 %v3444, %v3454
    %v3457 = vmul.f32 %v3445, %v3454
    %v3458 = vmul.f32 %v3446, %v3454
    %v3459 = vmul.f32 %v3447, %v3454
    %v3460 = vmul.f32 %v3448, %v3454
    %v3461 = vmul.f32 %v3449, %v3454
    %v3462 = vmul.f32 %v3450, %v3454
    %v3463 = vlaneseq
    %v3464 = vshrl.u32 %v3463, 7
    %v3465 = vsub.s32 3, %v3464
    %v3466 = vrot.slane %v62, %v3465
    %v3467 = vadd.f32 %v3455, %v3466
    %v3468 = vadd.f32 %v3456, %v3466
    %v3469 = vadd.f32 %v3457, %v3466
    %v3470 = vadd.f32 %v3458, %v3466
    %v3471 = vadd.f32 %v3459, %v3466
    %v3472 = vadd.f32 %v3460, %v3466
    %v3473 = vadd.f32 %v3461, %v3466
    %v3474 = vadd.f32 %v3462, %v3466
    %v3475 = vpack.c.bf16 %v3468, %v3467
    %v3476 = vpack.c.bf16 %v3470, %v3469
    %v3477 = vpack.c.bf16 %v3472, %v3471
    %v3478 = vpack.c.bf16 %v3474, %v3473
    %v3479 = vld [vmem:[#allocation2] sm:$0xff]
    %v3480 = vld [vmem:[#allocation2 + $0x8] sm:$0xff]
    %v3481 = vld [vmem:[#allocation2 + $0x10] sm:$0xff]
    %v3482 = vld [vmem:[#allocation2 + $0x18] sm:$0xff]
    %v3483 = vld [vmem:[#allocation2 + $0x20] sm:$0xff]
    %v3484 = vld [vmem:[#allocation2 + $0x28] sm:$0xff]
    %v3485 = vld [vmem:[#allocation2 + $0x30] sm:$0xff]
    %v3486 = vld [vmem:[#allocation2 + $0x38] sm:$0xff]
    %v3487 = vld [vmem:[%s6] sm:$0x3]
    %v3489 = vlaneseq
    %v3490 = vshrl.u32 %v3489, 7
    %v3491 = vsub.s32 0, %v3490
    %v3492 = vrot.slane %v3487, %v3491
    %v3493 = vlaneseq
    %v3494 = vshrl.u32 %v3493, 7
    %v3495 = vsub.s32 1, %v3494
    %v3496 = vrot.slane %v3487, %v3495
    %v3507 = vunpack.c.l.b16 %v3479
    %v3508 = vunpack.c.h.b16 %v3479
    %v3509 = vunpack.c.l.b16 %v3480
    %v3510 = vunpack.c.h.b16 %v3480
    %v3511 = vunpack.c.l.b16 %v3481
    %v3512 = vunpack.c.h.b16 %v3481
    %v3513 = vunpack.c.l.b16 %v3482
    %v3514 = vunpack.c.h.b16 %v3482
    %v3515 = vunpack.c.l.b16 %v3483
    %v3516 = vunpack.c.h.b16 %v3483
    %v3517 = vunpack.c.l.b16 %v3484
    %v3518 = vunpack.c.h.b16 %v3484
    %v3519 = vunpack.c.l.b16 %v3485
    %v3520 = vunpack.c.h.b16 %v3485
    %v3521 = vunpack.c.l.b16 %v3486
    %v3522 = vunpack.c.h.b16 %v3486
    %v3523 = vpack.c.b16 %v3509, %v3507
    %v3524 = vpack.c.b16 %v3510, %v3508
    %v3525 = vpack.c.b16 %v3513, %v3511
    %v3526 = vpack.c.b16 %v3514, %v3512
    %v3527 = vpack.c.b16 %v3517, %v3515
    %v3528 = vpack.c.b16 %v3518, %v3516
    %v3529 = vpack.c.b16 %v3521, %v3519
    %v3530 = vpack.c.b16 %v3522, %v3520
    %v3540 = vsel %vm63, %v3475, 0
    %v3543 = vsel %vm63, %v3476, 0
    %v3546 = vsel %vm63, %v3477, 0
    %v3549 = vsel %vm63, %v3478, 0
    %3551 = vmatprep.subr.bf16.mxu0 0
    %3552 = vmatpush1.bf16.msra.mxu0 0
    %3553 = vmatprep.subr.bf16.mxu0 0
    %3554 = vmatpush1.bf16.msra.mxu0 0
    %3555 = vmatprep.subr.bf16.mxu0 0
    %3556 = vmatpush1.bf16.msra.mxu0 0
    %3557 = vmatprep.subr.bf16.mxu0 0
    %3558 = vmatpush1.bf16.msra.mxu0 0
    %3559 = vmatprep.subr.bf16.mxu0 %v3530
    %3560 = vmatpush1.bf16.msra.mxu0 %v3529
    %3561 = vmatprep.subr.bf16.mxu0 %v3528
    %3562 = vmatpush1.bf16.msra.mxu0 %v3527
    %3563 = vmatprep.subr.bf16.mxu0 %v3526
    %3564 = vmatpush1.bf16.msra.mxu0 %v3525
    %3565 = vmatprep.subr.bf16.mxu0 %v3524
    %3566 = vmatpush1.bf16.msra.mxu0 %v3523
    %3567 = vmatprep.subr.bf16.mxu0 0
    %3568 = vmatpush2.bf16.msra.mxu0 0
    %3569 = vmatprep.subr.bf16.mxu0 0
    %3570 = vmatpush2.bf16.msra.mxu0 0
    %3571 = vmatprep.subr.bf16.mxu0 0
    %3572 = vmatpush2.bf16.msra.mxu0 0
    %3573 = vmatprep.subr.bf16.mxu0 0
    %3574 = vmatpush2.bf16.msra.mxu0 0
    %3575 = vmatprep.subr.bf16.mxu0 0
    %3576 = vmatpush2.bf16.msra.mxu0 0
    %3577 = vmatprep.subr.bf16.mxu0 0
    %3578 = vmatpush2.bf16.msra.mxu0 0
    %3579 = vmatprep.subr.bf16.mxu0 0
    %3580 = vmatpush2.bf16.msra.mxu0 0
    %3581 = vmatprep.subr.bf16.mxu0 0
    %3582 = vmatpush2.bf16.msra.mxu0 0
    %3583 = vmatprep.mubr.bf16.mxu0 0
    %3584 = vmatmul.mubr.bf16.gmra.mxu0 %v3540
    %v3585 = vpop.f32.mrf.mxu0
    %v3586 = vadd.f32 %v3492, %v3585
    %v3587 = vpop.f32.mrf.mxu0
    %v3588 = vadd.f32 %v3496, %v3587
    %v3589 = vpop.f32.mrf.mxu0
    %v3590 = vadd.f32 %v3492, %v3589
    %v3591 = vpop.f32.mrf.mxu0
    %v3592 = vadd.f32 %v3496, %v3591
    %3593 = vmatprep.mubr.bf16.mxu0 0
    %3594 = vmatmul.mubr.bf16.gmra.mxu0 %v3543
    %v3595 = vpop.f32.mrf.mxu0
    %v3596 = vadd.f32 %v3492, %v3595
    %v3597 = vpop.f32.mrf.mxu0
    %v3598 = vadd.f32 %v3496, %v3597
    %v3599 = vpop.f32.mrf.mxu0
    %v3600 = vadd.f32 %v3492, %v3599
    %v3601 = vpop.f32.mrf.mxu0
    %v3602 = vadd.f32 %v3496, %v3601
    %3603 = vmatprep.mubr.bf16.mxu0 0
    %3604 = vmatmul.mubr.bf16.gmra.mxu0 %v3546
    %v3605 = vpop.f32.mrf.mxu0
    %v3606 = vadd.f32 %v3492, %v3605
    %v3607 = vpop.f32.mrf.mxu0
    %v3608 = vadd.f32 %v3496, %v3607
    %v3609 = vpop.f32.mrf.mxu0
    %v3610 = vadd.f32 %v3492, %v3609
    %v3611 = vpop.f32.mrf.mxu0
    %v3612 = vadd.f32 %v3496, %v3611
    %3613 = vmatprep.mubr.bf16.mxu0 0
    %3614 = vmatmul.mubr.bf16.gmra.mxu0 %v3549
    %v3615 = vpop.f32.mrf.mxu0
    %v3616 = vadd.f32 %v3492, %v3615
    %v3617 = vpop.f32.mrf.mxu0
    %v3618 = vadd.f32 %v3496, %v3617
    %v3619 = vpop.f32.mrf.mxu0
    %v3620 = vadd.f32 %v3492, %v3619
    %v3621 = vpop.f32.mrf.mxu0
    %v3622 = vadd.f32 %v3496, %v3621
    %3623 = vdwg.mxu0
    %v3624 = vmax.f32 %v3586, 0.0
    %v3625 = vmax.f32 %v3588, 0.0
    %v3626 = vmax.f32 %v3590, 0.0
    %v3627 = vmax.f32 %v3592, 0.0
    %v3628 = vmax.f32 %v3596, 0.0
    %v3629 = vmax.f32 %v3598, 0.0
    %v3630 = vmax.f32 %v3600, 0.0
    %v3631 = vmax.f32 %v3602, 0.0
    %v3632 = vmax.f32 %v3606, 0.0
    %v3633 = vmax.f32 %v3608, 0.0
    %v3634 = vmax.f32 %v3610, 0.0
    %v3635 = vmax.f32 %v3612, 0.0
    %v3636 = vmax.f32 %v3616, 0.0
    %v3637 = vmax.f32 %v3618, 0.0
    %v3638 = vmax.f32 %v3620, 0.0
    %v3639 = vmax.f32 %v3622, 0.0
    %v3640 = vpack.c.bf16 %v3626, %v3624
    %v3641 = vpack.c.bf16 %v3627, %v3625
    %v3642 = vpack.c.bf16 %v3630, %v3628
    %v3643 = vpack.c.bf16 %v3631, %v3629
    %v3644 = vpack.c.bf16 %v3634, %v3632
    %v3645 = vpack.c.bf16 %v3635, %v3633
    %v3646 = vpack.c.bf16 %v3638, %v3636
    %v3647 = vpack.c.bf16 %v3639, %v3637
    %v3648 = vld [vmem:[%s4] sm:$0xf]
    %v3649 = vld [vmem:[%s4 + $0x4] sm:$0xf]
    %v3650 = vld [vmem:[%s4 + $0x8] sm:$0xf]
    %v3651 = vld [vmem:[%s4 + $0xc] sm:$0xf]
    %v3652 = vld [vmem:[%s4 + $0x10] sm:$0xf]
    %v3653 = vld [vmem:[%s4 + $0x14] sm:$0xf]
    %v3654 = vld [vmem:[%s4 + $0x18] sm:$0xf]
    %v3655 = vld [vmem:[%s4 + $0x1c] sm:$0xf]
    %v3656 = vld [vmem:[%s4 + $0x20] sm:$0xf]
    %v3657 = vld [vmem:[%s4 + $0x24] sm:$0xf]
    %v3658 = vld [vmem:[%s4 + $0x28] sm:$0xf]
    %v3659 = vld [vmem:[%s4 + $0x2c] sm:$0xf]
    %v3660 = vld [vmem:[%s4 + $0x30] sm:$0xf]
    %v3661 = vld [vmem:[%s4 + $0x34] sm:$0xf]
    %v3662 = vld [vmem:[%s4 + $0x38] sm:$0xf]
    %v3663 = vld [vmem:[%s4 + $0x3c] sm:$0xf]
    %v3664 = vld [vmem:[%s4 + $0x40] sm:$0xf]
    %v3665 = vld [vmem:[%s4 + $0x44] sm:$0xf]
    %v3666 = vld [vmem:[%s4 + $0x48] sm:$0xf]
    %v3667 = vld [vmem:[%s4 + $0x4c] sm:$0xf]
    %v3668 = vld [vmem:[%s4 + $0x50] sm:$0xf]
    %v3669 = vld [vmem:[%s4 + $0x54] sm:$0xf]
    %v3670 = vld [vmem:[%s4 + $0x58] sm:$0xf]
    %v3671 = vld [vmem:[%s4 + $0x5c] sm:$0xf]
    %v3672 = vld [vmem:[%s4 + $0x60] sm:$0xf]
    %v3673 = vld [vmem:[%s4 + $0x64] sm:$0xf]
    %v3674 = vld [vmem:[%s4 + $0x68] sm:$0xf]
    %v3675 = vld [vmem:[%s4 + $0x6c] sm:$0xf]
    %v3676 = vld [vmem:[%s4 + $0x70] sm:$0xf]
    %v3677 = vld [vmem:[%s4 + $0x74] sm:$0xf]
    %v3678 = vld [vmem:[%s4 + $0x78] sm:$0xf]
    %v3679 = vld [vmem:[%s4 + $0x7c] sm:$0xf]
    %v3680 = vlaneseq
    %v3681 = vshrl.u32 %v3680, 7
    %v3682 = vsub.s32 5, %v3681
    %v3683 = vrot.slane %v62, %v3682
    %v3716 = vunpack.c.l.b16 %v3648
    %v3717 = vunpack.c.l.b16 %v3649
    %v3718 = vunpack.c.l.b16 %v3650
    %v3719 = vunpack.c.l.b16 %v3651
    %v3720 = vunpack.c.l.b16 %v3652
    %v3721 = vunpack.c.l.b16 %v3653
    %v3722 = vunpack.c.l.b16 %v3654
    %v3723 = vunpack.c.l.b16 %v3655
    %v3724 = vunpack.c.l.b16 %v3656
    %v3725 = vunpack.c.l.b16 %v3657
    %v3726 = vunpack.c.l.b16 %v3658
    %v3727 = vunpack.c.l.b16 %v3659
    %v3728 = vunpack.c.l.b16 %v3660
    %v3729 = vunpack.c.l.b16 %v3661
    %v3730 = vunpack.c.l.b16 %v3662
    %v3731 = vunpack.c.l.b16 %v3663
    %v3732 = vunpack.c.l.b16 %v3664
    %v3733 = vunpack.c.l.b16 %v3665
    %v3734 = vunpack.c.l.b16 %v3666
    %v3735 = vunpack.c.l.b16 %v3667
    %v3736 = vunpack.c.l.b16 %v3668
    %v3737 = vunpack.c.l.b16 %v3669
    %v3738 = vunpack.c.l.b16 %v3670
    %v3739 = vunpack.c.l.b16 %v3671
    %v3740 = vunpack.c.l.b16 %v3672
    %v3741 = vunpack.c.l.b16 %v3673
    %v3742 = vunpack.c.l.b16 %v3674
    %v3743 = vunpack.c.l.b16 %v3675
    %v3744 = vunpack.c.l.b16 %v3676
    %v3745 = vunpack.c.l.b16 %v3677
    %v3746 = vunpack.c.l.b16 %v3678
    %v3747 = vunpack.c.l.b16 %v3679
    %v3748 = vpack.c.b16 %v3717, %v3716
    %v3749 = vpack.c.b16 %v3719, %v3718
    %v3750 = vpack.c.b16 %v3721, %v3720
    %v3751 = vpack.c.b16 %v3723, %v3722
    %v3752 = vpack.c.b16 %v3725, %v3724
    %v3753 = vpack.c.b16 %v3727, %v3726
    %v3754 = vpack.c.b16 %v3729, %v3728
    %v3755 = vpack.c.b16 %v3731, %v3730
    %v3756 = vpack.c.b16 %v3733, %v3732
    %v3757 = vpack.c.b16 %v3735, %v3734
    %v3758 = vpack.c.b16 %v3737, %v3736
    %v3759 = vpack.c.b16 %v3739, %v3738
    %v3760 = vpack.c.b16 %v3741, %v3740
    %v3761 = vpack.c.b16 %v3743, %v3742
    %v3762 = vpack.c.b16 %v3745, %v3744
    %v3763 = vpack.c.b16 %v3747, %v3746
    %3780 = vmatprep.subr.bf16.mxu0 0
    %3781 = vmatpush1.bf16.msra.mxu0 %v3755
    %3782 = vmatprep.subr.bf16.mxu0 0
    %3783 = vmatpush1.bf16.msra.mxu0 %v3754
    %3784 = vmatprep.subr.bf16.mxu0 0
    %3785 = vmatpush1.bf16.msra.mxu0 %v3753
    %3786 = vmatprep.subr.bf16.mxu0 0
    %3787 = vmatpush1.bf16.msra.mxu0 %v3752
    %3788 = vmatprep.subr.bf16.mxu0 0
    %3789 = vmatpush1.bf16.msra.mxu0 %v3751
    %3790 = vmatprep.subr.bf16.mxu0 0
    %3791 = vmatpush1.bf16.msra.mxu0 %v3750
    %3792 = vmatprep.subr.bf16.mxu0 0
    %3793 = vmatpush1.bf16.msra.mxu0 %v3749
    %3794 = vmatprep.subr.bf16.mxu0 0
    %3795 = vmatpush1.bf16.msra.mxu0 %v3748
    %3796 = vmatprep.subr.bf16.mxu0 0
    %3797 = vmatpush2.bf16.msra.mxu0 %v3763
    %3798 = vmatprep.subr.bf16.mxu0 0
    %3799 = vmatpush2.bf16.msra.mxu0 %v3762
    %3800 = vmatprep.subr.bf16.mxu0 0
    %3801 = vmatpush2.bf16.msra.mxu0 %v3761
    %3802 = vmatprep.subr.bf16.mxu0 0
    %3803 = vmatpush2.bf16.msra.mxu0 %v3760
    %3804 = vmatprep.subr.bf16.mxu0 0
    %3805 = vmatpush2.bf16.msra.mxu0 %v3759
    %3806 = vmatprep.subr.bf16.mxu0 0
    %3807 = vmatpush2.bf16.msra.mxu0 %v3758
    %3808 = vmatprep.subr.bf16.mxu0 0
    %3809 = vmatpush2.bf16.msra.mxu0 %v3757
    %3810 = vmatprep.subr.bf16.mxu0 0
    %3811 = vmatpush2.bf16.msra.mxu0 %v3756
    %3812 = vmatprep.mubr.bf16.mxu0 %v3641
    %3813 = vmatmul.mubr.bf16.gmra.mxu0 %v3640
    %v3814 = vpop.f32.mrf.mxu0
    %v3815 = vadd.f32 %v3683, %v3814
    %v3816 = vpop.f32.mrf.mxu0
    %v3817 = vpop.f32.mrf.mxu0
    %v3818 = vadd.f32 %v3683, %v3817
    %v3819 = vpop.f32.mrf.mxu0
    %3820 = vmatprep.mubr.bf16.mxu0 %v3643
    %3821 = vmatmul.mubr.bf16.gmra.mxu0 %v3642
    %v3822 = vpop.f32.mrf.mxu0
    %v3823 = vadd.f32 %v3683, %v3822
    %v3824 = vpop.f32.mrf.mxu0
    %v3825 = vpop.f32.mrf.mxu0
    %v3826 = vadd.f32 %v3683, %v3825
    %v3827 = vpop.f32.mrf.mxu0
    %3828 = vmatprep.mubr.bf16.mxu0 %v3645
    %3829 = vmatmul.mubr.bf16.gmra.mxu0 %v3644
    %v3830 = vpop.f32.mrf.mxu0
    %v3831 = vadd.f32 %v3683, %v3830
    %v3832 = vpop.f32.mrf.mxu0
    %v3833 = vpop.f32.mrf.mxu0
    %v3834 = vadd.f32 %v3683, %v3833
    %v3835 = vpop.f32.mrf.mxu0
    %3836 = vmatprep.mubr.bf16.mxu0 %v3647
    %3837 = vmatmul.mubr.bf16.gmra.mxu0 %v3646
    %v3838 = vpop.f32.mrf.mxu0
    %v3839 = vadd.f32 %v3683, %v3838
    %v3840 = vpop.f32.mrf.mxu0
    %v3841 = vpop.f32.mrf.mxu0
    %v3842 = vadd.f32 %v3683, %v3841
    %v3843 = vpop.f32.mrf.mxu0
    %3844 = vdwg.mxu0
    %v3845 = vadd.f32 %v3339, %v3815
    %v3846 = vadd.f32 %v3340, %v3818
    %v3847 = vadd.f32 %v3341, %v3823
    %v3848 = vadd.f32 %v3342, %v3826
    %v3849 = vadd.f32 %v3343, %v3831
    %v3850 = vadd.f32 %v3344, %v3834
    %v3851 = vadd.f32 %v3345, %v3839
    %v3852 = vadd.f32 %v3346, %v3842
    %3853 = vst.msk [vmem:[#allocation7] sm:$0xff] %vm63, %v3845
    %3854 = vst.msk [vmem:[#allocation7 + $0x8] sm:$0xff] %vm63, %v3846
    %3855 = vst.msk [vmem:[#allocation7 + $0x10] sm:$0xff] %vm63, %v3847
    %3856 = vst.msk [vmem:[#allocation7 + $0x18] sm:$0xff] %vm63, %v3848
    %3857 = vst.msk [vmem:[#allocation7 + $0x20] sm:$0xff] %vm63, %v3849
    %3858 = vst.msk [vmem:[#allocation7 + $0x28] sm:$0xff] %vm63, %v3850
    %3859 = vst.msk [vmem:[#allocation7 + $0x30] sm:$0xff] %vm63, %v3851
    %3860 = vst.msk [vmem:[#allocation7 + $0x38] sm:$0xff] %vm63, %v3852
    // Predicated region
    $region38: #{tpu_custom_call.1} parent=1 // pred_check
      _
    $region39: #{tpu_custom_call.1} parent=1 // pred_check_branch
      %3862 = sbr.rel (0) target = $region41
    $region40: #{tpu_custom_call.1} parent=1 // pred_region
      %s3864 = ssub.s32 1024, 1024
      %3865 = vsyncadd [#allocation4], %s3864
      %s3866 = sshll.u32 [#allocation7], 4
      %s3867 = int_to_ptr.vmem [resolvable:$true] %s3866
      %3872 = dma.vmem_to_hbm [thread:$0]  %s3867, 1024, %s7, [#allocation4], 128, 128, 8
    $region41: #{tpu_custom_call.1} parent=1 // pred_fallthru
      _
    // Predicated region
    $region42: #{tpu_custom_call.1} parent=1 // pred_check
      _
    $region43: #{tpu_custom_call.1} parent=1 // pred_check_branch
      %3874 = sbr.rel (0) target = $region45
    $region44: #{tpu_custom_call.1} parent=1 // pred_region
      %3875 = dma.done [#allocation4], 1024
    $region45: #{tpu_custom_call.1} parent=1 // pred_fallthru
      _
    %3876 = vsyncpa [#allocation3], 1
    %3877 = vsyncpa [#allocation6], 1
    %3878 = vsyncpa [#allocation4], 1

</llo_original>
